<compile_context>
chip_gen: v7x
topology: tpu7x:2x2x1
jax: 0.10.0
libtpu: 0.0.40
codegen_flags: <defaults>
</compile_context>

<pallas_src>
import functools
import math

import jax
import jax.numpy as jnp
import numpy as np
from jax.experimental import pallas as pl
from jax.experimental.pallas import tpu as pltpu

SIGMA_INIT = 0.5              # config['sigma_init'] stand-in
ACTION_DIM = 6
INPUT_DIM = (4, 36, 36)       # (c, h, w): smallest spatial size the conv stack reduces to 1x1
BATCH = 2

# conv stack hyper-parameters fixed by the PyTorch module
K1, S1, OC1 = 8, 4, 32
K2, S2, OC2 = 4, 2, 64
K3, S3, OC3 = 3, 1, 64
HIDDEN = 512


# ----------------------------------------------------------------------------
# The single fused Pallas kernel
# ----------------------------------------------------------------------------
def _dqn_fused_kernel(p1_ref, w1_ref, b1_ref, w2_ref, b2_ref, w3_ref, b3_ref,
                      wh1_ref, bh1_ref, wh2_ref, bh2_ref, q_ref,
                      *, batch, wo1, ho2, wo2, k2, s2, action_dim):
    f32 = jnp.float32

    # ---- conv1 + ReLU: pre-extracted patches (rows ordered (oh, ow, b)) ----
    h1 = jnp.dot(p1_ref[...], w1_ref[...], preferred_element_type=f32)
    h1 = jnp.maximum(h1 + b1_ref[...], 0.0)                  # [ho1*wo1*B, OC1]

    w2 = w2_ref[...]                                          # [k2*k2*OC1, OC2]
    b2 = b2_ref[...]                                          # [1, OC2]
    w3 = w3_ref[...]                                          # [k3*k3*OC2, OC3]
    c_mid = w2.shape[1]                                       # conv2 out channels
    c_out = w3.shape[1]                                       # conv3 out channels

    # ---- conv2 + ReLU + conv3 accumulation, fused per conv2-output position ----
    # conv3's output is 1x1, so conv2 output position p == conv3 tap p:
    #   acc3 += relu(patch_p @ W2 + b2) @ W3[p*c_mid:(p+1)*c_mid]
    acc3 = jnp.zeros((batch, c_out), f32)
    for p in range(ho2 * wo2):
        oh, ow = p // wo2, p % wo2
        taps = []
        for kh in range(k2):
            for kw in range(k2):
                r = ((s2 * oh + kh) * wo1 + (s2 * ow + kw)) * batch
                taps.append(h1[r:r + batch, :])               # [B, OC1]
        patch = jnp.concatenate(taps, axis=-1)                # [B, k2*k2*OC1], (kh,kw,c)
        t = jnp.dot(patch, w2, preferred_element_type=f32) + b2
        t = jnp.maximum(t, 0.0)                               # conv2 + ReLU at position p
        acc3 = acc3 + jnp.dot(t, w3[p * c_mid:(p + 1) * c_mid, :],
                              preferred_element_type=f32)
    h3 = jnp.maximum(acc3 + b3_ref[...], 0.0)                 # [B, OC3] == flattened conv out

    # ---- noisy dueling head: val1|adv1 concatenated, val2|adv2 block-diagonal ----
    hidden = jnp.dot(h3, wh1_ref[...], preferred_element_type=f32) + bh1_ref[...]
    hidden = jnp.maximum(hidden, 0.0)                         # [B, 2*HIDDEN]
    out = jnp.dot(hidden, wh2_ref[...], preferred_element_type=f32) + bh2_ref[...]
    value = out[:, 0:1]                                       # [B, 1]
    adv = out[:, 1:1 + action_dim]                            # [B, A]
    q = value + adv - jnp.mean(adv, axis=1, keepdims=True)
    q_ref[...] = q.astype(q_ref.dtype)


# ----------------------------------------------------------------------------
# Wrapper glue: conv1 patch extraction from the raw NCHW input (one-time, tiny)
# ----------------------------------------------------------------------------
def _conv1_patches(x, k, s, ho, wo):
    """[B, C, H, W] -> [ho*wo*B, k*k*C]; rows ordered (oh, ow, b), features (kh, kw, c)."""
    xh = jnp.transpose(x, (0, 2, 3, 1))                       # NHWC
    cols = []
    for kh in range(k):
        for kw in range(k):
            cols.append(xh[:, kh:kh + s * (ho - 1) + 1:s,
                            kw:kw + s * (wo - 1) + 1:s, :])   # [B, ho, wo, C]
    p = jnp.concatenate(cols, axis=-1)                        # [B, ho, wo, k*k*C]
    p = jnp.transpose(p, (1, 2, 0, 3))                        # [ho, wo, B, k*k*C]
    return p.reshape(ho * wo * x.shape[0], -1)


def dqn_forward(packed, x):
    B, _, H, W = x.shape
    ho1, wo1 = (H - K1) // S1 + 1, (W - K1) // S1 + 1
    ho2, wo2 = (ho1 - K2) // S2 + 1, (wo1 - K2) // S2 + 1
    ho3, wo3 = (ho2 - K3) // S3 + 1, (wo2 - K3) // S3 + 1
    assert ho3 == 1 and wo3 == 1, "fused head assumes the conv3 output is 1x1"
    action_dim = packed['bh2'].shape[1] - 1

    patches = _conv1_patches(x, K1, S1, ho1, wo1)             # [ho1*wo1*B, K1*K1*C]

    kernel = functools.partial(
        _dqn_fused_kernel,
        batch=B, wo1=wo1, ho2=ho2, wo2=wo2, k2=K2, s2=S2, action_dim=action_dim)

    vmem = pl.BlockSpec(memory_space=pltpu.MemorySpace.VMEM)
    args = (patches,
            packed['w1'], packed['b1'], packed['w2'], packed['b2'],
            packed['w3'], packed['b3'], packed['wh1'], packed['bh1'],
            packed['wh2'], packed['bh2'])
    return pl.pallas_call(
        kernel,
        out_shape=jax.ShapeDtypeStruct((B, action_dim), jnp.float32),
        in_specs=[vmem] * len(args),
        out_specs=vmem,
    )(*args)


# ----------------------------------------------------------------------------
# Parameter initialization (mirrors the PyTorch module), plus MXU-layout packing
# ----------------------------------------------------------------------------
def _uniform(key, shape, bound):
    return jax.random.uniform(key, shape, jnp.float32, -bound, bound)


def _scale_noise(key, size):
    x = jax.random.normal(key, (size,), jnp.float32)
    return jnp.sign(x) * jnp.sqrt(jnp.abs(x))


def init_noisy_linear(key, in_features, out_features):
    k_wm, k_bm, k_ein, k_eout = jax.random.split(key, 4)
    mu_range = 1.0 / math.sqrt(in_features)
    weight_mu = _uniform(k_wm, (out_features, in_features), mu_range)
    weight_sigma = jnp.full((out_features, in_features),
                            SIGMA_INIT / math.sqrt(in_features), jnp.float32)
    bias_mu = _uniform(k_bm, (out_features,), mu_range)
    bias_sigma = jnp.full((out_features,),
                          SIGMA_INIT / math.sqrt(out_features), jnp.float32)
    eps_in = _scale_noise(k_ein, in_features)
    eps_out = _scale_noise(k_eout, out_features)
    # training-mode effective weights (module defaults to training=True)
    weight = weight_mu + weight_sigma * jnp.outer(eps_out, eps_in)
    bias = bias_mu + bias_sigma * eps_out
    return weight, bias


def init_conv(key, out_c, in_c, k):
    k_w, k_b = jax.random.split(key)
    bound = 1.0 / math.sqrt(in_c * k * k)
    return _uniform(k_w, (out_c, in_c, k, k), bound), _uniform(k_b, (out_c,), bound)


def init_dqn_params(key, input_dim, action_dim):
    c, h, w = input_dim
    keys = jax.random.split(key, 7)
    c1w, c1b = init_conv(keys[0], OC1, c, K1)
    c2w, c2b = init_conv(keys[1], OC2, OC1, K2)
    c3w, c3b = init_conv(keys[2], OC3, OC2, K3)
    ho1, wo1 = (h - K1) // S1 + 1, (w - K1) // S1 + 1
    ho2, wo2 = (ho1 - K2) // S2 + 1, (wo1 - K2) // S2 + 1
    ho3, wo3 = (ho2 - K3) // S3 + 1, (wo2 - K3) // S3 + 1
    assert ho3 == 1 and wo3 == 1
    conv_out = OC3 * ho3 * wo3
    v1w, v1b = init_noisy_linear(keys[3], conv_out, HIDDEN)
    v2w, v2b = init_noisy_linear(keys[4], HIDDEN, 1)
    a1w, a1b = init_noisy_linear(keys[5], conv_out, HIDDEN)
    a2w, a2b = init_noisy_linear(keys[6], HIDDEN, action_dim)

    raw = dict(conv1=(c1w, c1b), conv2=(c2w, c2b), conv3=(c3w, c3b),
               val1=(v1w, v1b), val2=(v2w, v2b), adv1=(a1w, a1b), adv2=(a2w, a2b))

    def flat_conv(wc):
        # [Oc, Ic, kh, kw] -> [kh*kw*Ic, Oc]  ((kh, kw, c_in) feature order)
        return jnp.transpose(wc, (2, 3, 1, 0)).reshape(-1, wc.shape[0])

    # block-diagonal second-layer head weight: col 0 = value, cols 1..A = advantage
    wh2 = jnp.zeros((2 * HIDDEN, 1 + action_dim), jnp.float32)
    wh2 = wh2.at[:HIDDEN, 0:1].set(v2w.T).at[HIDDEN:, 1:].set(a2w.T)

    packed = dict(
        w1=flat_conv(c1w), b1=c1b.reshape(1, -1),
        w2=flat_conv(c2w), b2=c2b.reshape(1, -1),
        w3=flat_conv(c3w), b3=c3b.reshape(1, -1),
        wh1=jnp.concatenate([v1w.T, a1w.T], axis=1),          # [conv_out, 2*HIDDEN]
        bh1=jnp.concatenate([v1b, a1b]).reshape(1, -1),       # [1, 2*HIDDEN]
        wh2=wh2,                                              # [2*HIDDEN, 1+A]
        bh2=jnp.concatenate([v2b, a2b]).reshape(1, -1),       # [1, 1+A]
    )
    return dict(raw=raw, packed=packed)


# ----------------------------------------------------------------------------
# Pure-JAX reference (PyTorch semantics) for a correctness self-check
# ----------------------------------------------------------------------------
def reference_forward(raw, x):
    hp = jax.lax.Precision.HIGHEST

    def conv(y, wb, s):
        wgt, b = wb
        y = jax.lax.conv_general_dilated(
            y, wgt, window_strides=(s, s), padding='VALID',
            dimension_numbers=('NCHW', 'OIHW', 'NCHW'), precision=hp)
        return jax.nn.relu(y + b.reshape(1, -1, 1, 1))

    def lin(z, wb):
        wgt, b = wb
        return jnp.dot(z, wgt.T, precision=hp) + b

    y = conv(x, raw['conv1'], S1)
    y = conv(y, raw['conv2'], S2)
    y = conv(y, raw['conv3'], S3)
    flat = y.reshape(y.shape[0], -1)
    value = lin(jax.nn.relu(lin(flat, raw['val1'])), raw['val2'])
    adv = lin(jax.nn.relu(lin(flat, raw['adv1'])), raw['adv2'])
    return value + adv - jnp.mean(adv, axis=1, keepdims=True)


if __name__ == "__main__":
    key = jax.random.PRNGKey(0)
    k_params, k_x = jax.random.split(key)
    params = init_dqn_params(k_params, INPUT_DIM, ACTION_DIM)
    x = jax.random.normal(k_x, (BATCH,) + INPUT_DIM, jnp.float32)

    fwd = jax.jit(dqn_forward)
    q_vals = jax.block_until_ready(fwd(params['packed'], x))

    assert q_vals.shape == (BATCH, ACTION_DIM)
    assert bool(jnp.all(jnp.isfinite(q_vals)))

    q_ref = jax.block_until_ready(reference_forward(params['raw'], x))
    np.testing.assert_allclose(np.asarray(q_vals), np.asarray(q_ref),
                               rtol=5e-2, atol=5e-2)

    print("KERNEL_OK")
</pallas_src>

<mosaic_0001>
module attributes {stable_mosaic.version = 11 : i64} {
  func.func @_dqn_fused_kernel(%arg0: memref<128x256xf32, #tpu.memory_space<vmem>>, %arg1: memref<256x32xf32, #tpu.memory_space<vmem>>, %arg2: memref<1x32xf32, #tpu.memory_space<vmem>>, %arg3: memref<512x64xf32, #tpu.memory_space<vmem>>, %arg4: memref<1x64xf32, #tpu.memory_space<vmem>>, %arg5: memref<576x64xf32, #tpu.memory_space<vmem>>, %arg6: memref<1x64xf32, #tpu.memory_space<vmem>>, %arg7: memref<64x1024xf32, #tpu.memory_space<vmem>>, %arg8: memref<1x1024xf32, #tpu.memory_space<vmem>>, %arg9: memref<1024x7xf32, #tpu.memory_space<vmem>>, %arg10: memref<1x7xf32, #tpu.memory_space<vmem>>, %arg11: memref<2x6xf32, #tpu.memory_space<vmem>>) attributes {dimension_semantics = [], scalar_prefetch = 0 : i64, scratch_operands = 0 : i64, tpu.core_type = #tpu.core_type<tc>} {
    %c0 = arith.constant 0 : index
    %c0_0 = arith.constant 0 : index
    %0 = vector.load %arg0[%c0, %c0_0] : memref<128x256xf32, #tpu.memory_space<vmem>>, vector<128x256xf32>
    %c0_1 = arith.constant 0 : index
    %c0_2 = arith.constant 0 : index
    %1 = vector.load %arg1[%c0_1, %c0_2] : memref<256x32xf32, #tpu.memory_space<vmem>>, vector<256x32xf32>
    %cst = arith.constant dense<0.000000e+00> : vector<128x32xf32>
    %2 = tpu.matmul %0, %1, %cst {dimension_numbers = #tpu.dot_dimension_numbers<[1], [0], [0], [1], [0, 0, 1, 1], [], []>} : vector<128x256xf32>, vector<256x32xf32>, vector<128x32xf32> -> vector<128x32xf32>
    %c0_3 = arith.constant 0 : index
    %c0_4 = arith.constant 0 : index
    %3 = vector.load %arg2[%c0_3, %c0_4] : memref<1x32xf32, #tpu.memory_space<vmem>>, vector<1x32xf32>
    %4 = vector.broadcast %3 : vector<1x32xf32> to vector<128x32xf32>
    %5 = arith.addf %2, %4 : vector<128x32xf32>
    %cst_5 = arith.constant 0.000000e+00 : f32
    %6 = vector.broadcast %cst_5 : f32 to vector<128x32xf32>
    %7 = arith.maximumf %5, %6 : vector<128x32xf32>
    %c0_6 = arith.constant 0 : index
    %c0_7 = arith.constant 0 : index
    %8 = vector.load %arg3[%c0_6, %c0_7] : memref<512x64xf32, #tpu.memory_space<vmem>>, vector<512x64xf32>
    %c0_8 = arith.constant 0 : index
    %c0_9 = arith.constant 0 : index
    %9 = vector.load %arg4[%c0_8, %c0_9] : memref<1x64xf32, #tpu.memory_space<vmem>>, vector<1x64xf32>
    %c0_10 = arith.constant 0 : index
    %c0_11 = arith.constant 0 : index
    %10 = vector.load %arg5[%c0_10, %c0_11] : memref<576x64xf32, #tpu.memory_space<vmem>>, vector<576x64xf32>
    %cst_12 = arith.constant 0.000000e+00 : f32
    %11 = vector.broadcast %cst_12 : f32 to vector<2x64xf32>
    %12 = vector.extract_strided_slice %7 {offsets = [0, 0], sizes = [2, 32], strides = [1, 1]} : vector<128x32xf32> to vector<2x32xf32>
    %13 = vector.extract_strided_slice %7 {offsets = [2, 0], sizes = [2, 32], strides = [1, 1]} : vector<128x32xf32> to vector<2x32xf32>
    %14 = vector.extract_strided_slice %7 {offsets = [4, 0], sizes = [2, 32], strides = [1, 1]} : vector<128x32xf32> to vector<2x32xf32>
    %15 = vector.extract_strided_slice %7 {offsets = [6, 0], sizes = [2, 32], strides = [1, 1]} : vector<128x32xf32> to vector<2x32xf32>
    %16 = vector.extract_strided_slice %7 {offsets = [16, 0], sizes = [2, 32], strides = [1, 1]} : vector<128x32xf32> to vector<2x32xf32>
    %17 = vector.extract_strided_slice %7 {offsets = [18, 0], sizes = [2, 32], strides = [1, 1]} : vector<128x32xf32> to vector<2x32xf32>
    %18 = vector.extract_strided_slice %7 {offsets = [20, 0], sizes = [2, 32], strides = [1, 1]} : vector<128x32xf32> to vector<2x32xf32>
    %19 = vector.extract_strided_slice %7 {offsets = [22, 0], sizes = [2, 32], strides = [1, 1]} : vector<128x32xf32> to vector<2x32xf32>
    %20 = vector.extract_strided_slice %7 {offsets = [32, 0], sizes = [2, 32], strides = [1, 1]} : vector<128x32xf32> to vector<2x32xf32>
    %21 = vector.extract_strided_slice %7 {offsets = [34, 0], sizes = [2, 32], strides = [1, 1]} : vector<128x32xf32> to vector<2x32xf32>
    %22 = vector.extract_strided_slice %7 {offsets = [36, 0], sizes = [2, 32], strides = [1, 1]} : vector<128x32xf32> to vector<2x32xf32>
    %23 = vector.extract_strided_slice %7 {offsets = [38, 0], sizes = [2, 32], strides = [1, 1]} : vector<128x32xf32> to vector<2x32xf32>
    %24 = vector.extract_strided_slice %7 {offsets = [48, 0], sizes = [2, 32], strides = [1, 1]} : vector<128x32xf32> to vector<2x32xf32>
    %25 = vector.extract_strided_slice %7 {offsets = [50, 0], sizes = [2, 32], strides = [1, 1]} : vector<128x32xf32> to vector<2x32xf32>
    %26 = vector.extract_strided_slice %7 {offsets = [52, 0], sizes = [2, 32], strides = [1, 1]} : vector<128x32xf32> to vector<2x32xf32>
    %27 = vector.extract_strided_slice %7 {offsets = [54, 0], sizes = [2, 32], strides = [1, 1]} : vector<128x32xf32> to vector<2x32xf32>
    %28 = tpu.concatenate %12, %13, %14, %15, %16, %17, %18, %19, %20, %21, %22, %23, %24, %25, %26, %27 in 1 : vector<2x32xf32>, vector<2x32xf32>, vector<2x32xf32>, vector<2x32xf32>, vector<2x32xf32>, vector<2x32xf32>, vector<2x32xf32>, vector<2x32xf32>, vector<2x32xf32>, vector<2x32xf32>, vector<2x32xf32>, vector<2x32xf32>, vector<2x32xf32>, vector<2x32xf32>, vector<2x32xf32>, vector<2x32xf32> -> vector<2x512xf32>
    %cst_13 = arith.constant dense<0.000000e+00> : vector<2x64xf32>
    %29 = tpu.matmul %28, %8, %cst_13 {dimension_numbers = #tpu.dot_dimension_numbers<[1], [0], [0], [1], [0, 0, 1, 1], [], []>} : vector<2x512xf32>, vector<512x64xf32>, vector<2x64xf32> -> vector<2x64xf32>
    %30 = vector.broadcast %9 : vector<1x64xf32> to vector<2x64xf32>
    %31 = arith.addf %29, %30 : vector<2x64xf32>
    %cst_14 = arith.constant 0.000000e+00 : f32
    %32 = vector.broadcast %cst_14 : f32 to vector<2x64xf32>
    %33 = arith.maximumf %31, %32 : vector<2x64xf32>
    %34 = vector.extract_strided_slice %10 {offsets = [0, 0], sizes = [64, 64], strides = [1, 1]} : vector<576x64xf32> to vector<64x64xf32>
    %cst_15 = arith.constant dense<0.000000e+00> : vector<2x64xf32>
    %35 = tpu.matmul %33, %34, %cst_15 {dimension_numbers = #tpu.dot_dimension_numbers<[1], [0], [0], [1], [0, 0, 1, 1], [], []>} : vector<2x64xf32>, vector<64x64xf32>, vector<2x64xf32> -> vector<2x64xf32>
    %36 = arith.addf %11, %35 : vector<2x64xf32>
    %37 = vector.extract_strided_slice %7 {offsets = [4, 0], sizes = [2, 32], strides = [1, 1]} : vector<128x32xf32> to vector<2x32xf32>
    %38 = vector.extract_strided_slice %7 {offsets = [6, 0], sizes = [2, 32], strides = [1, 1]} : vector<128x32xf32> to vector<2x32xf32>
    %39 = vector.extract_strided_slice %7 {offsets = [8, 0], sizes = [2, 32], strides = [1, 1]} : vector<128x32xf32> to vector<2x32xf32>
    %40 = vector.extract_strided_slice %7 {offsets = [10, 0], sizes = [2, 32], strides = [1, 1]} : vector<128x32xf32> to vector<2x32xf32>
    %41 = vector.extract_strided_slice %7 {offsets = [20, 0], sizes = [2, 32], strides = [1, 1]} : vector<128x32xf32> to vector<2x32xf32>
    %42 = vector.extract_strided_slice %7 {offsets = [22, 0], sizes = [2, 32], strides = [1, 1]} : vector<128x32xf32> to vector<2x32xf32>
    %43 = vector.extract_strided_slice %7 {offsets = [24, 0], sizes = [2, 32], strides = [1, 1]} : vector<128x32xf32> to vector<2x32xf32>
    %44 = vector.extract_strided_slice %7 {offsets = [26, 0], sizes = [2, 32], strides = [1, 1]} : vector<128x32xf32> to vector<2x32xf32>
    %45 = vector.extract_strided_slice %7 {offsets = [36, 0], sizes = [2, 32], strides = [1, 1]} : vector<128x32xf32> to vector<2x32xf32>
    %46 = vector.extract_strided_slice %7 {offsets = [38, 0], sizes = [2, 32], strides = [1, 1]} : vector<128x32xf32> to vector<2x32xf32>
    %47 = vector.extract_strided_slice %7 {offsets = [40, 0], sizes = [2, 32], strides = [1, 1]} : vector<128x32xf32> to vector<2x32xf32>
    %48 = vector.extract_strided_slice %7 {offsets = [42, 0], sizes = [2, 32], strides = [1, 1]} : vector<128x32xf32> to vector<2x32xf32>
    %49 = vector.extract_strided_slice %7 {offsets = [52, 0], sizes = [2, 32], strides = [1, 1]} : vector<128x32xf32> to vector<2x32xf32>
    %50 = vector.extract_strided_slice %7 {offsets = [54, 0], sizes = [2, 32], strides = [1, 1]} : vector<128x32xf32> to vector<2x32xf32>
    %51 = vector.extract_strided_slice %7 {offsets = [56, 0], sizes = [2, 32], strides = [1, 1]} : vector<128x32xf32> to vector<2x32xf32>
    %52 = vector.extract_strided_slice %7 {offsets = [58, 0], sizes = [2, 32], strides = [1, 1]} : vector<128x32xf32> to vector<2x32xf32>
    %53 = tpu.concatenate %37, %38, %39, %40, %41, %42, %43, %44, %45, %46, %47, %48, %49, %50, %51, %52 in 1 : vector<2x32xf32>, vector<2x32xf32>, vector<2x32xf32>, vector<2x32xf32>, vector<2x32xf32>, vector<2x32xf32>, vector<2x32xf32>, vector<2x32xf32>, vector<2x32xf32>, vector<2x32xf32>, vector<2x32xf32>, vector<2x32xf32>, vector<2x32xf32>, vector<2x32xf32>, vector<2x32xf32>, vector<2x32xf32> -> vector<2x512xf32>
    %cst_16 = arith.constant dense<0.000000e+00> : vector<2x64xf32>
    %54 = tpu.matmul %53, %8, %cst_16 {dimension_numbers = #tpu.dot_dimension_numbers<[1], [0], [0], [1], [0, 0, 1, 1], [], []>} : vector<2x512xf32>, vector<512x64xf32>, vector<2x64xf32> -> vector<2x64xf32>
    %55 = vector.broadcast %9 : vector<1x64xf32> to vector<2x64xf32>
    %56 = arith.addf %54, %55 : vector<2x64xf32>
    %cst_17 = arith.constant 0.000000e+00 : f32
    %57 = vector.broadcast %cst_17 : f32 to vector<2x64xf32>
    %58 = arith.maximumf %56, %57 : vector<2x64xf32>
    %59 = vector.extract_strided_slice %10 {offsets = [64, 0], sizes = [64, 64], strides = [1, 1]} : vector<576x64xf32> to vector<64x64xf32>
    %cst_18 = arith.constant dense<0.000000e+00> : vector<2x64xf32>
    %60 = tpu.matmul %58, %59, %cst_18 {dimension_numbers = #tpu.dot_dimension_numbers<[1], [0], [0], [1], [0, 0, 1, 1], [], []>} : vector<2x64xf32>, vector<64x64xf32>, vector<2x64xf32> -> vector<2x64xf32>
    %61 = arith.addf %36, %60 : vector<2x64xf32>
    %62 = vector.extract_strided_slice %7 {offsets = [8, 0], sizes = [2, 32], strides = [1, 1]} : vector<128x32xf32> to vector<2x32xf32>
    %63 = vector.extract_strided_slice %7 {offsets = [10, 0], sizes = [2, 32], strides = [1, 1]} : vector<128x32xf32> to vector<2x32xf32>
    %64 = vector.extract_strided_slice %7 {offsets = [12, 0], sizes = [2, 32], strides = [1, 1]} : vector<128x32xf32> to vector<2x32xf32>
    %65 = vector.extract_strided_slice %7 {offsets = [14, 0], sizes = [2, 32], strides = [1, 1]} : vector<128x32xf32> to vector<2x32xf32>
    %66 = vector.extract_strided_slice %7 {offsets = [24, 0], sizes = [2, 32], strides = [1, 1]} : vector<128x32xf32> to vector<2x32xf32>
    %67 = vector.extract_strided_slice %7 {offsets = [26, 0], sizes = [2, 32], strides = [1, 1]} : vector<128x32xf32> to vector<2x32xf32>
    %68 = vector.extract_strided_slice %7 {offsets = [28, 0], sizes = [2, 32], strides = [1, 1]} : vector<128x32xf32> to vector<2x32xf32>
    %69 = vector.extract_strided_slice %7 {offsets = [30, 0], sizes = [2, 32], strides = [1, 1]} : vector<128x32xf32> to vector<2x32xf32>
    %70 = vector.extract_strided_slice %7 {offsets = [40, 0], sizes = [2, 32], strides = [1, 1]} : vector<128x32xf32> to vector<2x32xf32>
    %71 = vector.extract_strided_slice %7 {offsets = [42, 0], sizes = [2, 32], strides = [1, 1]} : vector<128x32xf32> to vector<2x32xf32>
    %72 = vector.extract_strided_slice %7 {offsets = [44, 0], sizes = [2, 32], strides = [1, 1]} : vector<128x32xf32> to vector<2x32xf32>
    %73 = vector.extract_strided_slice %7 {offsets = [46, 0], sizes = [2, 32], strides = [1, 1]} : vector<128x32xf32> to vector<2x32xf32>
    %74 = vector.extract_strided_slice %7 {offsets = [56, 0], sizes = [2, 32], strides = [1, 1]} : vector<128x32xf32> to vector<2x32xf32>
    %75 = vector.extract_strided_slice %7 {offsets = [58, 0], sizes = [2, 32], strides = [1, 1]} : vector<128x32xf32> to vector<2x32xf32>
    %76 = vector.extract_strided_slice %7 {offsets = [60, 0], sizes = [2, 32], strides = [1, 1]} : vector<128x32xf32> to vector<2x32xf32>
    %77 = vector.extract_strided_slice %7 {offsets = [62, 0], sizes = [2, 32], strides = [1, 1]} : vector<128x32xf32> to vector<2x32xf32>
    %78 = tpu.concatenate %62, %63, %64, %65, %66, %67, %68, %69, %70, %71, %72, %73, %74, %75, %76, %77 in 1 : vector<2x32xf32>, vector<2x32xf32>, vector<2x32xf32>, vector<2x32xf32>, vector<2x32xf32>, vector<2x32xf32>, vector<2x32xf32>, vector<2x32xf32>, vector<2x32xf32>, vector<2x32xf32>, vector<2x32xf32>, vector<2x32xf32>, vector<2x32xf32>, vector<2x32xf32>, vector<2x32xf32>, vector<2x32xf32> -> vector<2x512xf32>
    %cst_19 = arith.constant dense<0.000000e+00> : vector<2x64xf32>
    %79 = tpu.matmul %78, %8, %cst_19 {dimension_numbers = #tpu.dot_dimension_numbers<[1], [0], [0], [1], [0, 0, 1, 1], [], []>} : vector<2x512xf32>, vector<512x64xf32>, vector<2x64xf32> -> vector<2x64xf32>
    %80 = vector.broadcast %9 : vector<1x64xf32> to vector<2x64xf32>
    %81 = arith.addf %79, %80 : vector<2x64xf32>
    %cst_20 = arith.constant 0.000000e+00 : f32
    %82 = vector.broadcast %cst_20 : f32 to vector<2x64xf32>
    %83 = arith.maximumf %81, %82 : vector<2x64xf32>
    %84 = vector.extract_strided_slice %10 {offsets = [128, 0], sizes = [64, 64], strides = [1, 1]} : vector<576x64xf32> to vector<64x64xf32>
    %cst_21 = arith.constant dense<0.000000e+00> : vector<2x64xf32>
    %85 = tpu.matmul %83, %84, %cst_21 {dimension_numbers = #tpu.dot_dimension_numbers<[1], [0], [0], [1], [0, 0, 1, 1], [], []>} : vector<2x64xf32>, vector<64x64xf32>, vector<2x64xf32> -> vector<2x64xf32>
    %86 = arith.addf %61, %85 : vector<2x64xf32>
    %87 = vector.extract_strided_slice %7 {offsets = [32, 0], sizes = [2, 32], strides = [1, 1]} : vector<128x32xf32> to vector<2x32xf32>
    %88 = vector.extract_strided_slice %7 {offsets = [34, 0], sizes = [2, 32], strides = [1, 1]} : vector<128x32xf32> to vector<2x32xf32>
    %89 = vector.extract_strided_slice %7 {offsets = [36, 0], sizes = [2, 32], strides = [1, 1]} : vector<128x32xf32> to vector<2x32xf32>
    %90 = vector.extract_strided_slice %7 {offsets = [38, 0], sizes = [2, 32], strides = [1, 1]} : vector<128x32xf32> to vector<2x32xf32>
    %91 = vector.extract_strided_slice %7 {offsets = [48, 0], sizes = [2, 32], strides = [1, 1]} : vector<128x32xf32> to vector<2x32xf32>
    %92 = vector.extract_strided_slice %7 {offsets = [50, 0], sizes = [2, 32], strides = [1, 1]} : vector<128x32xf32> to vector<2x32xf32>
    %93 = vector.extract_strided_slice %7 {offsets = [52, 0], sizes = [2, 32], strides = [1, 1]} : vector<128x32xf32> to vector<2x32xf32>
    %94 = vector.extract_strided_slice %7 {offsets = [54, 0], sizes = [2, 32], strides = [1, 1]} : vector<128x32xf32> to vector<2x32xf32>
    %95 = vector.extract_strided_slice %7 {offsets = [64, 0], sizes = [2, 32], strides = [1, 1]} : vector<128x32xf32> to vector<2x32xf32>
    %96 = vector.extract_strided_slice %7 {offsets = [66, 0], sizes = [2, 32], strides = [1, 1]} : vector<128x32xf32> to vector<2x32xf32>
    %97 = vector.extract_strided_slice %7 {offsets = [68, 0], sizes = [2, 32], strides = [1, 1]} : vector<128x32xf32> to vector<2x32xf32>
    %98 = vector.extract_strided_slice %7 {offsets = [70, 0], sizes = [2, 32], strides = [1, 1]} : vector<128x32xf32> to vector<2x32xf32>
    %99 = vector.extract_strided_slice %7 {offsets = [80, 0], sizes = [2, 32], strides = [1, 1]} : vector<128x32xf32> to vector<2x32xf32>
    %100 = vector.extract_strided_slice %7 {offsets = [82, 0], sizes = [2, 32], strides = [1, 1]} : vector<128x32xf32> to vector<2x32xf32>
    %101 = vector.extract_strided_slice %7 {offsets = [84, 0], sizes = [2, 32], strides = [1, 1]} : vector<128x32xf32> to vector<2x32xf32>
    %102 = vector.extract_strided_slice %7 {offsets = [86, 0], sizes = [2, 32], strides = [1, 1]} : vector<128x32xf32> to vector<2x32xf32>
    %103 = tpu.concatenate %87, %88, %89, %90, %91, %92, %93, %94, %95, %96, %97, %98, %99, %100, %101, %102 in 1 : vector<2x32xf32>, vector<2x32xf32>, vector<2x32xf32>, vector<2x32xf32>, vector<2x32xf32>, vector<2x32xf32>, vector<2x32xf32>, vector<2x32xf32>, vector<2x32xf32>, vector<2x32xf32>, vector<2x32xf32>, vector<2x32xf32>, vector<2x32xf32>, vector<2x32xf32>, vector<2x32xf32>, vector<2x32xf32> -> vector<2x512xf32>
    %cst_22 = arith.constant dense<0.000000e+00> : vector<2x64xf32>
    %104 = tpu.matmul %103, %8, %cst_22 {dimension_numbers = #tpu.dot_dimension_numbers<[1], [0], [0], [1], [0, 0, 1, 1], [], []>} : vector<2x512xf32>, vector<512x64xf32>, vector<2x64xf32> -> vector<2x64xf32>
    %105 = vector.broadcast %9 : vector<1x64xf32> to vector<2x64xf32>
    %106 = arith.addf %104, %105 : vector<2x64xf32>
    %cst_23 = arith.constant 0.000000e+00 : f32
    %107 = vector.broadcast %cst_23 : f32 to vector<2x64xf32>
    %108 = arith.maximumf %106, %107 : vector<2x64xf32>
    %109 = vector.extract_strided_slice %10 {offsets = [192, 0], sizes = [64, 64], strides = [1, 1]} : vector<576x64xf32> to vector<64x64xf32>
    %cst_24 = arith.constant dense<0.000000e+00> : vector<2x64xf32>
    %110 = tpu.matmul %108, %109, %cst_24 {dimension_numbers = #tpu.dot_dimension_numbers<[1], [0], [0], [1], [0, 0, 1, 1], [], []>} : vector<2x64xf32>, vector<64x64xf32>, vector<2x64xf32> -> vector<2x64xf32>
    %111 = arith.addf %86, %110 : vector<2x64xf32>
    %112 = vector.extract_strided_slice %7 {offsets = [36, 0], sizes = [2, 32], strides = [1, 1]} : vector<128x32xf32> to vector<2x32xf32>
    %113 = vector.extract_strided_slice %7 {offsets = [38, 0], sizes = [2, 32], strides = [1, 1]} : vector<128x32xf32> to vector<2x32xf32>
    %114 = vector.extract_strided_slice %7 {offsets = [40, 0], sizes = [2, 32], strides = [1, 1]} : vector<128x32xf32> to vector<2x32xf32>
    %115 = vector.extract_strided_slice %7 {offsets = [42, 0], sizes = [2, 32], strides = [1, 1]} : vector<128x32xf32> to vector<2x32xf32>
    %116 = vector.extract_strided_slice %7 {offsets = [52, 0], sizes = [2, 32], strides = [1, 1]} : vector<128x32xf32> to vector<2x32xf32>
    %117 = vector.extract_strided_slice %7 {offsets = [54, 0], sizes = [2, 32], strides = [1, 1]} : vector<128x32xf32> to vector<2x32xf32>
    %118 = vector.extract_strided_slice %7 {offsets = [56, 0], sizes = [2, 32], strides = [1, 1]} : vector<128x32xf32> to vector<2x32xf32>
    %119 = vector.extract_strided_slice %7 {offsets = [58, 0], sizes = [2, 32], strides = [1, 1]} : vector<128x32xf32> to vector<2x32xf32>
    %120 = vector.extract_strided_slice %7 {offsets = [68, 0], sizes = [2, 32], strides = [1, 1]} : vector<128x32xf32> to vector<2x32xf32>
    %121 = vector.extract_strided_slice %7 {offsets = [70, 0], sizes = [2, 32], strides = [1, 1]} : vector<128x32xf32> to vector<2x32xf32>
    %122 = vector.extract_strided_slice %7 {offsets = [72, 0], sizes = [2, 32], strides = [1, 1]} : vector<128x32xf32> to vector<2x32xf32>
    %123 = vector.extract_strided_slice %7 {offsets = [74, 0], sizes = [2, 32], strides = [1, 1]} : vector<128x32xf32> to vector<2x32xf32>
    %124 = vector.extract_strided_slice %7 {offsets = [84, 0], sizes = [2, 32], strides = [1, 1]} : vector<128x32xf32> to vector<2x32xf32>
    %125 = vector.extract_strided_slice %7 {offsets = [86, 0], sizes = [2, 32], strides = [1, 1]} : vector<128x32xf32> to vector<2x32xf32>
    %126 = vector.extract_strided_slice %7 {offsets = [88, 0], sizes = [2, 32], strides = [1, 1]} : vector<128x32xf32> to vector<2x32xf32>
    %127 = vector.extract_strided_slice %7 {offsets = [90, 0], sizes = [2, 32], strides = [1, 1]} : vector<128x32xf32> to vector<2x32xf32>
    %128 = tpu.concatenate %112, %113, %114, %115, %116, %117, %118, %119, %120, %121, %122, %123, %124, %125, %126, %127 in 1 : vector<2x32xf32>, vector<2x32xf32>, vector<2x32xf32>, vector<2x32xf32>, vector<2x32xf32>, vector<2x32xf32>, vector<2x32xf32>, vector<2x32xf32>, vector<2x32xf32>, vector<2x32xf32>, vector<2x32xf32>, vector<2x32xf32>, vector<2x32xf32>, vector<2x32xf32>, vector<2x32xf32>, vector<2x32xf32> -> vector<2x512xf32>
    %cst_25 = arith.constant dense<0.000000e+00> : vector<2x64xf32>
    %129 = tpu.matmul %128, %8, %cst_25 {dimension_numbers = #tpu.dot_dimension_numbers<[1], [0], [0], [1], [0, 0, 1, 1], [], []>} : vector<2x512xf32>, vector<512x64xf32>, vector<2x64xf32> -> vector<2x64xf32>
    %130 = vector.broadcast %9 : vector<1x64xf32> to vector<2x64xf32>
    %131 = arith.addf %129, %130 : vector<2x64xf32>
    %cst_26 = arith.constant 0.000000e+00 : f32
    %132 = vector.broadcast %cst_26 : f32 to vector<2x64xf32>
    %133 = arith.maximumf %131, %132 : vector<2x64xf32>
    %134 = vector.extract_strided_slice %10 {offsets = [256, 0], sizes = [64, 64], strides = [1, 1]} : vector<576x64xf32> to vector<64x64xf32>
    %cst_27 = arith.constant dense<0.000000e+00> : vector<2x64xf32>
    %135 = tpu.matmul %133, %134, %cst_27 {dimension_numbers = #tpu.dot_dimension_numbers<[1], [0], [0], [1], [0, 0, 1, 1], [], []>} : vector<2x64xf32>, vector<64x64xf32>, vector<2x64xf32> -> vector<2x64xf32>
    %136 = arith.addf %111, %135 : vector<2x64xf32>
    %137 = vector.extract_strided_slice %7 {offsets = [40, 0], sizes = [2, 32], strides = [1, 1]} : vector<128x32xf32> to vector<2x32xf32>
    %138 = vector.extract_strided_slice %7 {offsets = [42, 0], sizes = [2, 32], strides = [1, 1]} : vector<128x32xf32> to vector<2x32xf32>
    %139 = vector.extract_strided_slice %7 {offsets = [44, 0], sizes = [2, 32], strides = [1, 1]} : vector<128x32xf32> to vector<2x32xf32>
    %140 = vector.extract_strided_slice %7 {offsets = [46, 0], sizes = [2, 32], strides = [1, 1]} : vector<128x32xf32> to vector<2x32xf32>
    %141 = vector.extract_strided_slice %7 {offsets = [56, 0], sizes = [2, 32], strides = [1, 1]} : vector<128x32xf32> to vector<2x32xf32>
    %142 = vector.extract_strided_slice %7 {offsets = [58, 0], sizes = [2, 32], strides = [1, 1]} : vector<128x32xf32> to vector<2x32xf32>
    %143 = vector.extract_strided_slice %7 {offsets = [60, 0], sizes = [2, 32], strides = [1, 1]} : vector<128x32xf32> to vector<2x32xf32>
    %144 = vector.extract_strided_slice %7 {offsets = [62, 0], sizes = [2, 32], strides = [1, 1]} : vector<128x32xf32> to vector<2x32xf32>
    %145 = vector.extract_strided_slice %7 {offsets = [72, 0], sizes = [2, 32], strides = [1, 1]} : vector<128x32xf32> to vector<2x32xf32>
    %146 = vector.extract_strided_slice %7 {offsets = [74, 0], sizes = [2, 32], strides = [1, 1]} : vector<128x32xf32> to vector<2x32xf32>
    %147 = vector.extract_strided_slice %7 {offsets = [76, 0], sizes = [2, 32], strides = [1, 1]} : vector<128x32xf32> to vector<2x32xf32>
    %148 = vector.extract_strided_slice %7 {offsets = [78, 0], sizes = [2, 32], strides = [1, 1]} : vector<128x32xf32> to vector<2x32xf32>
    %149 = vector.extract_strided_slice %7 {offsets = [88, 0], sizes = [2, 32], strides = [1, 1]} : vector<128x32xf32> to vector<2x32xf32>
    %150 = vector.extract_strided_slice %7 {offsets = [90, 0], sizes = [2, 32], strides = [1, 1]} : vector<128x32xf32> to vector<2x32xf32>
    %151 = vector.extract_strided_slice %7 {offsets = [92, 0], sizes = [2, 32], strides = [1, 1]} : vector<128x32xf32> to vector<2x32xf32>
    %152 = vector.extract_strided_slice %7 {offsets = [94, 0], sizes = [2, 32], strides = [1, 1]} : vector<128x32xf32> to vector<2x32xf32>
    %153 = tpu.concatenate %137, %138, %139, %140, %141, %142, %143, %144, %145, %146, %147, %148, %149, %150, %151, %152 in 1 : vector<2x32xf32>, vector<2x32xf32>, vector<2x32xf32>, vector<2x32xf32>, vector<2x32xf32>, vector<2x32xf32>, vector<2x32xf32>, vector<2x32xf32>, vector<2x32xf32>, vector<2x32xf32>, vector<2x32xf32>, vector<2x32xf32>, vector<2x32xf32>, vector<2x32xf32>, vector<2x32xf32>, vector<2x32xf32> -> vector<2x512xf32>
    %cst_28 = arith.constant dense<0.000000e+00> : vector<2x64xf32>
    %154 = tpu.matmul %153, %8, %cst_28 {dimension_numbers = #tpu.dot_dimension_numbers<[1], [0], [0], [1], [0, 0, 1, 1], [], []>} : vector<2x512xf32>, vector<512x64xf32>, vector<2x64xf32> -> vector<2x64xf32>
    %155 = vector.broadcast %9 : vector<1x64xf32> to vector<2x64xf32>
    %156 = arith.addf %154, %155 : vector<2x64xf32>
    %cst_29 = arith.constant 0.000000e+00 : f32
    %157 = vector.broadcast %cst_29 : f32 to vector<2x64xf32>
    %158 = arith.maximumf %156, %157 : vector<2x64xf32>
    %159 = vector.extract_strided_slice %10 {offsets = [320, 0], sizes = [64, 64], strides = [1, 1]} : vector<576x64xf32> to vector<64x64xf32>
    %cst_30 = arith.constant dense<0.000000e+00> : vector<2x64xf32>
    %160 = tpu.matmul %158, %159, %cst_30 {dimension_numbers = #tpu.dot_dimension_numbers<[1], [0], [0], [1], [0, 0, 1, 1], [], []>} : vector<2x64xf32>, vector<64x64xf32>, vector<2x64xf32> -> vector<2x64xf32>
    %161 = arith.addf %136, %160 : vector<2x64xf32>
    %162 = vector.extract_strided_slice %7 {offsets = [64, 0], sizes = [2, 32], strides = [1, 1]} : vector<128x32xf32> to vector<2x32xf32>
    %163 = vector.extract_strided_slice %7 {offsets = [66, 0], sizes = [2, 32], strides = [1, 1]} : vector<128x32xf32> to vector<2x32xf32>
    %164 = vector.extract_strided_slice %7 {offsets = [68, 0], sizes = [2, 32], strides = [1, 1]} : vector<128x32xf32> to vector<2x32xf32>
    %165 = vector.extract_strided_slice %7 {offsets = [70, 0], sizes = [2, 32], strides = [1, 1]} : vector<128x32xf32> to vector<2x32xf32>
    %166 = vector.extract_strided_slice %7 {offsets = [80, 0], sizes = [2, 32], strides = [1, 1]} : vector<128x32xf32> to vector<2x32xf32>
    %167 = vector.extract_strided_slice %7 {offsets = [82, 0], sizes = [2, 32], strides = [1, 1]} : vector<128x32xf32> to vector<2x32xf32>
    %168 = vector.extract_strided_slice %7 {offsets = [84, 0], sizes = [2, 32], strides = [1, 1]} : vector<128x32xf32> to vector<2x32xf32>
    %169 = vector.extract_strided_slice %7 {offsets = [86, 0], sizes = [2, 32], strides = [1, 1]} : vector<128x32xf32> to vector<2x32xf32>
    %170 = vector.extract_strided_slice %7 {offsets = [96, 0], sizes = [2, 32], strides = [1, 1]} : vector<128x32xf32> to vector<2x32xf32>
    %171 = vector.extract_strided_slice %7 {offsets = [98, 0], sizes = [2, 32], strides = [1, 1]} : vector<128x32xf32> to vector<2x32xf32>
    %172 = vector.extract_strided_slice %7 {offsets = [100, 0], sizes = [2, 32], strides = [1, 1]} : vector<128x32xf32> to vector<2x32xf32>
    %173 = vector.extract_strided_slice %7 {offsets = [102, 0], sizes = [2, 32], strides = [1, 1]} : vector<128x32xf32> to vector<2x32xf32>
    %174 = vector.extract_strided_slice %7 {offsets = [112, 0], sizes = [2, 32], strides = [1, 1]} : vector<128x32xf32> to vector<2x32xf32>
    %175 = vector.extract_strided_slice %7 {offsets = [114, 0], sizes = [2, 32], strides = [1, 1]} : vector<128x32xf32> to vector<2x32xf32>
    %176 = vector.extract_strided_slice %7 {offsets = [116, 0], sizes = [2, 32], strides = [1, 1]} : vector<128x32xf32> to vector<2x32xf32>
    %177 = vector.extract_strided_slice %7 {offsets = [118, 0], sizes = [2, 32], strides = [1, 1]} : vector<128x32xf32> to vector<2x32xf32>
    %178 = tpu.concatenate %162, %163, %164, %165, %166, %167, %168, %169, %170, %171, %172, %173, %174, %175, %176, %177 in 1 : vector<2x32xf32>, vector<2x32xf32>, vector<2x32xf32>, vector<2x32xf32>, vector<2x32xf32>, vector<2x32xf32>, vector<2x32xf32>, vector<2x32xf32>, vector<2x32xf32>, vector<2x32xf32>, vector<2x32xf32>, vector<2x32xf32>, vector<2x32xf32>, vector<2x32xf32>, vector<2x32xf32>, vector<2x32xf32> -> vector<2x512xf32>
    %cst_31 = arith.constant dense<0.000000e+00> : vector<2x64xf32>
    %179 = tpu.matmul %178, %8, %cst_31 {dimension_numbers = #tpu.dot_dimension_numbers<[1], [0], [0], [1], [0, 0, 1, 1], [], []>} : vector<2x512xf32>, vector<512x64xf32>, vector<2x64xf32> -> vector<2x64xf32>
    %180 = vector.broadcast %9 : vector<1x64xf32> to vector<2x64xf32>
    %181 = arith.addf %179, %180 : vector<2x64xf32>
    %cst_32 = arith.constant 0.000000e+00 : f32
    %182 = vector.broadcast %cst_32 : f32 to vector<2x64xf32>
    %183 = arith.maximumf %181, %182 : vector<2x64xf32>
    %184 = vector.extract_strided_slice %10 {offsets = [384, 0], sizes = [64, 64], strides = [1, 1]} : vector<576x64xf32> to vector<64x64xf32>
    %cst_33 = arith.constant dense<0.000000e+00> : vector<2x64xf32>
    %185 = tpu.matmul %183, %184, %cst_33 {dimension_numbers = #tpu.dot_dimension_numbers<[1], [0], [0], [1], [0, 0, 1, 1], [], []>} : vector<2x64xf32>, vector<64x64xf32>, vector<2x64xf32> -> vector<2x64xf32>
    %186 = arith.addf %161, %185 : vector<2x64xf32>
    %187 = vector.extract_strided_slice %7 {offsets = [68, 0], sizes = [2, 32], strides = [1, 1]} : vector<128x32xf32> to vector<2x32xf32>
    %188 = vector.extract_strided_slice %7 {offsets = [70, 0], sizes = [2, 32], strides = [1, 1]} : vector<128x32xf32> to vector<2x32xf32>
    %189 = vector.extract_strided_slice %7 {offsets = [72, 0], sizes = [2, 32], strides = [1, 1]} : vector<128x32xf32> to vector<2x32xf32>
    %190 = vector.extract_strided_slice %7 {offsets = [74, 0], sizes = [2, 32], strides = [1, 1]} : vector<128x32xf32> to vector<2x32xf32>
    %191 = vector.extract_strided_slice %7 {offsets = [84, 0], sizes = [2, 32], strides = [1, 1]} : vector<128x32xf32> to vector<2x32xf32>
    %192 = vector.extract_strided_slice %7 {offsets = [86, 0], sizes = [2, 32], strides = [1, 1]} : vector<128x32xf32> to vector<2x32xf32>
    %193 = vector.extract_strided_slice %7 {offsets = [88, 0], sizes = [2, 32], strides = [1, 1]} : vector<128x32xf32> to vector<2x32xf32>
    %194 = vector.extract_strided_slice %7 {offsets = [90, 0], sizes = [2, 32], strides = [1, 1]} : vector<128x32xf32> to vector<2x32xf32>
    %195 = vector.extract_strided_slice %7 {offsets = [100, 0], sizes = [2, 32], strides = [1, 1]} : vector<128x32xf32> to vector<2x32xf32>
    %196 = vector.extract_strided_slice %7 {offsets = [102, 0], sizes = [2, 32], strides = [1, 1]} : vector<128x32xf32> to vector<2x32xf32>
    %197 = vector.extract_strided_slice %7 {offsets = [104, 0], sizes = [2, 32], strides = [1, 1]} : vector<128x32xf32> to vector<2x32xf32>
    %198 = vector.extract_strided_slice %7 {offsets = [106, 0], sizes = [2, 32], strides = [1, 1]} : vector<128x32xf32> to vector<2x32xf32>
    %199 = vector.extract_strided_slice %7 {offsets = [116, 0], sizes = [2, 32], strides = [1, 1]} : vector<128x32xf32> to vector<2x32xf32>
    %200 = vector.extract_strided_slice %7 {offsets = [118, 0], sizes = [2, 32], strides = [1, 1]} : vector<128x32xf32> to vector<2x32xf32>
    %201 = vector.extract_strided_slice %7 {offsets = [120, 0], sizes = [2, 32], strides = [1, 1]} : vector<128x32xf32> to vector<2x32xf32>
    %202 = vector.extract_strided_slice %7 {offsets = [122, 0], sizes = [2, 32], strides = [1, 1]} : vector<128x32xf32> to vector<2x32xf32>
    %203 = tpu.concatenate %187, %188, %189, %190, %191, %192, %193, %194, %195, %196, %197, %198, %199, %200, %201, %202 in 1 : vector<2x32xf32>, vector<2x32xf32>, vector<2x32xf32>, vector<2x32xf32>, vector<2x32xf32>, vector<2x32xf32>, vector<2x32xf32>, vector<2x32xf32>, vector<2x32xf32>, vector<2x32xf32>, vector<2x32xf32>, vector<2x32xf32>, vector<2x32xf32>, vector<2x32xf32>, vector<2x32xf32>, vector<2x32xf32> -> vector<2x512xf32>
    %cst_34 = arith.constant dense<0.000000e+00> : vector<2x64xf32>
    %204 = tpu.matmul %203, %8, %cst_34 {dimension_numbers = #tpu.dot_dimension_numbers<[1], [0], [0], [1], [0, 0, 1, 1], [], []>} : vector<2x512xf32>, vector<512x64xf32>, vector<2x64xf32> -> vector<2x64xf32>
    %205 = vector.broadcast %9 : vector<1x64xf32> to vector<2x64xf32>
    %206 = arith.addf %204, %205 : vector<2x64xf32>
    %cst_35 = arith.constant 0.000000e+00 : f32
    %207 = vector.broadcast %cst_35 : f32 to vector<2x64xf32>
    %208 = arith.maximumf %206, %207 : vector<2x64xf32>
    %209 = vector.extract_strided_slice %10 {offsets = [448, 0], sizes = [64, 64], strides = [1, 1]} : vector<576x64xf32> to vector<64x64xf32>
    %cst_36 = arith.constant dense<0.000000e+00> : vector<2x64xf32>
    %210 = tpu.matmul %208, %209, %cst_36 {dimension_numbers = #tpu.dot_dimension_numbers<[1], [0], [0], [1], [0, 0, 1, 1], [], []>} : vector<2x64xf32>, vector<64x64xf32>, vector<2x64xf32> -> vector<2x64xf32>
    %211 = arith.addf %186, %210 : vector<2x64xf32>
    %212 = vector.extract_strided_slice %7 {offsets = [72, 0], sizes = [2, 32], strides = [1, 1]} : vector<128x32xf32> to vector<2x32xf32>
    %213 = vector.extract_strided_slice %7 {offsets = [74, 0], sizes = [2, 32], strides = [1, 1]} : vector<128x32xf32> to vector<2x32xf32>
    %214 = vector.extract_strided_slice %7 {offsets = [76, 0], sizes = [2, 32], strides = [1, 1]} : vector<128x32xf32> to vector<2x32xf32>
    %215 = vector.extract_strided_slice %7 {offsets = [78, 0], sizes = [2, 32], strides = [1, 1]} : vector<128x32xf32> to vector<2x32xf32>
    %216 = vector.extract_strided_slice %7 {offsets = [88, 0], sizes = [2, 32], strides = [1, 1]} : vector<128x32xf32> to vector<2x32xf32>
    %217 = vector.extract_strided_slice %7 {offsets = [90, 0], sizes = [2, 32], strides = [1, 1]} : vector<128x32xf32> to vector<2x32xf32>
    %218 = vector.extract_strided_slice %7 {offsets = [92, 0], sizes = [2, 32], strides = [1, 1]} : vector<128x32xf32> to vector<2x32xf32>
    %219 = vector.extract_strided_slice %7 {offsets = [94, 0], sizes = [2, 32], strides = [1, 1]} : vector<128x32xf32> to vector<2x32xf32>
    %220 = vector.extract_strided_slice %7 {offsets = [104, 0], sizes = [2, 32], strides = [1, 1]} : vector<128x32xf32> to vector<2x32xf32>
    %221 = vector.extract_strided_slice %7 {offsets = [106, 0], sizes = [2, 32], strides = [1, 1]} : vector<128x32xf32> to vector<2x32xf32>
    %222 = vector.extract_strided_slice %7 {offsets = [108, 0], sizes = [2, 32], strides = [1, 1]} : vector<128x32xf32> to vector<2x32xf32>
    %223 = vector.extract_strided_slice %7 {offsets = [110, 0], sizes = [2, 32], strides = [1, 1]} : vector<128x32xf32> to vector<2x32xf32>
    %224 = vector.extract_strided_slice %7 {offsets = [120, 0], sizes = [2, 32], strides = [1, 1]} : vector<128x32xf32> to vector<2x32xf32>
    %225 = vector.extract_strided_slice %7 {offsets = [122, 0], sizes = [2, 32], strides = [1, 1]} : vector<128x32xf32> to vector<2x32xf32>
    %226 = vector.extract_strided_slice %7 {offsets = [124, 0], sizes = [2, 32], strides = [1, 1]} : vector<128x32xf32> to vector<2x32xf32>
    %227 = vector.extract_strided_slice %7 {offsets = [126, 0], sizes = [2, 32], strides = [1, 1]} : vector<128x32xf32> to vector<2x32xf32>
    %228 = tpu.concatenate %212, %213, %214, %215, %216, %217, %218, %219, %220, %221, %222, %223, %224, %225, %226, %227 in 1 : vector<2x32xf32>, vector<2x32xf32>, vector<2x32xf32>, vector<2x32xf32>, vector<2x32xf32>, vector<2x32xf32>, vector<2x32xf32>, vector<2x32xf32>, vector<2x32xf32>, vector<2x32xf32>, vector<2x32xf32>, vector<2x32xf32>, vector<2x32xf32>, vector<2x32xf32>, vector<2x32xf32>, vector<2x32xf32> -> vector<2x512xf32>
    %cst_37 = arith.constant dense<0.000000e+00> : vector<2x64xf32>
    %229 = tpu.matmul %228, %8, %cst_37 {dimension_numbers = #tpu.dot_dimension_numbers<[1], [0], [0], [1], [0, 0, 1, 1], [], []>} : vector<2x512xf32>, vector<512x64xf32>, vector<2x64xf32> -> vector<2x64xf32>
    %230 = vector.broadcast %9 : vector<1x64xf32> to vector<2x64xf32>
    %231 = arith.addf %229, %230 : vector<2x64xf32>
    %cst_38 = arith.constant 0.000000e+00 : f32
    %232 = vector.broadcast %cst_38 : f32 to vector<2x64xf32>
    %233 = arith.maximumf %231, %232 : vector<2x64xf32>
    %234 = vector.extract_strided_slice %10 {offsets = [512, 0], sizes = [64, 64], strides = [1, 1]} : vector<576x64xf32> to vector<64x64xf32>
    %cst_39 = arith.constant dense<0.000000e+00> : vector<2x64xf32>
    %235 = tpu.matmul %233, %234, %cst_39 {dimension_numbers = #tpu.dot_dimension_numbers<[1], [0], [0], [1], [0, 0, 1, 1], [], []>} : vector<2x64xf32>, vector<64x64xf32>, vector<2x64xf32> -> vector<2x64xf32>
    %236 = arith.addf %211, %235 : vector<2x64xf32>
    %c0_40 = arith.constant 0 : index
    %c0_41 = arith.constant 0 : index
    %237 = vector.load %arg6[%c0_40, %c0_41] : memref<1x64xf32, #tpu.memory_space<vmem>>, vector<1x64xf32>
    %238 = vector.broadcast %237 : vector<1x64xf32> to vector<2x64xf32>
    %239 = arith.addf %236, %238 : vector<2x64xf32>
    %cst_42 = arith.constant 0.000000e+00 : f32
    %240 = vector.broadcast %cst_42 : f32 to vector<2x64xf32>
    %241 = arith.maximumf %239, %240 : vector<2x64xf32>
    %c0_43 = arith.constant 0 : index
    %c0_44 = arith.constant 0 : index
    %242 = vector.load %arg7[%c0_43, %c0_44] : memref<64x1024xf32, #tpu.memory_space<vmem>>, vector<64x1024xf32>
    %cst_45 = arith.constant dense<0.000000e+00> : vector<2x1024xf32>
    %243 = tpu.matmul %241, %242, %cst_45 {dimension_numbers = #tpu.dot_dimension_numbers<[1], [0], [0], [1], [0, 0, 1, 1], [], []>} : vector<2x64xf32>, vector<64x1024xf32>, vector<2x1024xf32> -> vector<2x1024xf32>
    %c0_46 = arith.constant 0 : index
    %c0_47 = arith.constant 0 : index
    %244 = vector.load %arg8[%c0_46, %c0_47] : memref<1x1024xf32, #tpu.memory_space<vmem>>, vector<1x1024xf32>
    %245 = vector.broadcast %244 : vector<1x1024xf32> to vector<2x1024xf32>
    %246 = arith.addf %243, %245 : vector<2x1024xf32>
    %cst_48 = arith.constant 0.000000e+00 : f32
    %247 = vector.broadcast %cst_48 : f32 to vector<2x1024xf32>
    %248 = arith.maximumf %246, %247 : vector<2x1024xf32>
    %c0_49 = arith.constant 0 : index
    %c0_50 = arith.constant 0 : index
    %249 = vector.load %arg9[%c0_49, %c0_50] : memref<1024x7xf32, #tpu.memory_space<vmem>>, vector<1024x7xf32>
    %cst_51 = arith.constant dense<0.000000e+00> : vector<2x7xf32>
    %250 = tpu.matmul %248, %249, %cst_51 {dimension_numbers = #tpu.dot_dimension_numbers<[1], [0], [0], [1], [0, 0, 1, 1], [], []>} : vector<2x1024xf32>, vector<1024x7xf32>, vector<2x7xf32> -> vector<2x7xf32>
    %c0_52 = arith.constant 0 : index
    %c0_53 = arith.constant 0 : index
    %251 = vector.load %arg10[%c0_52, %c0_53] : memref<1x7xf32, #tpu.memory_space<vmem>>, vector<1x7xf32>
    %252 = vector.broadcast %251 : vector<1x7xf32> to vector<2x7xf32>
    %253 = arith.addf %250, %252 : vector<2x7xf32>
    %254 = vector.extract_strided_slice %253 {offsets = [0, 0], sizes = [2, 1], strides = [1, 1]} : vector<2x7xf32> to vector<2x1xf32>
    %255 = vector.extract_strided_slice %253 {offsets = [0, 1], sizes = [2, 6], strides = [1, 1]} : vector<2x7xf32> to vector<2x6xf32>
    %256 = vector.broadcast %254 : vector<2x1xf32> to vector<2x6xf32>
    %257 = arith.addf %256, %255 : vector<2x6xf32>
    %cst_54 = arith.constant dense<0.000000e+00> : vector<2xf32>
    %258 = vector.multi_reduction <add>, %255, %cst_54 [1] : vector<2x6xf32> to vector<2xf32>
    %259 = vector.shape_cast %258 : vector<2xf32> to vector<2x1xf32>
    %cst_55 = arith.constant 6.000000e+00 : f32
    %260 = vector.broadcast %cst_55 : f32 to vector<2x1xf32>
    %261 = arith.divf %259, %260 : vector<2x1xf32>
    %262 = vector.broadcast %261 : vector<2x1xf32> to vector<2x6xf32>
    %263 = arith.subf %257, %262 : vector<2x6xf32>
    %c0_56 = arith.constant 0 : index
    %c0_57 = arith.constant 0 : index
    %264 = vector.load %arg11[%c0_56, %c0_57] : memref<2x6xf32, #tpu.memory_space<vmem>>, vector<2x6xf32>
    tpu.vector_store %arg11[%c0_56, %c0_57], %263 {strides = array<i32>} : memref<2x6xf32, #tpu.memory_space<vmem>>, vector<2x6xf32>,
    return
  }
}

</mosaic_0001>

<llo_original>
// kernel: dqn_forward.1
$region0: #{dqn_forward.1}
  #allocation0 [shape = 'u32[]', space=smem, size = 0x4, offset = 0x4, fixed_abs, tag = 'smem constant byte address 0x4 - core index']
  #allocation1 [shape = 'u32[144,128]{1,0:T(1,128)}', space=vmem, size = 0x12000, scoped, tag = 'internal scratch']
  %s0 = inlined_call_operand.vmem [shape: f32[128,256], index: 0, kind: input, shape index: {}]
  %s1 = inlined_call_operand.vmem [shape: f32[256,32], index: 1, kind: input, shape index: {}]
  %s2 = inlined_call_operand.vmem [shape: f32[1,32], index: 2, kind: input, shape index: {}]
  %s3 = inlined_call_operand.vmem [shape: f32[512,64], index: 3, kind: input, shape index: {}]
  %s4 = inlined_call_operand.vmem [shape: f32[1,64], index: 4, kind: input, shape index: {}]
  %s5 = inlined_call_operand.vmem [shape: f32[576,64], index: 5, kind: input, shape index: {}]
  %s6 = inlined_call_operand.vmem [shape: f32[1,64], index: 6, kind: input, shape index: {}]
  %s7 = inlined_call_operand.vmem [shape: f32[64,1024], index: 7, kind: input, shape index: {}]
  %s8 = inlined_call_operand.vmem [shape: f32[1,1024], index: 8, kind: input, shape index: {}]
  %s9 = inlined_call_operand.vmem [shape: f32[1024,7], index: 9, kind: input, shape index: {}]
  %s10 = inlined_call_operand.vmem [shape: f32[1,7], index: 10, kind: input, shape index: {}]
  %s11 = inlined_call_operand.hbm [shape: f32[2,6], index: 11, kind: output, shape index: {}]
  %s12 = sld [smem:[#allocation0]]
  $region54: #{dqn_forward.1} parent=0
    _
  %s14 = ssub.s32 1, %s12
  %s15 = scalar_select 0, %s14, %s12
  $region1: #{dqn_forward.1} parent=0
    #allocation2 [shape = 'u8[1024]{0}', space=vmem, size = 0x400, scoped, tag = 'output window, operand 0, single buffered']
    #allocation3 [shape = 's32[1]{0}', space=sflag, size = 0x4, scoped, tag = 'scoped memory for dqn_forward.1']
    %16 = vsyncpa [#allocation3], 0
    // Predicated region
    $region2: #{dqn_forward.1} parent=1 // pred_check
      _
    $region3: #{dqn_forward.1} parent=1 // pred_check_branch
      %18 = sbr.rel (0) target = $region5
    $region4: #{dqn_forward.1} parent=1 // pred_region
      _
    $region5: #{dqn_forward.1} parent=1 // pred_fallthru
      _
    // Predicated region
    $region6: #{dqn_forward.1} parent=1 // pred_check
      _
    $region7: #{dqn_forward.1} parent=1 // pred_check_branch
      %20 = sbr.rel (0) target = $region9
    $region8: #{dqn_forward.1} parent=1 // pred_region
      _
    $region9: #{dqn_forward.1} parent=1 // pred_fallthru
      _
    // Predicated region
    $region10: #{dqn_forward.1} parent=1 // pred_check
      _
    $region11: #{dqn_forward.1} parent=1 // pred_check_branch
      %22 = sbr.rel (0) target = $region13
    $region12: #{dqn_forward.1} parent=1 // pred_region
      _
    $region13: #{dqn_forward.1} parent=1 // pred_fallthru
      _
    // Predicated region
    $region14: #{dqn_forward.1} parent=1 // pred_check
      _
    $region15: #{dqn_forward.1} parent=1 // pred_check_branch
      %24 = sbr.rel (0) target = $region17
    $region16: #{dqn_forward.1} parent=1 // pred_region
      _
    $region17: #{dqn_forward.1} parent=1 // pred_fallthru
      _
    // Predicated region
    $region18: #{dqn_forward.1} parent=1 // pred_check
      _
    $region19: #{dqn_forward.1} parent=1 // pred_check_branch
      %26 = sbr.rel (0) target = $region21
    $region20: #{dqn_forward.1} parent=1 // pred_region
      _
    $region21: #{dqn_forward.1} parent=1 // pred_fallthru
      _
    // Predicated region
    $region22: #{dqn_forward.1} parent=1 // pred_check
      _
    $region23: #{dqn_forward.1} parent=1 // pred_check_branch
      %28 = sbr.rel (0) target = $region25
    $region24: #{dqn_forward.1} parent=1 // pred_region
      _
    $region25: #{dqn_forward.1} parent=1 // pred_fallthru
      _
    // Predicated region
    $region26: #{dqn_forward.1} parent=1 // pred_check
      _
    $region27: #{dqn_forward.1} parent=1 // pred_check_branch
      %30 = sbr.rel (0) target = $region29
    $region28: #{dqn_forward.1} parent=1 // pred_region
      _
    $region29: #{dqn_forward.1} parent=1 // pred_fallthru
      _
    // Predicated region
    $region30: #{dqn_forward.1} parent=1 // pred_check
      _
    $region31: #{dqn_forward.1} parent=1 // pred_check_branch
      %32 = sbr.rel (0) target = $region33
    $region32: #{dqn_forward.1} parent=1 // pred_region
      _
    $region33: #{dqn_forward.1} parent=1 // pred_fallthru
      _
    // Predicated region
    $region34: #{dqn_forward.1} parent=1 // pred_check
      _
    $region35: #{dqn_forward.1} parent=1 // pred_check_branch
      %34 = sbr.rel (0) target = $region37
    $region36: #{dqn_forward.1} parent=1 // pred_region
      _
    $region37: #{dqn_forward.1} parent=1 // pred_fallthru
      _
    // Predicated region
    $region38: #{dqn_forward.1} parent=1 // pred_check
      _
    $region39: #{dqn_forward.1} parent=1 // pred_check_branch
      %36 = sbr.rel (0) target = $region41
    $region40: #{dqn_forward.1} parent=1 // pred_region
      _
    $region41: #{dqn_forward.1} parent=1 // pred_fallthru
      _
    // Predicated region
    $region42: #{dqn_forward.1} parent=1 // pred_check
      _
    $region43: #{dqn_forward.1} parent=1 // pred_check_branch
      %38 = sbr.rel (0) target = $region45
    $region44: #{dqn_forward.1} parent=1 // pred_region
      _
    $region45: #{dqn_forward.1} parent=1 // pred_fallthru
      _
    %v39 = vld [vmem:[%s0] sm:$0xff]
    %v40 = vld [vmem:[%s0 + $0x8] sm:$0xff]
    %v41 = vld [vmem:[%s0 + $0x10] sm:$0xff]
    %v42 = vld [vmem:[%s0 + $0x18] sm:$0xff]
    %v43 = vld [vmem:[%s0 + $0x20] sm:$0xff]
    %v44 = vld [vmem:[%s0 + $0x28] sm:$0xff]
    %v45 = vld [vmem:[%s0 + $0x30] sm:$0xff]
    %v46 = vld [vmem:[%s0 + $0x38] sm:$0xff]
    %v47 = vld [vmem:[%s0 + $0x40] sm:$0xff]
    %v48 = vld [vmem:[%s0 + $0x48] sm:$0xff]
    %v49 = vld [vmem:[%s0 + $0x50] sm:$0xff]
    %v50 = vld [vmem:[%s0 + $0x58] sm:$0xff]
    %v51 = vld [vmem:[%s0 + $0x60] sm:$0xff]
    %v52 = vld [vmem:[%s0 + $0x68] sm:$0xff]
    %v53 = vld [vmem:[%s0 + $0x70] sm:$0xff]
    %v54 = vld [vmem:[%s0 + $0x78] sm:$0xff]
    %v55 = vld [vmem:[%s0 + $0x80] sm:$0xff]
    %v56 = vld [vmem:[%s0 + $0x88] sm:$0xff]
    %v57 = vld [vmem:[%s0 + $0x90] sm:$0xff]
    %v58 = vld [vmem:[%s0 + $0x98] sm:$0xff]
    %v59 = vld [vmem:[%s0 + $0xa0] sm:$0xff]
    %v60 = vld [vmem:[%s0 + $0xa8] sm:$0xff]
    %v61 = vld [vmem:[%s0 + $0xb0] sm:$0xff]
    %v62 = vld [vmem:[%s0 + $0xb8] sm:$0xff]
    %v63 = vld [vmem:[%s0 + $0xc0] sm:$0xff]
    %v64 = vld [vmem:[%s0 + $0xc8] sm:$0xff]
    %v65 = vld [vmem:[%s0 + $0xd0] sm:$0xff]
    %v66 = vld [vmem:[%s0 + $0xd8] sm:$0xff]
    %v67 = vld [vmem:[%s0 + $0xe0] sm:$0xff]
    %v68 = vld [vmem:[%s0 + $0xe8] sm:$0xff]
    %v69 = vld [vmem:[%s0 + $0xf0] sm:$0xff]
    %v70 = vld [vmem:[%s0 + $0xf8] sm:$0xff]
    %v71 = vld [vmem:[%s1] sm:$0xff]
    %v72 = vld [vmem:[%s1 + $0x8] sm:$0xff]
    %v73 = vld [vmem:[%s1 + $0x10] sm:$0xff]
    %v74 = vld [vmem:[%s1 + $0x18] sm:$0xff]
    %v75 = vld [vmem:[%s1 + $0x20] sm:$0xff]
    %v76 = vld [vmem:[%s1 + $0x28] sm:$0xff]
    %v77 = vld [vmem:[%s1 + $0x30] sm:$0xff]
    %v78 = vld [vmem:[%s1 + $0x38] sm:$0xff]
    %v79 = vld [vmem:[%s1 + $0x40] sm:$0xff]
    %v80 = vld [vmem:[%s1 + $0x48] sm:$0xff]
    %v81 = vld [vmem:[%s1 + $0x50] sm:$0xff]
    %v82 = vld [vmem:[%s1 + $0x58] sm:$0xff]
    %v83 = vld [vmem:[%s1 + $0x60] sm:$0xff]
    %v84 = vld [vmem:[%s1 + $0x68] sm:$0xff]
    %v85 = vld [vmem:[%s1 + $0x70] sm:$0xff]
    %v86 = vld [vmem:[%s1 + $0x78] sm:$0xff]
    %v87 = vld [vmem:[%s1 + $0x80] sm:$0xff]
    %v88 = vld [vmem:[%s1 + $0x88] sm:$0xff]
    %v89 = vld [vmem:[%s1 + $0x90] sm:$0xff]
    %v90 = vld [vmem:[%s1 + $0x98] sm:$0xff]
    %v91 = vld [vmem:[%s1 + $0xa0] sm:$0xff]
    %v92 = vld [vmem:[%s1 + $0xa8] sm:$0xff]
    %v93 = vld [vmem:[%s1 + $0xb0] sm:$0xff]
    %v94 = vld [vmem:[%s1 + $0xb8] sm:$0xff]
    %v95 = vld [vmem:[%s1 + $0xc0] sm:$0xff]
    %v96 = vld [vmem:[%s1 + $0xc8] sm:$0xff]
    %v97 = vld [vmem:[%s1 + $0xd0] sm:$0xff]
    %v98 = vld [vmem:[%s1 + $0xd8] sm:$0xff]
    %v99 = vld [vmem:[%s1 + $0xe0] sm:$0xff]
    %v100 = vld [vmem:[%s1 + $0xe8] sm:$0xff]
    %v101 = vld [vmem:[%s1 + $0xf0] sm:$0xff]
    %v102 = vld [vmem:[%s1 + $0xf8] sm:$0xff]
    %v103 = vld [vmem:[%s2] sm:$0x1]
    %v105 = vlaneseq
    %v106 = vshrl.u32 %v105, 7
    %v107 = vsub.s32 0, %v106
    %v108 = vrot.slane %v103, %v107
    %110 = vmatprep.subr.mxu0 0.0
    %111 = vmatpush1.msra.mxu0 %v71
    %112 = vmatprep.subr.mxu0 0.0
    %113 = vmatpush1.msra.mxu0 %v72
    %114 = vmatprep.subr.mxu0 0.0
    %115 = vmatpush1.msra.mxu0 %v73
    %116 = vmatprep.subr.mxu0 0.0
    %117 = vmatpush1.msra.mxu0 %v74
    %118 = vmatprep.subr.mxu0 0.0
    %119 = vmatpush1.msra.mxu0 %v75
    %120 = vmatprep.subr.mxu0 0.0
    %121 = vmatpush1.msra.mxu0 %v76
    %122 = vmatprep.subr.mxu0 0.0
    %123 = vmatpush1.msra.mxu0 %v77
    %124 = vmatprep.subr.mxu0 0.0
    %125 = vmatpush1.msra.mxu0 %v78
    %126 = vmatprep.subr.mxu0 0.0
    %127 = vmatpush1.msra.mxu0 %v79
    %128 = vmatprep.subr.mxu0 0.0
    %129 = vmatpush1.msra.mxu0 %v80
    %130 = vmatprep.subr.mxu0 0.0
    %131 = vmatpush1.msra.mxu0 %v81
    %132 = vmatprep.subr.mxu0 0.0
    %133 = vmatpush1.msra.mxu0 %v82
    %134 = vmatprep.subr.mxu0 0.0
    %135 = vmatpush1.msra.mxu0 %v83
    %136 = vmatprep.subr.mxu0 0.0
    %137 = vmatpush1.msra.mxu0 %v84
    %138 = vmatprep.subr.mxu0 0.0
    %139 = vmatpush1.msra.mxu0 %v85
    %140 = vmatprep.subr.mxu0 0.0
    %141 = vmatpush1.msra.mxu0 %v86
    %142 = vmatprep.subr.mxu0 0.0
    %143 = vmatpush1.msra.mxu0 %v87
    %144 = vmatprep.subr.mxu0 0.0
    %145 = vmatpush1.msra.mxu0 %v88
    %146 = vmatprep.subr.mxu0 0.0
    %147 = vmatpush1.msra.mxu0 %v89
    %148 = vmatprep.subr.mxu0 0.0
    %149 = vmatpush1.msra.mxu0 %v90
    %150 = vmatprep.subr.mxu0 0.0
    %151 = vmatpush1.msra.mxu0 %v91
    %152 = vmatprep.subr.mxu0 0.0
    %153 = vmatpush1.msra.mxu0 %v92
    %154 = vmatprep.subr.mxu0 0.0
    %155 = vmatpush1.msra.mxu0 %v93
    %156 = vmatprep.subr.mxu0 0.0
    %157 = vmatpush1.msra.mxu0 %v94
    %158 = vmatprep.subr.mxu0 0.0
    %159 = vmatpush1.msra.mxu0 %v95
    %160 = vmatprep.subr.mxu0 0.0
    %161 = vmatpush1.msra.mxu0 %v96
    %162 = vmatprep.subr.mxu0 0.0
    %163 = vmatpush1.msra.mxu0 %v97
    %164 = vmatprep.subr.mxu0 0.0
    %165 = vmatpush1.msra.mxu0 %v98
    %166 = vmatprep.subr.mxu0 0.0
    %167 = vmatpush1.msra.mxu0 %v99
    %168 = vmatprep.subr.mxu0 0.0
    %169 = vmatpush1.msra.mxu0 %v100
    %170 = vmatprep.subr.mxu0 0.0
    %171 = vmatpush1.msra.mxu0 %v101
    %172 = vmatprep.subr.mxu0 0.0
    %173 = vmatpush1.msra.mxu0 %v102
    %174 = vmatprep.mubr.f32.mxu0 %v40
    %175 = vmatmul.mubr.f32.gmra.mrb[0].mxu0 %v39
    %v176 = vpop.f32.mrb[0].mxu0
    %v177 = vadd.f32 %v108, %v176
    %v178 = vpop.f32.mrb[0].mxu0
    %179 = vmatprep.mubr.f32.mxu0 %v42
    %180 = vmatmul.mubr.f32.gmra.mrb[0].mxu0 %v41
    %v181 = vpop.f32.mrb[0].mxu0
    %v182 = vadd.f32 %v108, %v181
    %v183 = vpop.f32.mrb[0].mxu0
    %184 = vmatprep.mubr.f32.mxu0 %v44
    %185 = vmatmul.mubr.f32.gmra.mrb[0].mxu0 %v43
    %v186 = vpop.f32.mrb[0].mxu0
    %v187 = vadd.f32 %v108, %v186
    %v188 = vpop.f32.mrb[0].mxu0
    %189 = vmatprep.mubr.f32.mxu0 %v46
    %190 = vmatmul.mubr.f32.gmra.mrb[0].mxu0 %v45
    %v191 = vpop.f32.mrb[0].mxu0
    %v192 = vadd.f32 %v108, %v191
    %v193 = vpop.f32.mrb[0].mxu0
    %194 = vmatprep.mubr.f32.mxu0 %v48
    %195 = vmatmul.mubr.f32.gmra.mrb[0].mxu0 %v47
    %v196 = vpop.f32.mrb[0].mxu0
    %v197 = vadd.f32 %v108, %v196
    %v198 = vpop.f32.mrb[0].mxu0
    %199 = vmatprep.mubr.f32.mxu0 %v50
    %200 = vmatmul.mubr.f32.gmra.mrb[0].mxu0 %v49
    %v201 = vpop.f32.mrb[0].mxu0
    %v202 = vadd.f32 %v108, %v201
    %v203 = vpop.f32.mrb[0].mxu0
    %204 = vmatprep.mubr.f32.mxu0 %v52
    %205 = vmatmul.mubr.f32.gmra.mrb[0].mxu0 %v51
    %v206 = vpop.f32.mrb[0].mxu0
    %v207 = vadd.f32 %v108, %v206
    %v208 = vpop.f32.mrb[0].mxu0
    %209 = vmatprep.mubr.f32.mxu0 %v54
    %210 = vmatmul.mubr.f32.gmra.mrb[0].mxu0 %v53
    %v211 = vpop.f32.mrb[0].mxu0
    %v212 = vadd.f32 %v108, %v211
    %v213 = vpop.f32.mrb[0].mxu0
    %214 = vmatprep.mubr.f32.mxu0 %v56
    %215 = vmatmul.mubr.f32.gmra.mrb[0].mxu0 %v55
    %v216 = vpop.f32.mrb[0].mxu0
    %v217 = vadd.f32 %v108, %v216
    %v218 = vpop.f32.mrb[0].mxu0
    %219 = vmatprep.mubr.f32.mxu0 %v58
    %220 = vmatmul.mubr.f32.gmra.mrb[0].mxu0 %v57
    %v221 = vpop.f32.mrb[0].mxu0
    %v222 = vadd.f32 %v108, %v221
    %v223 = vpop.f32.mrb[0].mxu0
    %224 = vmatprep.mubr.f32.mxu0 %v60
    %225 = vmatmul.mubr.f32.gmra.mrb[0].mxu0 %v59
    %v226 = vpop.f32.mrb[0].mxu0
    %v227 = vadd.f32 %v108, %v226
    %v228 = vpop.f32.mrb[0].mxu0
    %229 = vmatprep.mubr.f32.mxu0 %v62
    %230 = vmatmul.mubr.f32.gmra.mrb[0].mxu0 %v61
    %v231 = vpop.f32.mrb[0].mxu0
    %v232 = vadd.f32 %v108, %v231
    %v233 = vpop.f32.mrb[0].mxu0
    %234 = vmatprep.mubr.f32.mxu0 %v64
    %235 = vmatmul.mubr.f32.gmra.mrb[0].mxu0 %v63
    %v236 = vpop.f32.mrb[0].mxu0
    %v237 = vadd.f32 %v108, %v236
    %v238 = vpop.f32.mrb[0].mxu0
    %239 = vmatprep.mubr.f32.mxu0 %v66
    %240 = vmatmul.mubr.f32.gmra.mrb[0].mxu0 %v65
    %v241 = vpop.f32.mrb[0].mxu0
    %v242 = vadd.f32 %v108, %v241
    %v243 = vpop.f32.mrb[0].mxu0
    %244 = vmatprep.mubr.f32.mxu0 %v68
    %245 = vmatmul.mubr.f32.gmra.mrb[0].mxu0 %v67
    %v246 = vpop.f32.mrb[0].mxu0
    %v247 = vadd.f32 %v108, %v246
    %v248 = vpop.f32.mrb[0].mxu0
    %249 = vmatprep.mubr.f32.mxu0 %v70
    %250 = vmatmul.mubr.f32.gmra.mrb[0].mxu0 %v69
    %v251 = vpop.f32.mrb[0].mxu0
    %v252 = vadd.f32 %v108, %v251
    %v253 = vpop.f32.mrb[0].mxu0
    %254 = vdwg.mxu0
    %v255 = vmax.f32 %v177, 0.0
    %v256 = vmax.f32 %v182, 0.0
    %v257 = vmax.f32 %v187, 0.0
    %v258 = vmax.f32 %v192, 0.0
    %v259 = vmax.f32 %v197, 0.0
    %v260 = vmax.f32 %v202, 0.0
    %v261 = vmax.f32 %v207, 0.0
    %v262 = vmax.f32 %v212, 0.0
    %v263 = vmax.f32 %v217, 0.0
    %v264 = vmax.f32 %v222, 0.0
    %v265 = vmax.f32 %v227, 0.0
    %v266 = vmax.f32 %v232, 0.0
    %v267 = vmax.f32 %v237, 0.0
    %v268 = vmax.f32 %v242, 0.0
    %v269 = vmax.f32 %v247, 0.0
    %v270 = vmax.f32 %v252, 0.0
    %v271 = vld [vmem:[%s3] sm:$0xff]
    %v272 = vld [vmem:[%s3 + $0x8] sm:$0xff]
    %v273 = vld [vmem:[%s3 + $0x10] sm:$0xff]
    %v274 = vld [vmem:[%s3 + $0x18] sm:$0xff]
    %v275 = vld [vmem:[%s3 + $0x20] sm:$0xff]
    %v276 = vld [vmem:[%s3 + $0x28] sm:$0xff]
    %v277 = vld [vmem:[%s3 + $0x30] sm:$0xff]
    %v278 = vld [vmem:[%s3 + $0x38] sm:$0xff]
    %v279 = vld [vmem:[%s3 + $0x40] sm:$0xff]
    %v280 = vld [vmem:[%s3 + $0x48] sm:$0xff]
    %v281 = vld [vmem:[%s3 + $0x50] sm:$0xff]
    %v282 = vld [vmem:[%s3 + $0x58] sm:$0xff]
    %v283 = vld [vmem:[%s3 + $0x60] sm:$0xff]
    %v284 = vld [vmem:[%s3 + $0x68] sm:$0xff]
    %v285 = vld [vmem:[%s3 + $0x70] sm:$0xff]
    %v286 = vld [vmem:[%s3 + $0x78] sm:$0xff]
    %v287 = vld [vmem:[%s3 + $0x80] sm:$0xff]
    %v288 = vld [vmem:[%s3 + $0x88] sm:$0xff]
    %v289 = vld [vmem:[%s3 + $0x90] sm:$0xff]
    %v290 = vld [vmem:[%s3 + $0x98] sm:$0xff]
    %v291 = vld [vmem:[%s3 + $0xa0] sm:$0xff]
    %v292 = vld [vmem:[%s3 + $0xa8] sm:$0xff]
    %v293 = vld [vmem:[%s3 + $0xb0] sm:$0xff]
    %v294 = vld [vmem:[%s3 + $0xb8] sm:$0xff]
    %v295 = vld [vmem:[%s3 + $0xc0] sm:$0xff]
    %v296 = vld [vmem:[%s3 + $0xc8] sm:$0xff]
    %v297 = vld [vmem:[%s3 + $0xd0] sm:$0xff]
    %v298 = vld [vmem:[%s3 + $0xd8] sm:$0xff]
    %v299 = vld [vmem:[%s3 + $0xe0] sm:$0xff]
    %v300 = vld [vmem:[%s3 + $0xe8] sm:$0xff]
    %v301 = vld [vmem:[%s3 + $0xf0] sm:$0xff]
    %v302 = vld [vmem:[%s3 + $0xf8] sm:$0xff]
    %v303 = vld [vmem:[%s3 + $0x100] sm:$0xff]
    %v304 = vld [vmem:[%s3 + $0x108] sm:$0xff]
    %v305 = vld [vmem:[%s3 + $0x110] sm:$0xff]
    %v306 = vld [vmem:[%s3 + $0x118] sm:$0xff]
    %v307 = vld [vmem:[%s3 + $0x120] sm:$0xff]
    %v308 = vld [vmem:[%s3 + $0x128] sm:$0xff]
    %v309 = vld [vmem:[%s3 + $0x130] sm:$0xff]
    %v310 = vld [vmem:[%s3 + $0x138] sm:$0xff]
    %v311 = vld [vmem:[%s3 + $0x140] sm:$0xff]
    %v312 = vld [vmem:[%s3 + $0x148] sm:$0xff]
    %v313 = vld [vmem:[%s3 + $0x150] sm:$0xff]
    %v314 = vld [vmem:[%s3 + $0x158] sm:$0xff]
    %v315 = vld [vmem:[%s3 + $0x160] sm:$0xff]
    %v316 = vld [vmem:[%s3 + $0x168] sm:$0xff]
    %v317 = vld [vmem:[%s3 + $0x170] sm:$0xff]
    %v318 = vld [vmem:[%s3 + $0x178] sm:$0xff]
    %v319 = vld [vmem:[%s3 + $0x180] sm:$0xff]
    %v320 = vld [vmem:[%s3 + $0x188] sm:$0xff]
    %v321 = vld [vmem:[%s3 + $0x190] sm:$0xff]
    %v322 = vld [vmem:[%s3 + $0x198] sm:$0xff]
    %v323 = vld [vmem:[%s3 + $0x1a0] sm:$0xff]
    %v324 = vld [vmem:[%s3 + $0x1a8] sm:$0xff]
    %v325 = vld [vmem:[%s3 + $0x1b0] sm:$0xff]
    %v326 = vld [vmem:[%s3 + $0x1b8] sm:$0xff]
    %v327 = vld [vmem:[%s3 + $0x1c0] sm:$0xff]
    %v328 = vld [vmem:[%s3 + $0x1c8] sm:$0xff]
    %v329 = vld [vmem:[%s3 + $0x1d0] sm:$0xff]
    %v330 = vld [vmem:[%s3 + $0x1d8] sm:$0xff]
    %v331 = vld [vmem:[%s3 + $0x1e0] sm:$0xff]
    %v332 = vld [vmem:[%s3 + $0x1e8] sm:$0xff]
    %v333 = vld [vmem:[%s3 + $0x1f0] sm:$0xff]
    %v334 = vld [vmem:[%s3 + $0x1f8] sm:$0xff]
    %v335 = vld [vmem:[%s4] sm:$0x1]
    %v336 = vld [vmem:[%s5] sm:$0xff]
    %v337 = vld [vmem:[%s5 + $0x8] sm:$0xff]
    %v338 = vld [vmem:[%s5 + $0x10] sm:$0xff]
    %v339 = vld [vmem:[%s5 + $0x18] sm:$0xff]
    %v340 = vld [vmem:[%s5 + $0x20] sm:$0xff]
    %v341 = vld [vmem:[%s5 + $0x28] sm:$0xff]
    %v342 = vld [vmem:[%s5 + $0x30] sm:$0xff]
    %v343 = vld [vmem:[%s5 + $0x38] sm:$0xff]
    %v344 = vld [vmem:[%s5 + $0x40] sm:$0xff]
    %v345 = vld [vmem:[%s5 + $0x48] sm:$0xff]
    %v346 = vld [vmem:[%s5 + $0x50] sm:$0xff]
    %v347 = vld [vmem:[%s5 + $0x58] sm:$0xff]
    %v348 = vld [vmem:[%s5 + $0x60] sm:$0xff]
    %v349 = vld [vmem:[%s5 + $0x68] sm:$0xff]
    %v350 = vld [vmem:[%s5 + $0x70] sm:$0xff]
    %v351 = vld [vmem:[%s5 + $0x78] sm:$0xff]
    %v352 = vld [vmem:[%s5 + $0x80] sm:$0xff]
    %v353 = vld [vmem:[%s5 + $0x88] sm:$0xff]
    %v354 = vld [vmem:[%s5 + $0x90] sm:$0xff]
    %v355 = vld [vmem:[%s5 + $0x98] sm:$0xff]
    %v356 = vld [vmem:[%s5 + $0xa0] sm:$0xff]
    %v357 = vld [vmem:[%s5 + $0xa8] sm:$0xff]
    %v358 = vld [vmem:[%s5 + $0xb0] sm:$0xff]
    %v359 = vld [vmem:[%s5 + $0xb8] sm:$0xff]
    %v360 = vld [vmem:[%s5 + $0xc0] sm:$0xff]
    %v361 = vld [vmem:[%s5 + $0xc8] sm:$0xff]
    %v362 = vld [vmem:[%s5 + $0xd0] sm:$0xff]
    %v363 = vld [vmem:[%s5 + $0xd8] sm:$0xff]
    %v364 = vld [vmem:[%s5 + $0xe0] sm:$0xff]
    %v365 = vld [vmem:[%s5 + $0xe8] sm:$0xff]
    %v366 = vld [vmem:[%s5 + $0xf0] sm:$0xff]
    %v367 = vld [vmem:[%s5 + $0xf8] sm:$0xff]
    %v368 = vld [vmem:[%s5 + $0x100] sm:$0xff]
    %v369 = vld [vmem:[%s5 + $0x108] sm:$0xff]
    %v370 = vld [vmem:[%s5 + $0x110] sm:$0xff]
    %v371 = vld [vmem:[%s5 + $0x118] sm:$0xff]
    %v372 = vld [vmem:[%s5 + $0x120] sm:$0xff]
    %v373 = vld [vmem:[%s5 + $0x128] sm:$0xff]
    %v374 = vld [vmem:[%s5 + $0x130] sm:$0xff]
    %v375 = vld [vmem:[%s5 + $0x138] sm:$0xff]
    %v376 = vld [vmem:[%s5 + $0x140] sm:$0xff]
    %v377 = vld [vmem:[%s5 + $0x148] sm:$0xff]
    %v378 = vld [vmem:[%s5 + $0x150] sm:$0xff]
    %v379 = vld [vmem:[%s5 + $0x158] sm:$0xff]
    %v380 = vld [vmem:[%s5 + $0x160] sm:$0xff]
    %v381 = vld [vmem:[%s5 + $0x168] sm:$0xff]
    %v382 = vld [vmem:[%s5 + $0x170] sm:$0xff]
    %v383 = vld [vmem:[%s5 + $0x178] sm:$0xff]
    %v384 = vld [vmem:[%s5 + $0x180] sm:$0xff]
    %v385 = vld [vmem:[%s5 + $0x188] sm:$0xff]
    %v386 = vld [vmem:[%s5 + $0x190] sm:$0xff]
    %v387 = vld [vmem:[%s5 + $0x198] sm:$0xff]
    %v388 = vld [vmem:[%s5 + $0x1a0] sm:$0xff]
    %v389 = vld [vmem:[%s5 + $0x1a8] sm:$0xff]
    %v390 = vld [vmem:[%s5 + $0x1b0] sm:$0xff]
    %v391 = vld [vmem:[%s5 + $0x1b8] sm:$0xff]
    %v392 = vld [vmem:[%s5 + $0x1c0] sm:$0xff]
    %v393 = vld [vmem:[%s5 + $0x1c8] sm:$0xff]
    %v394 = vld [vmem:[%s5 + $0x1d0] sm:$0xff]
    %v395 = vld [vmem:[%s5 + $0x1d8] sm:$0xff]
    %v396 = vld [vmem:[%s5 + $0x1e0] sm:$0xff]
    %v397 = vld [vmem:[%s5 + $0x1e8] sm:$0xff]
    %v398 = vld [vmem:[%s5 + $0x1f0] sm:$0xff]
    %v399 = vld [vmem:[%s5 + $0x1f8] sm:$0xff]
    %v400 = vld [vmem:[%s5 + $0x200] sm:$0xff]
    %v401 = vld [vmem:[%s5 + $0x208] sm:$0xff]
    %v402 = vld [vmem:[%s5 + $0x210] sm:$0xff]
    %v403 = vld [vmem:[%s5 + $0x218] sm:$0xff]
    %v404 = vld [vmem:[%s5 + $0x220] sm:$0xff]
    %v405 = vld [vmem:[%s5 + $0x228] sm:$0xff]
    %v406 = vld [vmem:[%s5 + $0x230] sm:$0xff]
    %v407 = vld [vmem:[%s5 + $0x238] sm:$0xff]
    %v409 = vrot.slane %v255, 2
    %410 = vrot.lane.b32.xlu0 %v409, 32
    %v411 = vpop.permute.xlu0 %410
    %v413 = vrot.slane %v255, 4
    %414 = vrot.lane.b32.xlu0 %v413, 64
    %v415 = vpop.permute.xlu0 %414
    %v417 = vrot.slane %v255, 6
    %418 = vrot.lane.b32.xlu0 %v417, 96
    %v419 = vpop.permute.xlu0 %418
    %v422 = vrot.slane %v257, 2
    %423 = vrot.lane.b32.xlu0 %v422, 32
    %v424 = vpop.permute.xlu0 %423
    %v426 = vrot.slane %v257, 4
    %427 = vrot.lane.b32.xlu0 %v426, 64
    %v428 = vpop.permute.xlu0 %427
    %v430 = vrot.slane %v257, 6
    %431 = vrot.lane.b32.xlu0 %v430, 96
    %v432 = vpop.permute.xlu0 %431
    %v435 = vrot.slane %v259, 2
    %436 = vrot.lane.b32.xlu0 %v435, 32
    %v437 = vpop.permute.xlu0 %436
    %v439 = vrot.slane %v259, 4
    %440 = vrot.lane.b32.xlu0 %v439, 64
    %v441 = vpop.permute.xlu0 %440
    %v443 = vrot.slane %v259, 6
    %444 = vrot.lane.b32.xlu0 %v443, 96
    %v445 = vpop.permute.xlu0 %444
    %v448 = vrot.slane %v261, 2
    %449 = vrot.lane.b32.xlu0 %v448, 32
    %v450 = vpop.permute.xlu0 %449
    %v452 = vrot.slane %v261, 4
    %453 = vrot.lane.b32.xlu0 %v452, 64
    %v454 = vpop.permute.xlu0 %453
    %v456 = vrot.slane %v261, 6
    %457 = vrot.lane.b32.xlu0 %v456, 96
    %v458 = vpop.permute.xlu0 %457
    %vm460 = vcmask 261120
    %v461 = vsel %vm460, %v255, %v411
    %vm462 = vcmask 523264
    %v463 = vsel %vm462, %v461, %v415
    %vm464 = vcmask 785408
    %v465 = vsel %vm464, %v463, %v419
    %v466 = vsel %vm460, %v257, %v424
    %v467 = vsel %vm462, %v466, %v428
    %v468 = vsel %vm464, %v467, %v432
    %v469 = vsel %vm460, %v259, %v437
    %v470 = vsel %vm462, %v469, %v441
    %v471 = vsel %vm464, %v470, %v445
    %v472 = vsel %vm460, %v261, %v450
    %v473 = vsel %vm462, %v472, %v454
    %v474 = vsel %vm464, %v473, %v458
    %v476 = vlaneseq
    %v477 = vshrl.u32 %v476, 7
    %v478 = vsub.s32 0, %v477
    %v479 = vrot.slane %v335, %v478
    %481 = vmatprep.subr.mxu0 0.0
    %482 = vmatpush1.msra.mxu0 %v271
    %483 = vmatprep.subr.mxu0 0.0
    %484 = vmatpush1.msra.mxu0 %v272
    %485 = vmatprep.subr.mxu0 0.0
    %486 = vmatpush1.msra.mxu0 %v273
    %487 = vmatprep.subr.mxu0 0.0
    %488 = vmatpush1.msra.mxu0 %v274
    %489 = vmatprep.subr.mxu0 0.0
    %490 = vmatpush1.msra.mxu0 %v275
    %491 = vmatprep.subr.mxu0 0.0
    %492 = vmatpush1.msra.mxu0 %v276
    %493 = vmatprep.subr.mxu0 0.0
    %494 = vmatpush1.msra.mxu0 %v277
    %495 = vmatprep.subr.mxu0 0.0
    %496 = vmatpush1.msra.mxu0 %v278
    %497 = vmatprep.subr.mxu0 0.0
    %498 = vmatpush1.msra.mxu0 %v279
    %499 = vmatprep.subr.mxu0 0.0
    %500 = vmatpush1.msra.mxu0 %v280
    %501 = vmatprep.subr.mxu0 0.0
    %502 = vmatpush1.msra.mxu0 %v281
    %503 = vmatprep.subr.mxu0 0.0
    %504 = vmatpush1.msra.mxu0 %v282
    %505 = vmatprep.subr.mxu0 0.0
    %506 = vmatpush1.msra.mxu0 %v283
    %507 = vmatprep.subr.mxu0 0.0
    %508 = vmatpush1.msra.mxu0 %v284
    %509 = vmatprep.subr.mxu0 0.0
    %510 = vmatpush1.msra.mxu0 %v285
    %511 = vmatprep.subr.mxu0 0.0
    %512 = vmatpush1.msra.mxu0 %v286
    %513 = vmatprep.subr.mxu0 0.0
    %514 = vmatpush1.msra.mxu0 %v287
    %515 = vmatprep.subr.mxu0 0.0
    %516 = vmatpush1.msra.mxu0 %v288
    %517 = vmatprep.subr.mxu0 0.0
    %518 = vmatpush1.msra.mxu0 %v289
    %519 = vmatprep.subr.mxu0 0.0
    %520 = vmatpush1.msra.mxu0 %v290
    %521 = vmatprep.subr.mxu0 0.0
    %522 = vmatpush1.msra.mxu0 %v291
    %523 = vmatprep.subr.mxu0 0.0
    %524 = vmatpush1.msra.mxu0 %v292
    %525 = vmatprep.subr.mxu0 0.0
    %526 = vmatpush1.msra.mxu0 %v293
    %527 = vmatprep.subr.mxu0 0.0
    %528 = vmatpush1.msra.mxu0 %v294
    %529 = vmatprep.subr.mxu0 0.0
    %530 = vmatpush1.msra.mxu0 %v295
    %531 = vmatprep.subr.mxu0 0.0
    %532 = vmatpush1.msra.mxu0 %v296
    %533 = vmatprep.subr.mxu0 0.0
    %534 = vmatpush1.msra.mxu0 %v297
    %535 = vmatprep.subr.mxu0 0.0
    %536 = vmatpush1.msra.mxu0 %v298
    %537 = vmatprep.subr.mxu0 0.0
    %538 = vmatpush1.msra.mxu0 %v299
    %539 = vmatprep.subr.mxu0 0.0
    %540 = vmatpush1.msra.mxu0 %v300
    %541 = vmatprep.subr.mxu0 0.0
    %542 = vmatpush1.msra.mxu0 %v301
    %543 = vmatprep.subr.mxu0 0.0
    %544 = vmatpush1.msra.mxu0 %v302
    %545 = vmatprep.mubr.f32.mxu0 %v468
    %546 = vmatmul.mubr.f32.gmra.mrb[0].mxu0 %v465
    %v547 = vpop.f32.mrb[0].mxu0
    %v548 = vadd.f32 %v479, %v547
    %v549 = vpop.f32.mrb[0].mxu0
    %550 = vdwg.mxu0
    %551 = vmatprep.subr.mxu0 0.0
    %552 = vmatpush1.msra.mxu0 %v303
    %553 = vmatprep.subr.mxu0 0.0
    %554 = vmatpush1.msra.mxu0 %v304
    %555 = vmatprep.subr.mxu0 0.0
    %556 = vmatpush1.msra.mxu0 %v305
    %557 = vmatprep.subr.mxu0 0.0
    %558 = vmatpush1.msra.mxu0 %v306
    %559 = vmatprep.subr.mxu0 0.0
    %560 = vmatpush1.msra.mxu0 %v307
    %561 = vmatprep.subr.mxu0 0.0
    %562 = vmatpush1.msra.mxu0 %v308
    %563 = vmatprep.subr.mxu0 0.0
    %564 = vmatpush1.msra.mxu0 %v309
    %565 = vmatprep.subr.mxu0 0.0
    %566 = vmatpush1.msra.mxu0 %v310
    %567 = vmatprep.subr.mxu0 0.0
    %568 = vmatpush1.msra.mxu0 %v311
    %569 = vmatprep.subr.mxu0 0.0
    %570 = vmatpush1.msra.mxu0 %v312
    %571 = vmatprep.subr.mxu0 0.0
    %572 = vmatpush1.msra.mxu0 %v313
    %573 = vmatprep.subr.mxu0 0.0
    %574 = vmatpush1.msra.mxu0 %v314
    %575 = vmatprep.subr.mxu0 0.0
    %576 = vmatpush1.msra.mxu0 %v315
    %577 = vmatprep.subr.mxu0 0.0
    %578 = vmatpush1.msra.mxu0 %v316
    %579 = vmatprep.subr.mxu0 0.0
    %580 = vmatpush1.msra.mxu0 %v317
    %581 = vmatprep.subr.mxu0 0.0
    %582 = vmatpush1.msra.mxu0 %v318
    %583 = vmatprep.subr.mxu0 0.0
    %584 = vmatpush1.msra.mxu0 %v319
    %585 = vmatprep.subr.mxu0 0.0
    %586 = vmatpush1.msra.mxu0 %v320
    %587 = vmatprep.subr.mxu0 0.0
    %588 = vmatpush1.msra.mxu0 %v321
    %589 = vmatprep.subr.mxu0 0.0
    %590 = vmatpush1.msra.mxu0 %v322
    %591 = vmatprep.subr.mxu0 0.0
    %592 = vmatpush1.msra.mxu0 %v323
    %593 = vmatprep.subr.mxu0 0.0
    %594 = vmatpush1.msra.mxu0 %v324
    %595 = vmatprep.subr.mxu0 0.0
    %596 = vmatpush1.msra.mxu0 %v325
    %597 = vmatprep.subr.mxu0 0.0
    %598 = vmatpush1.msra.mxu0 %v326
    %599 = vmatprep.subr.mxu0 0.0
    %600 = vmatpush1.msra.mxu0 %v327
    %601 = vmatprep.subr.mxu0 0.0
    %602 = vmatpush1.msra.mxu0 %v328
    %603 = vmatprep.subr.mxu0 0.0
    %604 = vmatpush1.msra.mxu0 %v329
    %605 = vmatprep.subr.mxu0 0.0
    %606 = vmatpush1.msra.mxu0 %v330
    %607 = vmatprep.subr.mxu0 0.0
    %608 = vmatpush1.msra.mxu0 %v331
    %609 = vmatprep.subr.mxu0 0.0
    %610 = vmatpush1.msra.mxu0 %v332
    %611 = vmatprep.subr.mxu0 0.0
    %612 = vmatpush1.msra.mxu0 %v333
    %613 = vmatprep.subr.mxu0 0.0
    %614 = vmatpush1.msra.mxu0 %v334
    %615 = vmatprep.mubr.f32.mxu0 %v474
    %616 = vmatmul.mubr.f32.gmra.mrb[0].mxu0 %v471
    %v617 = vpop.f32.mrb[0].mxu0
    %v618 = vadd.f32 %v548, %v617
    %v619 = vpop.f32.mrb[0].mxu0
    %620 = vdwg.mxu0
    %v621 = vmax.f32 %v618, 0.0
    %v623 = vrot.slane %v256, 4
    %624 = vrot.lane.b32.xlu0 %v623, 64
    %v625 = vpop.permute.xlu0 %624
    %v627 = vrot.slane %v256, 6
    %628 = vrot.lane.b32.xlu0 %v627, 96
    %v629 = vpop.permute.xlu0 %628
    %v632 = vrot.slane %v258, 4
    %633 = vrot.lane.b32.xlu0 %v632, 64
    %v634 = vpop.permute.xlu0 %633
    %v636 = vrot.slane %v258, 6
    %637 = vrot.lane.b32.xlu0 %v636, 96
    %v638 = vpop.permute.xlu0 %637
    %v641 = vrot.slane %v260, 4
    %642 = vrot.lane.b32.xlu0 %v641, 64
    %v643 = vpop.permute.xlu0 %642
    %v645 = vrot.slane %v260, 6
    %646 = vrot.lane.b32.xlu0 %v645, 96
    %v647 = vpop.permute.xlu0 %646
    %v650 = vrot.slane %v262, 4
    %651 = vrot.lane.b32.xlu0 %v650, 64
    %v652 = vpop.permute.xlu0 %651
    %v654 = vrot.slane %v262, 6
    %655 = vrot.lane.b32.xlu0 %v654, 96
    %v656 = vpop.permute.xlu0 %655
    %v658 = vsel %vm462, %v461, %v625
    %v659 = vsel %vm464, %v658, %v629
    %v660 = vsel %vm462, %v466, %v634
    %v661 = vsel %vm464, %v660, %v638
    %v662 = vsel %vm462, %v469, %v643
    %v663 = vsel %vm464, %v662, %v647
    %v664 = vsel %vm462, %v472, %v652
    %v665 = vsel %vm464, %v664, %v656
    %v670 = vrot.slane %v659, 4
    %v671 = vrot.slane %v661, 4
    %v672 = vrot.slane %v663, 4
    %v673 = vrot.slane %v665, 4
    %678 = vmatprep.subr.mxu0 0.0
    %679 = vmatpush1.msra.mxu0 %v271
    %680 = vmatprep.subr.mxu0 0.0
    %681 = vmatpush1.msra.mxu0 %v272
    %682 = vmatprep.subr.mxu0 0.0
    %683 = vmatpush1.msra.mxu0 %v273
    %684 = vmatprep.subr.mxu0 0.0
    %685 = vmatpush1.msra.mxu0 %v274
    %686 = vmatprep.subr.mxu0 0.0
    %687 = vmatpush1.msra.mxu0 %v275
    %688 = vmatprep.subr.mxu0 0.0
    %689 = vmatpush1.msra.mxu0 %v276
    %690 = vmatprep.subr.mxu0 0.0
    %691 = vmatpush1.msra.mxu0 %v277
    %692 = vmatprep.subr.mxu0 0.0
    %693 = vmatpush1.msra.mxu0 %v278
    %694 = vmatprep.subr.mxu0 0.0
    %695 = vmatpush1.msra.mxu0 %v279
    %696 = vmatprep.subr.mxu0 0.0
    %697 = vmatpush1.msra.mxu0 %v280
    %698 = vmatprep.subr.mxu0 0.0
    %699 = vmatpush1.msra.mxu0 %v281
    %700 = vmatprep.subr.mxu0 0.0
    %701 = vmatpush1.msra.mxu0 %v282
    %702 = vmatprep.subr.mxu0 0.0
    %703 = vmatpush1.msra.mxu0 %v283
    %704 = vmatprep.subr.mxu0 0.0
    %705 = vmatpush1.msra.mxu0 %v284
    %706 = vmatprep.subr.mxu0 0.0
    %707 = vmatpush1.msra.mxu0 %v285
    %708 = vmatprep.subr.mxu0 0.0
    %709 = vmatpush1.msra.mxu0 %v286
    %710 = vmatprep.subr.mxu0 0.0
    %711 = vmatpush1.msra.mxu0 %v287
    %712 = vmatprep.subr.mxu0 0.0
    %713 = vmatpush1.msra.mxu0 %v288
    %714 = vmatprep.subr.mxu0 0.0
    %715 = vmatpush1.msra.mxu0 %v289
    %716 = vmatprep.subr.mxu0 0.0
    %717 = vmatpush1.msra.mxu0 %v290
    %718 = vmatprep.subr.mxu0 0.0
    %719 = vmatpush1.msra.mxu0 %v291
    %720 = vmatprep.subr.mxu0 0.0
    %721 = vmatpush1.msra.mxu0 %v292
    %722 = vmatprep.subr.mxu0 0.0
    %723 = vmatpush1.msra.mxu0 %v293
    %724 = vmatprep.subr.mxu0 0.0
    %725 = vmatpush1.msra.mxu0 %v294
    %726 = vmatprep.subr.mxu0 0.0
    %727 = vmatpush1.msra.mxu0 %v295
    %728 = vmatprep.subr.mxu0 0.0
    %729 = vmatpush1.msra.mxu0 %v296
    %730 = vmatprep.subr.mxu0 0.0
    %731 = vmatpush1.msra.mxu0 %v297
    %732 = vmatprep.subr.mxu0 0.0
    %733 = vmatpush1.msra.mxu0 %v298
    %734 = vmatprep.subr.mxu0 0.0
    %735 = vmatpush1.msra.mxu0 %v299
    %736 = vmatprep.subr.mxu0 0.0
    %737 = vmatpush1.msra.mxu0 %v300
    %738 = vmatprep.subr.mxu0 0.0
    %739 = vmatpush1.msra.mxu0 %v301
    %740 = vmatprep.subr.mxu0 0.0
    %741 = vmatpush1.msra.mxu0 %v302
    %742 = vmatprep.mubr.f32.mxu0 %v671
    %743 = vmatmul.mubr.f32.gmra.mrb[0].mxu0 %v670
    %v744 = vpop.f32.mrb[0].mxu0
    %v745 = vadd.f32 %v479, %v744
    %v746 = vpop.f32.mrb[0].mxu0
    %747 = vdwg.mxu0
    %748 = vmatprep.subr.mxu0 0.0
    %749 = vmatpush1.msra.mxu0 %v303
    %750 = vmatprep.subr.mxu0 0.0
    %751 = vmatpush1.msra.mxu0 %v304
    %752 = vmatprep.subr.mxu0 0.0
    %753 = vmatpush1.msra.mxu0 %v305
    %754 = vmatprep.subr.mxu0 0.0
    %755 = vmatpush1.msra.mxu0 %v306
    %756 = vmatprep.subr.mxu0 0.0
    %757 = vmatpush1.msra.mxu0 %v307
    %758 = vmatprep.subr.mxu0 0.0
    %759 = vmatpush1.msra.mxu0 %v308
    %760 = vmatprep.subr.mxu0 0.0
    %761 = vmatpush1.msra.mxu0 %v309
    %762 = vmatprep.subr.mxu0 0.0
    %763 = vmatpush1.msra.mxu0 %v310
    %764 = vmatprep.subr.mxu0 0.0
    %765 = vmatpush1.msra.mxu0 %v311
    %766 = vmatprep.subr.mxu0 0.0
    %767 = vmatpush1.msra.mxu0 %v312
    %768 = vmatprep.subr.mxu0 0.0
    %769 = vmatpush1.msra.mxu0 %v313
    %770 = vmatprep.subr.mxu0 0.0
    %771 = vmatpush1.msra.mxu0 %v314
    %772 = vmatprep.subr.mxu0 0.0
    %773 = vmatpush1.msra.mxu0 %v315
    %774 = vmatprep.subr.mxu0 0.0
    %775 = vmatpush1.msra.mxu0 %v316
    %776 = vmatprep.subr.mxu0 0.0
    %777 = vmatpush1.msra.mxu0 %v317
    %778 = vmatprep.subr.mxu0 0.0
    %779 = vmatpush1.msra.mxu0 %v318
    %780 = vmatprep.subr.mxu0 0.0
    %781 = vmatpush1.msra.mxu0 %v319
    %782 = vmatprep.subr.mxu0 0.0
    %783 = vmatpush1.msra.mxu0 %v320
    %784 = vmatprep.subr.mxu0 0.0
    %785 = vmatpush1.msra.mxu0 %v321
    %786 = vmatprep.subr.mxu0 0.0
    %787 = vmatpush1.msra.mxu0 %v322
    %788 = vmatprep.subr.mxu0 0.0
    %789 = vmatpush1.msra.mxu0 %v323
    %790 = vmatprep.subr.mxu0 0.0
    %791 = vmatpush1.msra.mxu0 %v324
    %792 = vmatprep.subr.mxu0 0.0
    %793 = vmatpush1.msra.mxu0 %v325
    %794 = vmatprep.subr.mxu0 0.0
    %795 = vmatpush1.msra.mxu0 %v326
    %796 = vmatprep.subr.mxu0 0.0
    %797 = vmatpush1.msra.mxu0 %v327
    %798 = vmatprep.subr.mxu0 0.0
    %799 = vmatpush1.msra.mxu0 %v328
    %800 = vmatprep.subr.mxu0 0.0
    %801 = vmatpush1.msra.mxu0 %v329
    %802 = vmatprep.subr.mxu0 0.0
    %803 = vmatpush1.msra.mxu0 %v330
    %804 = vmatprep.subr.mxu0 0.0
    %805 = vmatpush1.msra.mxu0 %v331
    %806 = vmatprep.subr.mxu0 0.0
    %807 = vmatpush1.msra.mxu0 %v332
    %808 = vmatprep.subr.mxu0 0.0
    %809 = vmatpush1.msra.mxu0 %v333
    %810 = vmatprep.subr.mxu0 0.0
    %811 = vmatpush1.msra.mxu0 %v334
    %812 = vmatprep.mubr.f32.mxu0 %v673
    %813 = vmatmul.mubr.f32.gmra.mrb[0].mxu0 %v672
    %v814 = vpop.f32.mrb[0].mxu0
    %v815 = vadd.f32 %v745, %v814
    %v816 = vpop.f32.mrb[0].mxu0
    %817 = vdwg.mxu0
    %v818 = vmax.f32 %v815, 0.0
    %v820 = vsel %vm462, %v818, 0
    %822 = vmatprep.subr.mxu0 0.0
    %823 = vmatpush1.msra.mxu0 %v344
    %824 = vmatprep.subr.mxu0 0.0
    %825 = vmatpush1.msra.mxu0 %v345
    %826 = vmatprep.subr.mxu0 0.0
    %827 = vmatpush1.msra.mxu0 %v346
    %828 = vmatprep.subr.mxu0 0.0
    %829 = vmatpush1.msra.mxu0 %v347
    %830 = vmatprep.subr.mxu0 0.0
    %831 = vmatpush1.msra.mxu0 %v348
    %832 = vmatprep.subr.mxu0 0.0
    %833 = vmatpush1.msra.mxu0 %v349
    %834 = vmatprep.subr.mxu0 0.0
    %835 = vmatpush1.msra.mxu0 %v350
    %836 = vmatprep.subr.mxu0 0.0
    %837 = vmatpush1.msra.mxu0 %v351
    %838 = vmatprep.subr.mxu0 0.0
    %839 = vmatpush1.msra.mxu0 0.0
    %840 = vmatprep.subr.mxu0 0.0
    %841 = vmatpush1.msra.mxu0 0.0
    %842 = vmatprep.subr.mxu0 0.0
    %843 = vmatpush1.msra.mxu0 0.0
    %844 = vmatprep.subr.mxu0 0.0
    %845 = vmatpush1.msra.mxu0 0.0
    %846 = vmatprep.subr.mxu0 0.0
    %847 = vmatpush1.msra.mxu0 0.0
    %848 = vmatprep.subr.mxu0 0.0
    %849 = vmatpush1.msra.mxu0 0.0
    %850 = vmatprep.subr.mxu0 0.0
    %851 = vmatpush1.msra.mxu0 0.0
    %852 = vmatprep.subr.mxu0 0.0
    %853 = vmatpush1.msra.mxu0 0.0
    %854 = vmatprep.subr.mxu0 0.0
    %855 = vmatpush1.msra.mxu0 0.0
    %856 = vmatprep.subr.mxu0 0.0
    %857 = vmatpush1.msra.mxu0 0.0
    %858 = vmatprep.subr.mxu0 0.0
    %859 = vmatpush1.msra.mxu0 0.0
    %860 = vmatprep.subr.mxu0 0.0
    %861 = vmatpush1.msra.mxu0 0.0
    %862 = vmatprep.subr.mxu0 0.0
    %863 = vmatpush1.msra.mxu0 0.0
    %864 = vmatprep.subr.mxu0 0.0
    %865 = vmatpush1.msra.mxu0 0.0
    %866 = vmatprep.subr.mxu0 0.0
    %867 = vmatpush1.msra.mxu0 0.0
    %868 = vmatprep.subr.mxu0 0.0
    %869 = vmatpush1.msra.mxu0 0.0
    %870 = vmatprep.subr.mxu0 0.0
    %871 = vmatpush1.msra.mxu0 0.0
    %872 = vmatprep.subr.mxu0 0.0
    %873 = vmatpush1.msra.mxu0 0.0
    %874 = vmatprep.subr.mxu0 0.0
    %875 = vmatpush1.msra.mxu0 0.0
    %876 = vmatprep.subr.mxu0 0.0
    %877 = vmatpush1.msra.mxu0 0.0
    %878 = vmatprep.subr.mxu0 0.0
    %879 = vmatpush1.msra.mxu0 0.0
    %880 = vmatprep.subr.mxu0 0.0
    %881 = vmatpush1.msra.mxu0 0.0
    %882 = vmatprep.subr.mxu0 0.0
    %883 = vmatpush1.msra.mxu0 0.0
    %884 = vmatprep.subr.mxu0 0.0
    %885 = vmatpush1.msra.mxu0 0.0
    %886 = vmatprep.mubr.f32.mxu0 0.0
    %887 = vmatmul.mubr.f32.gmra.mrb[0].mxu0 %v820
    %v888 = vpop.f32.mrb[0].mxu0
    %v889 = vadd.f32 0.0, %v888
    %v890 = vpop.f32.mrb[0].mxu0
    %891 = vdwg.mxu0
    %v893 = vsel %vm462, %v621, 0
    %895 = vmatprep.subr.mxu0 0.0
    %896 = vmatpush1.msra.mxu0 %v336
    %897 = vmatprep.subr.mxu0 0.0
    %898 = vmatpush1.msra.mxu0 %v337
    %899 = vmatprep.subr.mxu0 0.0
    %900 = vmatpush1.msra.mxu0 %v338
    %901 = vmatprep.subr.mxu0 0.0
    %902 = vmatpush1.msra.mxu0 %v339
    %903 = vmatprep.subr.mxu0 0.0
    %904 = vmatpush1.msra.mxu0 %v340
    %905 = vmatprep.subr.mxu0 0.0
    %906 = vmatpush1.msra.mxu0 %v341
    %907 = vmatprep.subr.mxu0 0.0
    %908 = vmatpush1.msra.mxu0 %v342
    %909 = vmatprep.subr.mxu0 0.0
    %910 = vmatpush1.msra.mxu0 %v343
    %911 = vmatprep.subr.mxu0 0.0
    %912 = vmatpush1.msra.mxu0 0.0
    %913 = vmatprep.subr.mxu0 0.0
    %914 = vmatpush1.msra.mxu0 0.0
    %915 = vmatprep.subr.mxu0 0.0
    %916 = vmatpush1.msra.mxu0 0.0
    %917 = vmatprep.subr.mxu0 0.0
    %918 = vmatpush1.msra.mxu0 0.0
    %919 = vmatprep.subr.mxu0 0.0
    %920 = vmatpush1.msra.mxu0 0.0
    %921 = vmatprep.subr.mxu0 0.0
    %922 = vmatpush1.msra.mxu0 0.0
    %923 = vmatprep.subr.mxu0 0.0
    %924 = vmatpush1.msra.mxu0 0.0
    %925 = vmatprep.subr.mxu0 0.0
    %926 = vmatpush1.msra.mxu0 0.0
    %927 = vmatprep.subr.mxu0 0.0
    %928 = vmatpush1.msra.mxu0 0.0
    %929 = vmatprep.subr.mxu0 0.0
    %930 = vmatpush1.msra.mxu0 0.0
    %931 = vmatprep.subr.mxu0 0.0
    %932 = vmatpush1.msra.mxu0 0.0
    %933 = vmatprep.subr.mxu0 0.0
    %934 = vmatpush1.msra.mxu0 0.0
    %935 = vmatprep.subr.mxu0 0.0
    %936 = vmatpush1.msra.mxu0 0.0
    %937 = vmatprep.subr.mxu0 0.0
    %938 = vmatpush1.msra.mxu0 0.0
    %939 = vmatprep.subr.mxu0 0.0
    %940 = vmatpush1.msra.mxu0 0.0
    %941 = vmatprep.subr.mxu0 0.0
    %942 = vmatpush1.msra.mxu0 0.0
    %943 = vmatprep.subr.mxu0 0.0
    %944 = vmatpush1.msra.mxu0 0.0
    %945 = vmatprep.subr.mxu0 0.0
    %946 = vmatpush1.msra.mxu0 0.0
    %947 = vmatprep.subr.mxu0 0.0
    %948 = vmatpush1.msra.mxu0 0.0
    %949 = vmatprep.subr.mxu0 0.0
    %950 = vmatpush1.msra.mxu0 0.0
    %951 = vmatprep.subr.mxu0 0.0
    %952 = vmatpush1.msra.mxu0 0.0
    %953 = vmatprep.subr.mxu0 0.0
    %954 = vmatpush1.msra.mxu0 0.0
    %955 = vmatprep.subr.mxu0 0.0
    %956 = vmatpush1.msra.mxu0 0.0
    %957 = vmatprep.subr.mxu0 0.0
    %958 = vmatpush1.msra.mxu0 0.0
    %959 = vmatprep.mubr.f32.mxu0 0.0
    %960 = vmatmul.mubr.f32.gmra.mrb[0].mxu0 %v893
    %v961 = vpop.f32.mrb[0].mxu0
    %v962 = vadd.f32 %v889, %v961
    %v963 = vpop.f32.mrb[0].mxu0
    %964 = vdwg.mxu0
    %v965 = vrot.slane %v256, 2
    %966 = vrot.lane.b32.xlu0 %v965, 32
    %v967 = vpop.permute.xlu0 %966
    %v969 = vrot.slane %v258, 2
    %970 = vrot.lane.b32.xlu0 %v969, 32
    %v971 = vpop.permute.xlu0 %970
    %v973 = vrot.slane %v260, 2
    %974 = vrot.lane.b32.xlu0 %v973, 32
    %v975 = vpop.permute.xlu0 %974
    %v977 = vrot.slane %v262, 2
    %978 = vrot.lane.b32.xlu0 %v977, 32
    %v979 = vpop.permute.xlu0 %978
    %v981 = vsel %vm460, %v256, %v967
    %v982 = vsel %vm462, %v981, %v625
    %v983 = vsel %vm464, %v982, %v629
    %v984 = vsel %vm460, %v258, %v971
    %v985 = vsel %vm462, %v984, %v634
    %v986 = vsel %vm464, %v985, %v638
    %v987 = vsel %vm460, %v260, %v975
    %v988 = vsel %vm462, %v987, %v643
    %v989 = vsel %vm464, %v988, %v647
    %v990 = vsel %vm460, %v262, %v979
    %v991 = vsel %vm462, %v990, %v652
    %v992 = vsel %vm464, %v991, %v656
    %993 = vmatprep.subr.mxu0 0.0
    %994 = vmatpush1.msra.mxu0 %v271
    %995 = vmatprep.subr.mxu0 0.0
    %996 = vmatpush1.msra.mxu0 %v272
    %997 = vmatprep.subr.mxu0 0.0
    %998 = vmatpush1.msra.mxu0 %v273
    %999 = vmatprep.subr.mxu0 0.0
    %1000 = vmatpush1.msra.mxu0 %v274
    %1001 = vmatprep.subr.mxu0 0.0
    %1002 = vmatpush1.msra.mxu0 %v275
    %1003 = vmatprep.subr.mxu0 0.0
    %1004 = vmatpush1.msra.mxu0 %v276
    %1005 = vmatprep.subr.mxu0 0.0
    %1006 = vmatpush1.msra.mxu0 %v277
    %1007 = vmatprep.subr.mxu0 0.0
    %1008 = vmatpush1.msra.mxu0 %v278
    %1009 = vmatprep.subr.mxu0 0.0
    %1010 = vmatpush1.msra.mxu0 %v279
    %1011 = vmatprep.subr.mxu0 0.0
    %1012 = vmatpush1.msra.mxu0 %v280
    %1013 = vmatprep.subr.mxu0 0.0
    %1014 = vmatpush1.msra.mxu0 %v281
    %1015 = vmatprep.subr.mxu0 0.0
    %1016 = vmatpush1.msra.mxu0 %v282
    %1017 = vmatprep.subr.mxu0 0.0
    %1018 = vmatpush1.msra.mxu0 %v283
    %1019 = vmatprep.subr.mxu0 0.0
    %1020 = vmatpush1.msra.mxu0 %v284
    %1021 = vmatprep.subr.mxu0 0.0
    %1022 = vmatpush1.msra.mxu0 %v285
    %1023 = vmatprep.subr.mxu0 0.0
    %1024 = vmatpush1.msra.mxu0 %v286
    %1025 = vmatprep.subr.mxu0 0.0
    %1026 = vmatpush1.msra.mxu0 %v287
    %1027 = vmatprep.subr.mxu0 0.0
    %1028 = vmatpush1.msra.mxu0 %v288
    %1029 = vmatprep.subr.mxu0 0.0
    %1030 = vmatpush1.msra.mxu0 %v289
    %1031 = vmatprep.subr.mxu0 0.0
    %1032 = vmatpush1.msra.mxu0 %v290
    %1033 = vmatprep.subr.mxu0 0.0
    %1034 = vmatpush1.msra.mxu0 %v291
    %1035 = vmatprep.subr.mxu0 0.0
    %1036 = vmatpush1.msra.mxu0 %v292
    %1037 = vmatprep.subr.mxu0 0.0
    %1038 = vmatpush1.msra.mxu0 %v293
    %1039 = vmatprep.subr.mxu0 0.0
    %1040 = vmatpush1.msra.mxu0 %v294
    %1041 = vmatprep.subr.mxu0 0.0
    %1042 = vmatpush1.msra.mxu0 %v295
    %1043 = vmatprep.subr.mxu0 0.0
    %1044 = vmatpush1.msra.mxu0 %v296
    %1045 = vmatprep.subr.mxu0 0.0
    %1046 = vmatpush1.msra.mxu0 %v297
    %1047 = vmatprep.subr.mxu0 0.0
    %1048 = vmatpush1.msra.mxu0 %v298
    %1049 = vmatprep.subr.mxu0 0.0
    %1050 = vmatpush1.msra.mxu0 %v299
    %1051 = vmatprep.subr.mxu0 0.0
    %1052 = vmatpush1.msra.mxu0 %v300
    %1053 = vmatprep.subr.mxu0 0.0
    %1054 = vmatpush1.msra.mxu0 %v301
    %1055 = vmatprep.subr.mxu0 0.0
    %1056 = vmatpush1.msra.mxu0 %v302
    %1057 = vmatprep.mubr.f32.mxu0 %v986
    %1058 = vmatmul.mubr.f32.gmra.mrb[0].mxu0 %v983
    %v1059 = vpop.f32.mrb[0].mxu0
    %v1060 = vadd.f32 %v479, %v1059
    %v1061 = vpop.f32.mrb[0].mxu0
    %1062 = vdwg.mxu0
    %1063 = vmatprep.subr.mxu0 0.0
    %1064 = vmatpush1.msra.mxu0 %v303
    %1065 = vmatprep.subr.mxu0 0.0
    %1066 = vmatpush1.msra.mxu0 %v304
    %1067 = vmatprep.subr.mxu0 0.0
    %1068 = vmatpush1.msra.mxu0 %v305
    %1069 = vmatprep.subr.mxu0 0.0
    %1070 = vmatpush1.msra.mxu0 %v306
    %1071 = vmatprep.subr.mxu0 0.0
    %1072 = vmatpush1.msra.mxu0 %v307
    %1073 = vmatprep.subr.mxu0 0.0
    %1074 = vmatpush1.msra.mxu0 %v308
    %1075 = vmatprep.subr.mxu0 0.0
    %1076 = vmatpush1.msra.mxu0 %v309
    %1077 = vmatprep.subr.mxu0 0.0
    %1078 = vmatpush1.msra.mxu0 %v310
    %1079 = vmatprep.subr.mxu0 0.0
    %1080 = vmatpush1.msra.mxu0 %v311
    %1081 = vmatprep.subr.mxu0 0.0
    %1082 = vmatpush1.msra.mxu0 %v312
    %1083 = vmatprep.subr.mxu0 0.0
    %1084 = vmatpush1.msra.mxu0 %v313
    %1085 = vmatprep.subr.mxu0 0.0
    %1086 = vmatpush1.msra.mxu0 %v314
    %1087 = vmatprep.subr.mxu0 0.0
    %1088 = vmatpush1.msra.mxu0 %v315
    %1089 = vmatprep.subr.mxu0 0.0
    %1090 = vmatpush1.msra.mxu0 %v316
    %1091 = vmatprep.subr.mxu0 0.0
    %1092 = vmatpush1.msra.mxu0 %v317
    %1093 = vmatprep.subr.mxu0 0.0
    %1094 = vmatpush1.msra.mxu0 %v318
    %1095 = vmatprep.subr.mxu0 0.0
    %1096 = vmatpush1.msra.mxu0 %v319
    %1097 = vmatprep.subr.mxu0 0.0
    %1098 = vmatpush1.msra.mxu0 %v320
    %1099 = vmatprep.subr.mxu0 0.0
    %1100 = vmatpush1.msra.mxu0 %v321
    %1101 = vmatprep.subr.mxu0 0.0
    %1102 = vmatpush1.msra.mxu0 %v322
    %1103 = vmatprep.subr.mxu0 0.0
    %1104 = vmatpush1.msra.mxu0 %v323
    %1105 = vmatprep.subr.mxu0 0.0
    %1106 = vmatpush1.msra.mxu0 %v324
    %1107 = vmatprep.subr.mxu0 0.0
    %1108 = vmatpush1.msra.mxu0 %v325
    %1109 = vmatprep.subr.mxu0 0.0
    %1110 = vmatpush1.msra.mxu0 %v326
    %1111 = vmatprep.subr.mxu0 0.0
    %1112 = vmatpush1.msra.mxu0 %v327
    %1113 = vmatprep.subr.mxu0 0.0
    %1114 = vmatpush1.msra.mxu0 %v328
    %1115 = vmatprep.subr.mxu0 0.0
    %1116 = vmatpush1.msra.mxu0 %v329
    %1117 = vmatprep.subr.mxu0 0.0
    %1118 = vmatpush1.msra.mxu0 %v330
    %1119 = vmatprep.subr.mxu0 0.0
    %1120 = vmatpush1.msra.mxu0 %v331
    %1121 = vmatprep.subr.mxu0 0.0
    %1122 = vmatpush1.msra.mxu0 %v332
    %1123 = vmatprep.subr.mxu0 0.0
    %1124 = vmatpush1.msra.mxu0 %v333
    %1125 = vmatprep.subr.mxu0 0.0
    %1126 = vmatpush1.msra.mxu0 %v334
    %1127 = vmatprep.mubr.f32.mxu0 %v992
    %1128 = vmatmul.mubr.f32.gmra.mrb[0].mxu0 %v989
    %v1129 = vpop.f32.mrb[0].mxu0
    %v1130 = vadd.f32 %v1060, %v1129
    %v1131 = vpop.f32.mrb[0].mxu0
    %1132 = vdwg.mxu0
    %v1133 = vmax.f32 %v1130, 0.0
    %v1135 = vsel %vm462, %v1133, 0
    %1137 = vmatprep.subr.mxu0 0.0
    %1138 = vmatpush1.msra.mxu0 %v352
    %1139 = vmatprep.subr.mxu0 0.0
    %1140 = vmatpush1.msra.mxu0 %v353
    %1141 = vmatprep.subr.mxu0 0.0
    %1142 = vmatpush1.msra.mxu0 %v354
    %1143 = vmatprep.subr.mxu0 0.0
    %1144 = vmatpush1.msra.mxu0 %v355
    %1145 = vmatprep.subr.mxu0 0.0
    %1146 = vmatpush1.msra.mxu0 %v356
    %1147 = vmatprep.subr.mxu0 0.0
    %1148 = vmatpush1.msra.mxu0 %v357
    %1149 = vmatprep.subr.mxu0 0.0
    %1150 = vmatpush1.msra.mxu0 %v358
    %1151 = vmatprep.subr.mxu0 0.0
    %1152 = vmatpush1.msra.mxu0 %v359
    %1153 = vmatprep.subr.mxu0 0.0
    %1154 = vmatpush1.msra.mxu0 0.0
    %1155 = vmatprep.subr.mxu0 0.0
    %1156 = vmatpush1.msra.mxu0 0.0
    %1157 = vmatprep.subr.mxu0 0.0
    %1158 = vmatpush1.msra.mxu0 0.0
    %1159 = vmatprep.subr.mxu0 0.0
    %1160 = vmatpush1.msra.mxu0 0.0
    %1161 = vmatprep.subr.mxu0 0.0
    %1162 = vmatpush1.msra.mxu0 0.0
    %1163 = vmatprep.subr.mxu0 0.0
    %1164 = vmatpush1.msra.mxu0 0.0
    %1165 = vmatprep.subr.mxu0 0.0
    %1166 = vmatpush1.msra.mxu0 0.0
    %1167 = vmatprep.subr.mxu0 0.0
    %1168 = vmatpush1.msra.mxu0 0.0
    %1169 = vmatprep.subr.mxu0 0.0
    %1170 = vmatpush1.msra.mxu0 0.0
    %1171 = vmatprep.subr.mxu0 0.0
    %1172 = vmatpush1.msra.mxu0 0.0
    %1173 = vmatprep.subr.mxu0 0.0
    %1174 = vmatpush1.msra.mxu0 0.0
    %1175 = vmatprep.subr.mxu0 0.0
    %1176 = vmatpush1.msra.mxu0 0.0
    %1177 = vmatprep.subr.mxu0 0.0
    %1178 = vmatpush1.msra.mxu0 0.0
    %1179 = vmatprep.subr.mxu0 0.0
    %1180 = vmatpush1.msra.mxu0 0.0
    %1181 = vmatprep.subr.mxu0 0.0
    %1182 = vmatpush1.msra.mxu0 0.0
    %1183 = vmatprep.subr.mxu0 0.0
    %1184 = vmatpush1.msra.mxu0 0.0
    %1185 = vmatprep.subr.mxu0 0.0
    %1186 = vmatpush1.msra.mxu0 0.0
    %1187 = vmatprep.subr.mxu0 0.0
    %1188 = vmatpush1.msra.mxu0 0.0
    %1189 = vmatprep.subr.mxu0 0.0
    %1190 = vmatpush1.msra.mxu0 0.0
    %1191 = vmatprep.subr.mxu0 0.0
    %1192 = vmatpush1.msra.mxu0 0.0
    %1193 = vmatprep.subr.mxu0 0.0
    %1194 = vmatpush1.msra.mxu0 0.0
    %1195 = vmatprep.subr.mxu0 0.0
    %1196 = vmatpush1.msra.mxu0 0.0
    %1197 = vmatprep.subr.mxu0 0.0
    %1198 = vmatpush1.msra.mxu0 0.0
    %1199 = vmatprep.subr.mxu0 0.0
    %1200 = vmatpush1.msra.mxu0 0.0
    %1201 = vmatprep.mubr.f32.mxu0 0.0
    %1202 = vmatmul.mubr.f32.gmra.mrb[0].mxu0 %v1135
    %v1203 = vpop.f32.mrb[0].mxu0
    %v1204 = vadd.f32 0.0, %v1203
    %v1205 = vpop.f32.mrb[0].mxu0
    %1206 = vdwg.mxu0
    %v1207 = vadd.f32 %v962, %v1204
    %v1209 = vrot.slane %v263, 2
    %1210 = vrot.lane.b32.xlu0 %v1209, 32
    %v1211 = vpop.permute.xlu0 %1210
    %v1213 = vrot.slane %v263, 4
    %1214 = vrot.lane.b32.xlu0 %v1213, 64
    %v1215 = vpop.permute.xlu0 %1214
    %v1217 = vrot.slane %v263, 6
    %1218 = vrot.lane.b32.xlu0 %v1217, 96
    %v1219 = vpop.permute.xlu0 %1218
    %v1222 = vrot.slane %v265, 2
    %1223 = vrot.lane.b32.xlu0 %v1222, 32
    %v1224 = vpop.permute.xlu0 %1223
    %v1226 = vrot.slane %v265, 4
    %1227 = vrot.lane.b32.xlu0 %v1226, 64
    %v1228 = vpop.permute.xlu0 %1227
    %v1230 = vrot.slane %v265, 6
    %1231 = vrot.lane.b32.xlu0 %v1230, 96
    %v1232 = vpop.permute.xlu0 %1231
    %v1234 = vsel %vm460, %v263, %v1211
    %v1235 = vsel %vm462, %v1234, %v1215
    %v1236 = vsel %vm464, %v1235, %v1219
    %v1237 = vsel %vm460, %v265, %v1224
    %v1238 = vsel %vm462, %v1237, %v1228
    %v1239 = vsel %vm464, %v1238, %v1232
    %1240 = vmatprep.subr.mxu0 0.0
    %1241 = vmatpush1.msra.mxu0 %v271
    %1242 = vmatprep.subr.mxu0 0.0
    %1243 = vmatpush1.msra.mxu0 %v272
    %1244 = vmatprep.subr.mxu0 0.0
    %1245 = vmatpush1.msra.mxu0 %v273
    %1246 = vmatprep.subr.mxu0 0.0
    %1247 = vmatpush1.msra.mxu0 %v274
    %1248 = vmatprep.subr.mxu0 0.0
    %1249 = vmatpush1.msra.mxu0 %v275
    %1250 = vmatprep.subr.mxu0 0.0
    %1251 = vmatpush1.msra.mxu0 %v276
    %1252 = vmatprep.subr.mxu0 0.0
    %1253 = vmatpush1.msra.mxu0 %v277
    %1254 = vmatprep.subr.mxu0 0.0
    %1255 = vmatpush1.msra.mxu0 %v278
    %1256 = vmatprep.subr.mxu0 0.0
    %1257 = vmatpush1.msra.mxu0 %v279
    %1258 = vmatprep.subr.mxu0 0.0
    %1259 = vmatpush1.msra.mxu0 %v280
    %1260 = vmatprep.subr.mxu0 0.0
    %1261 = vmatpush1.msra.mxu0 %v281
    %1262 = vmatprep.subr.mxu0 0.0
    %1263 = vmatpush1.msra.mxu0 %v282
    %1264 = vmatprep.subr.mxu0 0.0
    %1265 = vmatpush1.msra.mxu0 %v283
    %1266 = vmatprep.subr.mxu0 0.0
    %1267 = vmatpush1.msra.mxu0 %v284
    %1268 = vmatprep.subr.mxu0 0.0
    %1269 = vmatpush1.msra.mxu0 %v285
    %1270 = vmatprep.subr.mxu0 0.0
    %1271 = vmatpush1.msra.mxu0 %v286
    %1272 = vmatprep.subr.mxu0 0.0
    %1273 = vmatpush1.msra.mxu0 %v287
    %1274 = vmatprep.subr.mxu0 0.0
    %1275 = vmatpush1.msra.mxu0 %v288
    %1276 = vmatprep.subr.mxu0 0.0
    %1277 = vmatpush1.msra.mxu0 %v289
    %1278 = vmatprep.subr.mxu0 0.0
    %1279 = vmatpush1.msra.mxu0 %v290
    %1280 = vmatprep.subr.mxu0 0.0
    %1281 = vmatpush1.msra.mxu0 %v291
    %1282 = vmatprep.subr.mxu0 0.0
    %1283 = vmatpush1.msra.mxu0 %v292
    %1284 = vmatprep.subr.mxu0 0.0
    %1285 = vmatpush1.msra.mxu0 %v293
    %1286 = vmatprep.subr.mxu0 0.0
    %1287 = vmatpush1.msra.mxu0 %v294
    %1288 = vmatprep.subr.mxu0 0.0
    %1289 = vmatpush1.msra.mxu0 %v295
    %1290 = vmatprep.subr.mxu0 0.0
    %1291 = vmatpush1.msra.mxu0 %v296
    %1292 = vmatprep.subr.mxu0 0.0
    %1293 = vmatpush1.msra.mxu0 %v297
    %1294 = vmatprep.subr.mxu0 0.0
    %1295 = vmatpush1.msra.mxu0 %v298
    %1296 = vmatprep.subr.mxu0 0.0
    %1297 = vmatpush1.msra.mxu0 %v299
    %1298 = vmatprep.subr.mxu0 0.0
    %1299 = vmatpush1.msra.mxu0 %v300
    %1300 = vmatprep.subr.mxu0 0.0
    %1301 = vmatpush1.msra.mxu0 %v301
    %1302 = vmatprep.subr.mxu0 0.0
    %1303 = vmatpush1.msra.mxu0 %v302
    %1304 = vmatprep.mubr.f32.mxu0 %v474
    %1305 = vmatmul.mubr.f32.gmra.mrb[0].mxu0 %v471
    %v1306 = vpop.f32.mrb[0].mxu0
    %v1307 = vadd.f32 %v479, %v1306
    %v1308 = vpop.f32.mrb[0].mxu0
    %1309 = vdwg.mxu0
    %1310 = vmatprep.subr.mxu0 0.0
    %1311 = vmatpush1.msra.mxu0 %v303
    %1312 = vmatprep.subr.mxu0 0.0
    %1313 = vmatpush1.msra.mxu0 %v304
    %1314 = vmatprep.subr.mxu0 0.0
    %1315 = vmatpush1.msra.mxu0 %v305
    %1316 = vmatprep.subr.mxu0 0.0
    %1317 = vmatpush1.msra.mxu0 %v306
    %1318 = vmatprep.subr.mxu0 0.0
    %1319 = vmatpush1.msra.mxu0 %v307
    %1320 = vmatprep.subr.mxu0 0.0
    %1321 = vmatpush1.msra.mxu0 %v308
    %1322 = vmatprep.subr.mxu0 0.0
    %1323 = vmatpush1.msra.mxu0 %v309
    %1324 = vmatprep.subr.mxu0 0.0
    %1325 = vmatpush1.msra.mxu0 %v310
    %1326 = vmatprep.subr.mxu0 0.0
    %1327 = vmatpush1.msra.mxu0 %v311
    %1328 = vmatprep.subr.mxu0 0.0
    %1329 = vmatpush1.msra.mxu0 %v312
    %1330 = vmatprep.subr.mxu0 0.0
    %1331 = vmatpush1.msra.mxu0 %v313
    %1332 = vmatprep.subr.mxu0 0.0
    %1333 = vmatpush1.msra.mxu0 %v314
    %1334 = vmatprep.subr.mxu0 0.0
    %1335 = vmatpush1.msra.mxu0 %v315
    %1336 = vmatprep.subr.mxu0 0.0
    %1337 = vmatpush1.msra.mxu0 %v316
    %1338 = vmatprep.subr.mxu0 0.0
    %1339 = vmatpush1.msra.mxu0 %v317
    %1340 = vmatprep.subr.mxu0 0.0
    %1341 = vmatpush1.msra.mxu0 %v318
    %1342 = vmatprep.subr.mxu0 0.0
    %1343 = vmatpush1.msra.mxu0 %v319
    %1344 = vmatprep.subr.mxu0 0.0
    %1345 = vmatpush1.msra.mxu0 %v320
    %1346 = vmatprep.subr.mxu0 0.0
    %1347 = vmatpush1.msra.mxu0 %v321
    %1348 = vmatprep.subr.mxu0 0.0
    %1349 = vmatpush1.msra.mxu0 %v322
    %1350 = vmatprep.subr.mxu0 0.0
    %1351 = vmatpush1.msra.mxu0 %v323
    %1352 = vmatprep.subr.mxu0 0.0
    %1353 = vmatpush1.msra.mxu0 %v324
    %1354 = vmatprep.subr.mxu0 0.0
    %1355 = vmatpush1.msra.mxu0 %v325
    %1356 = vmatprep.subr.mxu0 0.0
    %1357 = vmatpush1.msra.mxu0 %v326
    %1358 = vmatprep.subr.mxu0 0.0
    %1359 = vmatpush1.msra.mxu0 %v327
    %1360 = vmatprep.subr.mxu0 0.0
    %1361 = vmatpush1.msra.mxu0 %v328
    %1362 = vmatprep.subr.mxu0 0.0
    %1363 = vmatpush1.msra.mxu0 %v329
    %1364 = vmatprep.subr.mxu0 0.0
    %1365 = vmatpush1.msra.mxu0 %v330
    %1366 = vmatprep.subr.mxu0 0.0
    %1367 = vmatpush1.msra.mxu0 %v331
    %1368 = vmatprep.subr.mxu0 0.0
    %1369 = vmatpush1.msra.mxu0 %v332
    %1370 = vmatprep.subr.mxu0 0.0
    %1371 = vmatpush1.msra.mxu0 %v333
    %1372 = vmatprep.subr.mxu0 0.0
    %1373 = vmatpush1.msra.mxu0 %v334
    %1374 = vmatprep.mubr.f32.mxu0 %v1239
    %1375 = vmatmul.mubr.f32.gmra.mrb[0].mxu0 %v1236
    %v1376 = vpop.f32.mrb[0].mxu0
    %v1377 = vadd.f32 %v1307, %v1376
    %v1378 = vpop.f32.mrb[0].mxu0
    %1379 = vdwg.mxu0
    %v1380 = vmax.f32 %v1377, 0.0
    %v1382 = vsel %vm462, %v1380, 0
    %1384 = vmatprep.subr.mxu0 0.0
    %1385 = vmatpush1.msra.mxu0 %v360
    %1386 = vmatprep.subr.mxu0 0.0
    %1387 = vmatpush1.msra.mxu0 %v361
    %1388 = vmatprep.subr.mxu0 0.0
    %1389 = vmatpush1.msra.mxu0 %v362
    %1390 = vmatprep.subr.mxu0 0.0
    %1391 = vmatpush1.msra.mxu0 %v363
    %1392 = vmatprep.subr.mxu0 0.0
    %1393 = vmatpush1.msra.mxu0 %v364
    %1394 = vmatprep.subr.mxu0 0.0
    %1395 = vmatpush1.msra.mxu0 %v365
    %1396 = vmatprep.subr.mxu0 0.0
    %1397 = vmatpush1.msra.mxu0 %v366
    %1398 = vmatprep.subr.mxu0 0.0
    %1399 = vmatpush1.msra.mxu0 %v367
    %1400 = vmatprep.subr.mxu0 0.0
    %1401 = vmatpush1.msra.mxu0 0.0
    %1402 = vmatprep.subr.mxu0 0.0
    %1403 = vmatpush1.msra.mxu0 0.0
    %1404 = vmatprep.subr.mxu0 0.0
    %1405 = vmatpush1.msra.mxu0 0.0
    %1406 = vmatprep.subr.mxu0 0.0
    %1407 = vmatpush1.msra.mxu0 0.0
    %1408 = vmatprep.subr.mxu0 0.0
    %1409 = vmatpush1.msra.mxu0 0.0
    %1410 = vmatprep.subr.mxu0 0.0
    %1411 = vmatpush1.msra.mxu0 0.0
    %1412 = vmatprep.subr.mxu0 0.0
    %1413 = vmatpush1.msra.mxu0 0.0
    %1414 = vmatprep.subr.mxu0 0.0
    %1415 = vmatpush1.msra.mxu0 0.0
    %1416 = vmatprep.subr.mxu0 0.0
    %1417 = vmatpush1.msra.mxu0 0.0
    %1418 = vmatprep.subr.mxu0 0.0
    %1419 = vmatpush1.msra.mxu0 0.0
    %1420 = vmatprep.subr.mxu0 0.0
    %1421 = vmatpush1.msra.mxu0 0.0
    %1422 = vmatprep.subr.mxu0 0.0
    %1423 = vmatpush1.msra.mxu0 0.0
    %1424 = vmatprep.subr.mxu0 0.0
    %1425 = vmatpush1.msra.mxu0 0.0
    %1426 = vmatprep.subr.mxu0 0.0
    %1427 = vmatpush1.msra.mxu0 0.0
    %1428 = vmatprep.subr.mxu0 0.0
    %1429 = vmatpush1.msra.mxu0 0.0
    %1430 = vmatprep.subr.mxu0 0.0
    %1431 = vmatpush1.msra.mxu0 0.0
    %1432 = vmatprep.subr.mxu0 0.0
    %1433 = vmatpush1.msra.mxu0 0.0
    %1434 = vmatprep.subr.mxu0 0.0
    %1435 = vmatpush1.msra.mxu0 0.0
    %1436 = vmatprep.subr.mxu0 0.0
    %1437 = vmatpush1.msra.mxu0 0.0
    %1438 = vmatprep.subr.mxu0 0.0
    %1439 = vmatpush1.msra.mxu0 0.0
    %1440 = vmatprep.subr.mxu0 0.0
    %1441 = vmatpush1.msra.mxu0 0.0
    %1442 = vmatprep.subr.mxu0 0.0
    %1443 = vmatpush1.msra.mxu0 0.0
    %1444 = vmatprep.subr.mxu0 0.0
    %1445 = vmatpush1.msra.mxu0 0.0
    %1446 = vmatprep.subr.mxu0 0.0
    %1447 = vmatpush1.msra.mxu0 0.0
    %1448 = vmatprep.mubr.f32.mxu0 0.0
    %1449 = vmatmul.mubr.f32.gmra.mrb[0].mxu0 %v1382
    %v1450 = vpop.f32.mrb[0].mxu0
    %v1451 = vadd.f32 0.0, %v1450
    %v1452 = vpop.f32.mrb[0].mxu0
    %1453 = vdwg.mxu0
    %v1454 = vadd.f32 %v1207, %v1451
    %v1456 = vrot.slane %v264, 4
    %1457 = vrot.lane.b32.xlu0 %v1456, 64
    %v1458 = vpop.permute.xlu0 %1457
    %v1460 = vrot.slane %v264, 6
    %1461 = vrot.lane.b32.xlu0 %v1460, 96
    %v1462 = vpop.permute.xlu0 %1461
    %v1465 = vrot.slane %v266, 4
    %1466 = vrot.lane.b32.xlu0 %v1465, 64
    %v1467 = vpop.permute.xlu0 %1466
    %v1469 = vrot.slane %v266, 6
    %1470 = vrot.lane.b32.xlu0 %v1469, 96
    %v1471 = vpop.permute.xlu0 %1470
    %v1473 = vsel %vm462, %v1234, %v1458
    %v1474 = vsel %vm464, %v1473, %v1462
    %v1475 = vsel %vm462, %v1237, %v1467
    %v1476 = vsel %vm464, %v1475, %v1471
    %v1479 = vrot.slane %v1474, 4
    %v1480 = vrot.slane %v1476, 4
    %1483 = vmatprep.subr.mxu0 0.0
    %1484 = vmatpush1.msra.mxu0 %v271
    %1485 = vmatprep.subr.mxu0 0.0
    %1486 = vmatpush1.msra.mxu0 %v272
    %1487 = vmatprep.subr.mxu0 0.0
    %1488 = vmatpush1.msra.mxu0 %v273
    %1489 = vmatprep.subr.mxu0 0.0
    %1490 = vmatpush1.msra.mxu0 %v274
    %1491 = vmatprep.subr.mxu0 0.0
    %1492 = vmatpush1.msra.mxu0 %v275
    %1493 = vmatprep.subr.mxu0 0.0
    %1494 = vmatpush1.msra.mxu0 %v276
    %1495 = vmatprep.subr.mxu0 0.0
    %1496 = vmatpush1.msra.mxu0 %v277
    %1497 = vmatprep.subr.mxu0 0.0
    %1498 = vmatpush1.msra.mxu0 %v278
    %1499 = vmatprep.subr.mxu0 0.0
    %1500 = vmatpush1.msra.mxu0 %v279
    %1501 = vmatprep.subr.mxu0 0.0
    %1502 = vmatpush1.msra.mxu0 %v280
    %1503 = vmatprep.subr.mxu0 0.0
    %1504 = vmatpush1.msra.mxu0 %v281
    %1505 = vmatprep.subr.mxu0 0.0
    %1506 = vmatpush1.msra.mxu0 %v282
    %1507 = vmatprep.subr.mxu0 0.0
    %1508 = vmatpush1.msra.mxu0 %v283
    %1509 = vmatprep.subr.mxu0 0.0
    %1510 = vmatpush1.msra.mxu0 %v284
    %1511 = vmatprep.subr.mxu0 0.0
    %1512 = vmatpush1.msra.mxu0 %v285
    %1513 = vmatprep.subr.mxu0 0.0
    %1514 = vmatpush1.msra.mxu0 %v286
    %1515 = vmatprep.subr.mxu0 0.0
    %1516 = vmatpush1.msra.mxu0 %v287
    %1517 = vmatprep.subr.mxu0 0.0
    %1518 = vmatpush1.msra.mxu0 %v288
    %1519 = vmatprep.subr.mxu0 0.0
    %1520 = vmatpush1.msra.mxu0 %v289
    %1521 = vmatprep.subr.mxu0 0.0
    %1522 = vmatpush1.msra.mxu0 %v290
    %1523 = vmatprep.subr.mxu0 0.0
    %1524 = vmatpush1.msra.mxu0 %v291
    %1525 = vmatprep.subr.mxu0 0.0
    %1526 = vmatpush1.msra.mxu0 %v292
    %1527 = vmatprep.subr.mxu0 0.0
    %1528 = vmatpush1.msra.mxu0 %v293
    %1529 = vmatprep.subr.mxu0 0.0
    %1530 = vmatpush1.msra.mxu0 %v294
    %1531 = vmatprep.subr.mxu0 0.0
    %1532 = vmatpush1.msra.mxu0 %v295
    %1533 = vmatprep.subr.mxu0 0.0
    %1534 = vmatpush1.msra.mxu0 %v296
    %1535 = vmatprep.subr.mxu0 0.0
    %1536 = vmatpush1.msra.mxu0 %v297
    %1537 = vmatprep.subr.mxu0 0.0
    %1538 = vmatpush1.msra.mxu0 %v298
    %1539 = vmatprep.subr.mxu0 0.0
    %1540 = vmatpush1.msra.mxu0 %v299
    %1541 = vmatprep.subr.mxu0 0.0
    %1542 = vmatpush1.msra.mxu0 %v300
    %1543 = vmatprep.subr.mxu0 0.0
    %1544 = vmatpush1.msra.mxu0 %v301
    %1545 = vmatprep.subr.mxu0 0.0
    %1546 = vmatpush1.msra.mxu0 %v302
    %1547 = vmatprep.mubr.f32.mxu0 %v673
    %1548 = vmatmul.mubr.f32.gmra.mrb[0].mxu0 %v672
    %v1549 = vpop.f32.mrb[0].mxu0
    %v1550 = vadd.f32 %v479, %v1549
    %v1551 = vpop.f32.mrb[0].mxu0
    %1552 = vdwg.mxu0
    %1553 = vmatprep.subr.mxu0 0.0
    %1554 = vmatpush1.msra.mxu0 %v303
    %1555 = vmatprep.subr.mxu0 0.0
    %1556 = vmatpush1.msra.mxu0 %v304
    %1557 = vmatprep.subr.mxu0 0.0
    %1558 = vmatpush1.msra.mxu0 %v305
    %1559 = vmatprep.subr.mxu0 0.0
    %1560 = vmatpush1.msra.mxu0 %v306
    %1561 = vmatprep.subr.mxu0 0.0
    %1562 = vmatpush1.msra.mxu0 %v307
    %1563 = vmatprep.subr.mxu0 0.0
    %1564 = vmatpush1.msra.mxu0 %v308
    %1565 = vmatprep.subr.mxu0 0.0
    %1566 = vmatpush1.msra.mxu0 %v309
    %1567 = vmatprep.subr.mxu0 0.0
    %1568 = vmatpush1.msra.mxu0 %v310
    %1569 = vmatprep.subr.mxu0 0.0
    %1570 = vmatpush1.msra.mxu0 %v311
    %1571 = vmatprep.subr.mxu0 0.0
    %1572 = vmatpush1.msra.mxu0 %v312
    %1573 = vmatprep.subr.mxu0 0.0
    %1574 = vmatpush1.msra.mxu0 %v313
    %1575 = vmatprep.subr.mxu0 0.0
    %1576 = vmatpush1.msra.mxu0 %v314
    %1577 = vmatprep.subr.mxu0 0.0
    %1578 = vmatpush1.msra.mxu0 %v315
    %1579 = vmatprep.subr.mxu0 0.0
    %1580 = vmatpush1.msra.mxu0 %v316
    %1581 = vmatprep.subr.mxu0 0.0
    %1582 = vmatpush1.msra.mxu0 %v317
    %1583 = vmatprep.subr.mxu0 0.0
    %1584 = vmatpush1.msra.mxu0 %v318
    %1585 = vmatprep.subr.mxu0 0.0
    %1586 = vmatpush1.msra.mxu0 %v319
    %1587 = vmatprep.subr.mxu0 0.0
    %1588 = vmatpush1.msra.mxu0 %v320
    %1589 = vmatprep.subr.mxu0 0.0
    %1590 = vmatpush1.msra.mxu0 %v321
    %1591 = vmatprep.subr.mxu0 0.0
    %1592 = vmatpush1.msra.mxu0 %v322
    %1593 = vmatprep.subr.mxu0 0.0
    %1594 = vmatpush1.msra.mxu0 %v323
    %1595 = vmatprep.subr.mxu0 0.0
    %1596 = vmatpush1.msra.mxu0 %v324
    %1597 = vmatprep.subr.mxu0 0.0
    %1598 = vmatpush1.msra.mxu0 %v325
    %1599 = vmatprep.subr.mxu0 0.0
    %1600 = vmatpush1.msra.mxu0 %v326
    %1601 = vmatprep.subr.mxu0 0.0
    %1602 = vmatpush1.msra.mxu0 %v327
    %1603 = vmatprep.subr.mxu0 0.0
    %1604 = vmatpush1.msra.mxu0 %v328
    %1605 = vmatprep.subr.mxu0 0.0
    %1606 = vmatpush1.msra.mxu0 %v329
    %1607 = vmatprep.subr.mxu0 0.0
    %1608 = vmatpush1.msra.mxu0 %v330
    %1609 = vmatprep.subr.mxu0 0.0
    %1610 = vmatpush1.msra.mxu0 %v331
    %1611 = vmatprep.subr.mxu0 0.0
    %1612 = vmatpush1.msra.mxu0 %v332
    %1613 = vmatprep.subr.mxu0 0.0
    %1614 = vmatpush1.msra.mxu0 %v333
    %1615 = vmatprep.subr.mxu0 0.0
    %1616 = vmatpush1.msra.mxu0 %v334
    %1617 = vmatprep.mubr.f32.mxu0 %v1480
    %1618 = vmatmul.mubr.f32.gmra.mrb[0].mxu0 %v1479
    %v1619 = vpop.f32.mrb[0].mxu0
    %v1620 = vadd.f32 %v1550, %v1619
    %v1621 = vpop.f32.mrb[0].mxu0
    %1622 = vdwg.mxu0
    %v1623 = vmax.f32 %v1620, 0.0
    %v1625 = vsel %vm462, %v1623, 0
    %1627 = vmatprep.subr.mxu0 0.0
    %1628 = vmatpush1.msra.mxu0 %v368
    %1629 = vmatprep.subr.mxu0 0.0
    %1630 = vmatpush1.msra.mxu0 %v369
    %1631 = vmatprep.subr.mxu0 0.0
    %1632 = vmatpush1.msra.mxu0 %v370
    %1633 = vmatprep.subr.mxu0 0.0
    %1634 = vmatpush1.msra.mxu0 %v371
    %1635 = vmatprep.subr.mxu0 0.0
    %1636 = vmatpush1.msra.mxu0 %v372
    %1637 = vmatprep.subr.mxu0 0.0
    %1638 = vmatpush1.msra.mxu0 %v373
    %1639 = vmatprep.subr.mxu0 0.0
    %1640 = vmatpush1.msra.mxu0 %v374
    %1641 = vmatprep.subr.mxu0 0.0
    %1642 = vmatpush1.msra.mxu0 %v375
    %1643 = vmatprep.subr.mxu0 0.0
    %1644 = vmatpush1.msra.mxu0 0.0
    %1645 = vmatprep.subr.mxu0 0.0
    %1646 = vmatpush1.msra.mxu0 0.0
    %1647 = vmatprep.subr.mxu0 0.0
    %1648 = vmatpush1.msra.mxu0 0.0
    %1649 = vmatprep.subr.mxu0 0.0
    %1650 = vmatpush1.msra.mxu0 0.0
    %1651 = vmatprep.subr.mxu0 0.0
    %1652 = vmatpush1.msra.mxu0 0.0
    %1653 = vmatprep.subr.mxu0 0.0
    %1654 = vmatpush1.msra.mxu0 0.0
    %1655 = vmatprep.subr.mxu0 0.0
    %1656 = vmatpush1.msra.mxu0 0.0
    %1657 = vmatprep.subr.mxu0 0.0
    %1658 = vmatpush1.msra.mxu0 0.0
    %1659 = vmatprep.subr.mxu0 0.0
    %1660 = vmatpush1.msra.mxu0 0.0
    %1661 = vmatprep.subr.mxu0 0.0
    %1662 = vmatpush1.msra.mxu0 0.0
    %1663 = vmatprep.subr.mxu0 0.0
    %1664 = vmatpush1.msra.mxu0 0.0
    %1665 = vmatprep.subr.mxu0 0.0
    %1666 = vmatpush1.msra.mxu0 0.0
    %1667 = vmatprep.subr.mxu0 0.0
    %1668 = vmatpush1.msra.mxu0 0.0
    %1669 = vmatprep.subr.mxu0 0.0
    %1670 = vmatpush1.msra.mxu0 0.0
    %1671 = vmatprep.subr.mxu0 0.0
    %1672 = vmatpush1.msra.mxu0 0.0
    %1673 = vmatprep.subr.mxu0 0.0
    %1674 = vmatpush1.msra.mxu0 0.0
    %1675 = vmatprep.subr.mxu0 0.0
    %1676 = vmatpush1.msra.mxu0 0.0
    %1677 = vmatprep.subr.mxu0 0.0
    %1678 = vmatpush1.msra.mxu0 0.0
    %1679 = vmatprep.subr.mxu0 0.0
    %1680 = vmatpush1.msra.mxu0 0.0
    %1681 = vmatprep.subr.mxu0 0.0
    %1682 = vmatpush1.msra.mxu0 0.0
    %1683 = vmatprep.subr.mxu0 0.0
    %1684 = vmatpush1.msra.mxu0 0.0
    %1685 = vmatprep.subr.mxu0 0.0
    %1686 = vmatpush1.msra.mxu0 0.0
    %1687 = vmatprep.subr.mxu0 0.0
    %1688 = vmatpush1.msra.mxu0 0.0
    %1689 = vmatprep.subr.mxu0 0.0
    %1690 = vmatpush1.msra.mxu0 0.0
    %1691 = vmatprep.mubr.f32.mxu0 0.0
    %1692 = vmatmul.mubr.f32.gmra.mrb[0].mxu0 %v1625
    %v1693 = vpop.f32.mrb[0].mxu0
    %v1694 = vadd.f32 0.0, %v1693
    %v1695 = vpop.f32.mrb[0].mxu0
    %1696 = vdwg.mxu0
    %v1697 = vadd.f32 %v1454, %v1694
    %v1698 = vrot.slane %v264, 2
    %1699 = vrot.lane.b32.xlu0 %v1698, 32
    %v1700 = vpop.permute.xlu0 %1699
    %v1702 = vrot.slane %v266, 2
    %1703 = vrot.lane.b32.xlu0 %v1702, 32
    %v1704 = vpop.permute.xlu0 %1703
    %v1706 = vsel %vm460, %v264, %v1700
    %v1707 = vsel %vm462, %v1706, %v1458
    %v1708 = vsel %vm464, %v1707, %v1462
    %v1709 = vsel %vm460, %v266, %v1704
    %v1710 = vsel %vm462, %v1709, %v1467
    %v1711 = vsel %vm464, %v1710, %v1471
    %1712 = vmatprep.subr.mxu0 0.0
    %1713 = vmatpush1.msra.mxu0 %v271
    %1714 = vmatprep.subr.mxu0 0.0
    %1715 = vmatpush1.msra.mxu0 %v272
    %1716 = vmatprep.subr.mxu0 0.0
    %1717 = vmatpush1.msra.mxu0 %v273
    %1718 = vmatprep.subr.mxu0 0.0
    %1719 = vmatpush1.msra.mxu0 %v274
    %1720 = vmatprep.subr.mxu0 0.0
    %1721 = vmatpush1.msra.mxu0 %v275
    %1722 = vmatprep.subr.mxu0 0.0
    %1723 = vmatpush1.msra.mxu0 %v276
    %1724 = vmatprep.subr.mxu0 0.0
    %1725 = vmatpush1.msra.mxu0 %v277
    %1726 = vmatprep.subr.mxu0 0.0
    %1727 = vmatpush1.msra.mxu0 %v278
    %1728 = vmatprep.subr.mxu0 0.0
    %1729 = vmatpush1.msra.mxu0 %v279
    %1730 = vmatprep.subr.mxu0 0.0
    %1731 = vmatpush1.msra.mxu0 %v280
    %1732 = vmatprep.subr.mxu0 0.0
    %1733 = vmatpush1.msra.mxu0 %v281
    %1734 = vmatprep.subr.mxu0 0.0
    %1735 = vmatpush1.msra.mxu0 %v282
    %1736 = vmatprep.subr.mxu0 0.0
    %1737 = vmatpush1.msra.mxu0 %v283
    %1738 = vmatprep.subr.mxu0 0.0
    %1739 = vmatpush1.msra.mxu0 %v284
    %1740 = vmatprep.subr.mxu0 0.0
    %1741 = vmatpush1.msra.mxu0 %v285
    %1742 = vmatprep.subr.mxu0 0.0
    %1743 = vmatpush1.msra.mxu0 %v286
    %1744 = vmatprep.subr.mxu0 0.0
    %1745 = vmatpush1.msra.mxu0 %v287
    %1746 = vmatprep.subr.mxu0 0.0
    %1747 = vmatpush1.msra.mxu0 %v288
    %1748 = vmatprep.subr.mxu0 0.0
    %1749 = vmatpush1.msra.mxu0 %v289
    %1750 = vmatprep.subr.mxu0 0.0
    %1751 = vmatpush1.msra.mxu0 %v290
    %1752 = vmatprep.subr.mxu0 0.0
    %1753 = vmatpush1.msra.mxu0 %v291
    %1754 = vmatprep.subr.mxu0 0.0
    %1755 = vmatpush1.msra.mxu0 %v292
    %1756 = vmatprep.subr.mxu0 0.0
    %1757 = vmatpush1.msra.mxu0 %v293
    %1758 = vmatprep.subr.mxu0 0.0
    %1759 = vmatpush1.msra.mxu0 %v294
    %1760 = vmatprep.subr.mxu0 0.0
    %1761 = vmatpush1.msra.mxu0 %v295
    %1762 = vmatprep.subr.mxu0 0.0
    %1763 = vmatpush1.msra.mxu0 %v296
    %1764 = vmatprep.subr.mxu0 0.0
    %1765 = vmatpush1.msra.mxu0 %v297
    %1766 = vmatprep.subr.mxu0 0.0
    %1767 = vmatpush1.msra.mxu0 %v298
    %1768 = vmatprep.subr.mxu0 0.0
    %1769 = vmatpush1.msra.mxu0 %v299
    %1770 = vmatprep.subr.mxu0 0.0
    %1771 = vmatpush1.msra.mxu0 %v300
    %1772 = vmatprep.subr.mxu0 0.0
    %1773 = vmatpush1.msra.mxu0 %v301
    %1774 = vmatprep.subr.mxu0 0.0
    %1775 = vmatpush1.msra.mxu0 %v302
    %1776 = vmatprep.mubr.f32.mxu0 %v992
    %1777 = vmatmul.mubr.f32.gmra.mrb[0].mxu0 %v989
    %v1778 = vpop.f32.mrb[0].mxu0
    %v1779 = vadd.f32 %v479, %v1778
    %v1780 = vpop.f32.mrb[0].mxu0
    %1781 = vdwg.mxu0
    %1782 = vmatprep.subr.mxu0 0.0
    %1783 = vmatpush1.msra.mxu0 %v303
    %1784 = vmatprep.subr.mxu0 0.0
    %1785 = vmatpush1.msra.mxu0 %v304
    %1786 = vmatprep.subr.mxu0 0.0
    %1787 = vmatpush1.msra.mxu0 %v305
    %1788 = vmatprep.subr.mxu0 0.0
    %1789 = vmatpush1.msra.mxu0 %v306
    %1790 = vmatprep.subr.mxu0 0.0
    %1791 = vmatpush1.msra.mxu0 %v307
    %1792 = vmatprep.subr.mxu0 0.0
    %1793 = vmatpush1.msra.mxu0 %v308
    %1794 = vmatprep.subr.mxu0 0.0
    %1795 = vmatpush1.msra.mxu0 %v309
    %1796 = vmatprep.subr.mxu0 0.0
    %1797 = vmatpush1.msra.mxu0 %v310
    %1798 = vmatprep.subr.mxu0 0.0
    %1799 = vmatpush1.msra.mxu0 %v311
    %1800 = vmatprep.subr.mxu0 0.0
    %1801 = vmatpush1.msra.mxu0 %v312
    %1802 = vmatprep.subr.mxu0 0.0
    %1803 = vmatpush1.msra.mxu0 %v313
    %1804 = vmatprep.subr.mxu0 0.0
    %1805 = vmatpush1.msra.mxu0 %v314
    %1806 = vmatprep.subr.mxu0 0.0
    %1807 = vmatpush1.msra.mxu0 %v315
    %1808 = vmatprep.subr.mxu0 0.0
    %1809 = vmatpush1.msra.mxu0 %v316
    %1810 = vmatprep.subr.mxu0 0.0
    %1811 = vmatpush1.msra.mxu0 %v317
    %1812 = vmatprep.subr.mxu0 0.0
    %1813 = vmatpush1.msra.mxu0 %v318
    %1814 = vmatprep.subr.mxu0 0.0
    %1815 = vmatpush1.msra.mxu0 %v319
    %1816 = vmatprep.subr.mxu0 0.0
    %1817 = vmatpush1.msra.mxu0 %v320
    %1818 = vmatprep.subr.mxu0 0.0
    %1819 = vmatpush1.msra.mxu0 %v321
    %1820 = vmatprep.subr.mxu0 0.0
    %1821 = vmatpush1.msra.mxu0 %v322
    %1822 = vmatprep.subr.mxu0 0.0
    %1823 = vmatpush1.msra.mxu0 %v323
    %1824 = vmatprep.subr.mxu0 0.0
    %1825 = vmatpush1.msra.mxu0 %v324
    %1826 = vmatprep.subr.mxu0 0.0
    %1827 = vmatpush1.msra.mxu0 %v325
    %1828 = vmatprep.subr.mxu0 0.0
    %1829 = vmatpush1.msra.mxu0 %v326
    %1830 = vmatprep.subr.mxu0 0.0
    %1831 = vmatpush1.msra.mxu0 %v327
    %1832 = vmatprep.subr.mxu0 0.0
    %1833 = vmatpush1.msra.mxu0 %v328
    %1834 = vmatprep.subr.mxu0 0.0
    %1835 = vmatpush1.msra.mxu0 %v329
    %1836 = vmatprep.subr.mxu0 0.0
    %1837 = vmatpush1.msra.mxu0 %v330
    %1838 = vmatprep.subr.mxu0 0.0
    %1839 = vmatpush1.msra.mxu0 %v331
    %1840 = vmatprep.subr.mxu0 0.0
    %1841 = vmatpush1.msra.mxu0 %v332
    %1842 = vmatprep.subr.mxu0 0.0
    %1843 = vmatpush1.msra.mxu0 %v333
    %1844 = vmatprep.subr.mxu0 0.0
    %1845 = vmatpush1.msra.mxu0 %v334
    %1846 = vmatprep.mubr.f32.mxu0 %v1711
    %1847 = vmatmul.mubr.f32.gmra.mrb[0].mxu0 %v1708
    %v1848 = vpop.f32.mrb[0].mxu0
    %v1849 = vadd.f32 %v1779, %v1848
    %v1850 = vpop.f32.mrb[0].mxu0
    %1851 = vdwg.mxu0
    %v1852 = vmax.f32 %v1849, 0.0
    %v1854 = vsel %vm462, %v1852, 0
    %1856 = vmatprep.subr.mxu0 0.0
    %1857 = vmatpush1.msra.mxu0 %v376
    %1858 = vmatprep.subr.mxu0 0.0
    %1859 = vmatpush1.msra.mxu0 %v377
    %1860 = vmatprep.subr.mxu0 0.0
    %1861 = vmatpush1.msra.mxu0 %v378
    %1862 = vmatprep.subr.mxu0 0.0
    %1863 = vmatpush1.msra.mxu0 %v379
    %1864 = vmatprep.subr.mxu0 0.0
    %1865 = vmatpush1.msra.mxu0 %v380
    %1866 = vmatprep.subr.mxu0 0.0
    %1867 = vmatpush1.msra.mxu0 %v381
    %1868 = vmatprep.subr.mxu0 0.0
    %1869 = vmatpush1.msra.mxu0 %v382
    %1870 = vmatprep.subr.mxu0 0.0
    %1871 = vmatpush1.msra.mxu0 %v383
    %1872 = vmatprep.subr.mxu0 0.0
    %1873 = vmatpush1.msra.mxu0 0.0
    %1874 = vmatprep.subr.mxu0 0.0
    %1875 = vmatpush1.msra.mxu0 0.0
    %1876 = vmatprep.subr.mxu0 0.0
    %1877 = vmatpush1.msra.mxu0 0.0
    %1878 = vmatprep.subr.mxu0 0.0
    %1879 = vmatpush1.msra.mxu0 0.0
    %1880 = vmatprep.subr.mxu0 0.0
    %1881 = vmatpush1.msra.mxu0 0.0
    %1882 = vmatprep.subr.mxu0 0.0
    %1883 = vmatpush1.msra.mxu0 0.0
    %1884 = vmatprep.subr.mxu0 0.0
    %1885 = vmatpush1.msra.mxu0 0.0
    %1886 = vmatprep.subr.mxu0 0.0
    %1887 = vmatpush1.msra.mxu0 0.0
    %1888 = vmatprep.subr.mxu0 0.0
    %1889 = vmatpush1.msra.mxu0 0.0
    %1890 = vmatprep.subr.mxu0 0.0
    %1891 = vmatpush1.msra.mxu0 0.0
    %1892 = vmatprep.subr.mxu0 0.0
    %1893 = vmatpush1.msra.mxu0 0.0
    %1894 = vmatprep.subr.mxu0 0.0
    %1895 = vmatpush1.msra.mxu0 0.0
    %1896 = vmatprep.subr.mxu0 0.0
    %1897 = vmatpush1.msra.mxu0 0.0
    %1898 = vmatprep.subr.mxu0 0.0
    %1899 = vmatpush1.msra.mxu0 0.0
    %1900 = vmatprep.subr.mxu0 0.0
    %1901 = vmatpush1.msra.mxu0 0.0
    %1902 = vmatprep.subr.mxu0 0.0
    %1903 = vmatpush1.msra.mxu0 0.0
    %1904 = vmatprep.subr.mxu0 0.0
    %1905 = vmatpush1.msra.mxu0 0.0
    %1906 = vmatprep.subr.mxu0 0.0
    %1907 = vmatpush1.msra.mxu0 0.0
    %1908 = vmatprep.subr.mxu0 0.0
    %1909 = vmatpush1.msra.mxu0 0.0
    %1910 = vmatprep.subr.mxu0 0.0
    %1911 = vmatpush1.msra.mxu0 0.0
    %1912 = vmatprep.subr.mxu0 0.0
    %1913 = vmatpush1.msra.mxu0 0.0
    %1914 = vmatprep.subr.mxu0 0.0
    %1915 = vmatpush1.msra.mxu0 0.0
    %1916 = vmatprep.subr.mxu0 0.0
    %1917 = vmatpush1.msra.mxu0 0.0
    %1918 = vmatprep.subr.mxu0 0.0
    %1919 = vmatpush1.msra.mxu0 0.0
    %1920 = vmatprep.mubr.f32.mxu0 0.0
    %1921 = vmatmul.mubr.f32.gmra.mrb[0].mxu0 %v1854
    %v1922 = vpop.f32.mrb[0].mxu0
    %v1923 = vadd.f32 0.0, %v1922
    %v1924 = vpop.f32.mrb[0].mxu0
    %1925 = vdwg.mxu0
    %v1926 = vadd.f32 %v1697, %v1923
    %v1928 = vrot.slane %v267, 2
    %1929 = vrot.lane.b32.xlu0 %v1928, 32
    %v1930 = vpop.permute.xlu0 %1929
    %v1932 = vrot.slane %v267, 4
    %1933 = vrot.lane.b32.xlu0 %v1932, 64
    %v1934 = vpop.permute.xlu0 %1933
    %v1936 = vrot.slane %v267, 6
    %1937 = vrot.lane.b32.xlu0 %v1936, 96
    %v1938 = vpop.permute.xlu0 %1937
    %v1941 = vrot.slane %v269, 2
    %1942 = vrot.lane.b32.xlu0 %v1941, 32
    %v1943 = vpop.permute.xlu0 %1942
    %v1945 = vrot.slane %v269, 4
    %1946 = vrot.lane.b32.xlu0 %v1945, 64
    %v1947 = vpop.permute.xlu0 %1946
    %v1949 = vrot.slane %v269, 6
    %1950 = vrot.lane.b32.xlu0 %v1949, 96
    %v1951 = vpop.permute.xlu0 %1950
    %v1953 = vsel %vm460, %v267, %v1930
    %v1954 = vsel %vm462, %v1953, %v1934
    %v1955 = vsel %vm464, %v1954, %v1938
    %v1956 = vsel %vm460, %v269, %v1943
    %v1957 = vsel %vm462, %v1956, %v1947
    %v1958 = vsel %vm464, %v1957, %v1951
    %1959 = vmatprep.subr.mxu0 0.0
    %1960 = vmatpush1.msra.mxu0 %v271
    %1961 = vmatprep.subr.mxu0 0.0
    %1962 = vmatpush1.msra.mxu0 %v272
    %1963 = vmatprep.subr.mxu0 0.0
    %1964 = vmatpush1.msra.mxu0 %v273
    %1965 = vmatprep.subr.mxu0 0.0
    %1966 = vmatpush1.msra.mxu0 %v274
    %1967 = vmatprep.subr.mxu0 0.0
    %1968 = vmatpush1.msra.mxu0 %v275
    %1969 = vmatprep.subr.mxu0 0.0
    %1970 = vmatpush1.msra.mxu0 %v276
    %1971 = vmatprep.subr.mxu0 0.0
    %1972 = vmatpush1.msra.mxu0 %v277
    %1973 = vmatprep.subr.mxu0 0.0
    %1974 = vmatpush1.msra.mxu0 %v278
    %1975 = vmatprep.subr.mxu0 0.0
    %1976 = vmatpush1.msra.mxu0 %v279
    %1977 = vmatprep.subr.mxu0 0.0
    %1978 = vmatpush1.msra.mxu0 %v280
    %1979 = vmatprep.subr.mxu0 0.0
    %1980 = vmatpush1.msra.mxu0 %v281
    %1981 = vmatprep.subr.mxu0 0.0
    %1982 = vmatpush1.msra.mxu0 %v282
    %1983 = vmatprep.subr.mxu0 0.0
    %1984 = vmatpush1.msra.mxu0 %v283
    %1985 = vmatprep.subr.mxu0 0.0
    %1986 = vmatpush1.msra.mxu0 %v284
    %1987 = vmatprep.subr.mxu0 0.0
    %1988 = vmatpush1.msra.mxu0 %v285
    %1989 = vmatprep.subr.mxu0 0.0
    %1990 = vmatpush1.msra.mxu0 %v286
    %1991 = vmatprep.subr.mxu0 0.0
    %1992 = vmatpush1.msra.mxu0 %v287
    %1993 = vmatprep.subr.mxu0 0.0
    %1994 = vmatpush1.msra.mxu0 %v288
    %1995 = vmatprep.subr.mxu0 0.0
    %1996 = vmatpush1.msra.mxu0 %v289
    %1997 = vmatprep.subr.mxu0 0.0
    %1998 = vmatpush1.msra.mxu0 %v290
    %1999 = vmatprep.subr.mxu0 0.0
    %2000 = vmatpush1.msra.mxu0 %v291
    %2001 = vmatprep.subr.mxu0 0.0
    %2002 = vmatpush1.msra.mxu0 %v292
    %2003 = vmatprep.subr.mxu0 0.0
    %2004 = vmatpush1.msra.mxu0 %v293
    %2005 = vmatprep.subr.mxu0 0.0
    %2006 = vmatpush1.msra.mxu0 %v294
    %2007 = vmatprep.subr.mxu0 0.0
    %2008 = vmatpush1.msra.mxu0 %v295
    %2009 = vmatprep.subr.mxu0 0.0
    %2010 = vmatpush1.msra.mxu0 %v296
    %2011 = vmatprep.subr.mxu0 0.0
    %2012 = vmatpush1.msra.mxu0 %v297
    %2013 = vmatprep.subr.mxu0 0.0
    %2014 = vmatpush1.msra.mxu0 %v298
    %2015 = vmatprep.subr.mxu0 0.0
    %2016 = vmatpush1.msra.mxu0 %v299
    %2017 = vmatprep.subr.mxu0 0.0
    %2018 = vmatpush1.msra.mxu0 %v300
    %2019 = vmatprep.subr.mxu0 0.0
    %2020 = vmatpush1.msra.mxu0 %v301
    %2021 = vmatprep.subr.mxu0 0.0
    %2022 = vmatpush1.msra.mxu0 %v302
    %2023 = vmatprep.mubr.f32.mxu0 %v1239
    %2024 = vmatmul.mubr.f32.gmra.mrb[0].mxu0 %v1236
    %v2025 = vpop.f32.mrb[0].mxu0
    %v2026 = vadd.f32 %v479, %v2025
    %v2027 = vpop.f32.mrb[0].mxu0
    %2028 = vdwg.mxu0
    %2029 = vmatprep.subr.mxu0 0.0
    %2030 = vmatpush1.msra.mxu0 %v303
    %2031 = vmatprep.subr.mxu0 0.0
    %2032 = vmatpush1.msra.mxu0 %v304
    %2033 = vmatprep.subr.mxu0 0.0
    %2034 = vmatpush1.msra.mxu0 %v305
    %2035 = vmatprep.subr.mxu0 0.0
    %2036 = vmatpush1.msra.mxu0 %v306
    %2037 = vmatprep.subr.mxu0 0.0
    %2038 = vmatpush1.msra.mxu0 %v307
    %2039 = vmatprep.subr.mxu0 0.0
    %2040 = vmatpush1.msra.mxu0 %v308
    %2041 = vmatprep.subr.mxu0 0.0
    %2042 = vmatpush1.msra.mxu0 %v309
    %2043 = vmatprep.subr.mxu0 0.0
    %2044 = vmatpush1.msra.mxu0 %v310
    %2045 = vmatprep.subr.mxu0 0.0
    %2046 = vmatpush1.msra.mxu0 %v311
    %2047 = vmatprep.subr.mxu0 0.0
    %2048 = vmatpush1.msra.mxu0 %v312
    %2049 = vmatprep.subr.mxu0 0.0
    %2050 = vmatpush1.msra.mxu0 %v313
    %2051 = vmatprep.subr.mxu0 0.0
    %2052 = vmatpush1.msra.mxu0 %v314
    %2053 = vmatprep.subr.mxu0 0.0
    %2054 = vmatpush1.msra.mxu0 %v315
    %2055 = vmatprep.subr.mxu0 0.0
    %2056 = vmatpush1.msra.mxu0 %v316
    %2057 = vmatprep.subr.mxu0 0.0
    %2058 = vmatpush1.msra.mxu0 %v317
    %2059 = vmatprep.subr.mxu0 0.0
    %2060 = vmatpush1.msra.mxu0 %v318
    %2061 = vmatprep.subr.mxu0 0.0
    %2062 = vmatpush1.msra.mxu0 %v319
    %2063 = vmatprep.subr.mxu0 0.0
    %2064 = vmatpush1.msra.mxu0 %v320
    %2065 = vmatprep.subr.mxu0 0.0
    %2066 = vmatpush1.msra.mxu0 %v321
    %2067 = vmatprep.subr.mxu0 0.0
    %2068 = vmatpush1.msra.mxu0 %v322
    %2069 = vmatprep.subr.mxu0 0.0
    %2070 = vmatpush1.msra.mxu0 %v323
    %2071 = vmatprep.subr.mxu0 0.0
    %2072 = vmatpush1.msra.mxu0 %v324
    %2073 = vmatprep.subr.mxu0 0.0
    %2074 = vmatpush1.msra.mxu0 %v325
    %2075 = vmatprep.subr.mxu0 0.0
    %2076 = vmatpush1.msra.mxu0 %v326
    %2077 = vmatprep.subr.mxu0 0.0
    %2078 = vmatpush1.msra.mxu0 %v327
    %2079 = vmatprep.subr.mxu0 0.0
    %2080 = vmatpush1.msra.mxu0 %v328
    %2081 = vmatprep.subr.mxu0 0.0
    %2082 = vmatpush1.msra.mxu0 %v329
    %2083 = vmatprep.subr.mxu0 0.0
    %2084 = vmatpush1.msra.mxu0 %v330
    %2085 = vmatprep.subr.mxu0 0.0
    %2086 = vmatpush1.msra.mxu0 %v331
    %2087 = vmatprep.subr.mxu0 0.0
    %2088 = vmatpush1.msra.mxu0 %v332
    %2089 = vmatprep.subr.mxu0 0.0
    %2090 = vmatpush1.msra.mxu0 %v333
    %2091 = vmatprep.subr.mxu0 0.0
    %2092 = vmatpush1.msra.mxu0 %v334
    %2093 = vmatprep.mubr.f32.mxu0 %v1958
    %2094 = vmatmul.mubr.f32.gmra.mrb[0].mxu0 %v1955
    %v2095 = vpop.f32.mrb[0].mxu0
    %v2096 = vadd.f32 %v2026, %v2095
    %v2097 = vpop.f32.mrb[0].mxu0
    %2098 = vdwg.mxu0
    %v2099 = vmax.f32 %v2096, 0.0
    %v2101 = vsel %vm462, %v2099, 0
    %2103 = vmatprep.subr.mxu0 0.0
    %2104 = vmatpush1.msra.mxu0 %v384
    %2105 = vmatprep.subr.mxu0 0.0
    %2106 = vmatpush1.msra.mxu0 %v385
    %2107 = vmatprep.subr.mxu0 0.0
    %2108 = vmatpush1.msra.mxu0 %v386
    %2109 = vmatprep.subr.mxu0 0.0
    %2110 = vmatpush1.msra.mxu0 %v387
    %2111 = vmatprep.subr.mxu0 0.0
    %2112 = vmatpush1.msra.mxu0 %v388
    %2113 = vmatprep.subr.mxu0 0.0
    %2114 = vmatpush1.msra.mxu0 %v389
    %2115 = vmatprep.subr.mxu0 0.0
    %2116 = vmatpush1.msra.mxu0 %v390
    %2117 = vmatprep.subr.mxu0 0.0
    %2118 = vmatpush1.msra.mxu0 %v391
    %2119 = vmatprep.subr.mxu0 0.0
    %2120 = vmatpush1.msra.mxu0 0.0
    %2121 = vmatprep.subr.mxu0 0.0
    %2122 = vmatpush1.msra.mxu0 0.0
    %2123 = vmatprep.subr.mxu0 0.0
    %2124 = vmatpush1.msra.mxu0 0.0
    %2125 = vmatprep.subr.mxu0 0.0
    %2126 = vmatpush1.msra.mxu0 0.0
    %2127 = vmatprep.subr.mxu0 0.0
    %2128 = vmatpush1.msra.mxu0 0.0
    %2129 = vmatprep.subr.mxu0 0.0
    %2130 = vmatpush1.msra.mxu0 0.0
    %2131 = vmatprep.subr.mxu0 0.0
    %2132 = vmatpush1.msra.mxu0 0.0
    %2133 = vmatprep.subr.mxu0 0.0
    %2134 = vmatpush1.msra.mxu0 0.0
    %2135 = vmatprep.subr.mxu0 0.0
    %2136 = vmatpush1.msra.mxu0 0.0
    %2137 = vmatprep.subr.mxu0 0.0
    %2138 = vmatpush1.msra.mxu0 0.0
    %2139 = vmatprep.subr.mxu0 0.0
    %2140 = vmatpush1.msra.mxu0 0.0
    %2141 = vmatprep.subr.mxu0 0.0
    %2142 = vmatpush1.msra.mxu0 0.0
    %2143 = vmatprep.subr.mxu0 0.0
    %2144 = vmatpush1.msra.mxu0 0.0
    %2145 = vmatprep.subr.mxu0 0.0
    %2146 = vmatpush1.msra.mxu0 0.0
    %2147 = vmatprep.subr.mxu0 0.0
    %2148 = vmatpush1.msra.mxu0 0.0
    %2149 = vmatprep.subr.mxu0 0.0
    %2150 = vmatpush1.msra.mxu0 0.0
    %2151 = vmatprep.subr.mxu0 0.0
    %2152 = vmatpush1.msra.mxu0 0.0
    %2153 = vmatprep.subr.mxu0 0.0
    %2154 = vmatpush1.msra.mxu0 0.0
    %2155 = vmatprep.subr.mxu0 0.0
    %2156 = vmatpush1.msra.mxu0 0.0
    %2157 = vmatprep.subr.mxu0 0.0
    %2158 = vmatpush1.msra.mxu0 0.0
    %2159 = vmatprep.subr.mxu0 0.0
    %2160 = vmatpush1.msra.mxu0 0.0
    %2161 = vmatprep.subr.mxu0 0.0
    %2162 = vmatpush1.msra.mxu0 0.0
    %2163 = vmatprep.subr.mxu0 0.0
    %2164 = vmatpush1.msra.mxu0 0.0
    %2165 = vmatprep.subr.mxu0 0.0
    %2166 = vmatpush1.msra.mxu0 0.0
    %2167 = vmatprep.mubr.f32.mxu0 0.0
    %2168 = vmatmul.mubr.f32.gmra.mrb[0].mxu0 %v2101
    %v2169 = vpop.f32.mrb[0].mxu0
    %v2170 = vadd.f32 0.0, %v2169
    %v2171 = vpop.f32.mrb[0].mxu0
    %2172 = vdwg.mxu0
    %v2173 = vadd.f32 %v1926, %v2170
    %v2175 = vrot.slane %v268, 4
    %2176 = vrot.lane.b32.xlu0 %v2175, 64
    %v2177 = vpop.permute.xlu0 %2176
    %v2179 = vrot.slane %v268, 6
    %2180 = vrot.lane.b32.xlu0 %v2179, 96
    %v2181 = vpop.permute.xlu0 %2180
    %v2184 = vrot.slane %v270, 4
    %2185 = vrot.lane.b32.xlu0 %v2184, 64
    %v2186 = vpop.permute.xlu0 %2185
    %v2188 = vrot.slane %v270, 6
    %2189 = vrot.lane.b32.xlu0 %v2188, 96
    %v2190 = vpop.permute.xlu0 %2189
    %v2192 = vsel %vm462, %v1953, %v2177
    %v2193 = vsel %vm464, %v2192, %v2181
    %v2194 = vsel %vm462, %v1956, %v2186
    %v2195 = vsel %vm464, %v2194, %v2190
    %v2198 = vrot.slane %v2193, 4
    %v2199 = vrot.slane %v2195, 4
    %2202 = vmatprep.subr.mxu0 0.0
    %2203 = vmatpush1.msra.mxu0 %v271
    %2204 = vmatprep.subr.mxu0 0.0
    %2205 = vmatpush1.msra.mxu0 %v272
    %2206 = vmatprep.subr.mxu0 0.0
    %2207 = vmatpush1.msra.mxu0 %v273
    %2208 = vmatprep.subr.mxu0 0.0
    %2209 = vmatpush1.msra.mxu0 %v274
    %2210 = vmatprep.subr.mxu0 0.0
    %2211 = vmatpush1.msra.mxu0 %v275
    %2212 = vmatprep.subr.mxu0 0.0
    %2213 = vmatpush1.msra.mxu0 %v276
    %2214 = vmatprep.subr.mxu0 0.0
    %2215 = vmatpush1.msra.mxu0 %v277
    %2216 = vmatprep.subr.mxu0 0.0
    %2217 = vmatpush1.msra.mxu0 %v278
    %2218 = vmatprep.subr.mxu0 0.0
    %2219 = vmatpush1.msra.mxu0 %v279
    %2220 = vmatprep.subr.mxu0 0.0
    %2221 = vmatpush1.msra.mxu0 %v280
    %2222 = vmatprep.subr.mxu0 0.0
    %2223 = vmatpush1.msra.mxu0 %v281
    %2224 = vmatprep.subr.mxu0 0.0
    %2225 = vmatpush1.msra.mxu0 %v282
    %2226 = vmatprep.subr.mxu0 0.0
    %2227 = vmatpush1.msra.mxu0 %v283
    %2228 = vmatprep.subr.mxu0 0.0
    %2229 = vmatpush1.msra.mxu0 %v284
    %2230 = vmatprep.subr.mxu0 0.0
    %2231 = vmatpush1.msra.mxu0 %v285
    %2232 = vmatprep.subr.mxu0 0.0
    %2233 = vmatpush1.msra.mxu0 %v286
    %2234 = vmatprep.subr.mxu0 0.0
    %2235 = vmatpush1.msra.mxu0 %v287
    %2236 = vmatprep.subr.mxu0 0.0
    %2237 = vmatpush1.msra.mxu0 %v288
    %2238 = vmatprep.subr.mxu0 0.0
    %2239 = vmatpush1.msra.mxu0 %v289
    %2240 = vmatprep.subr.mxu0 0.0
    %2241 = vmatpush1.msra.mxu0 %v290
    %2242 = vmatprep.subr.mxu0 0.0
    %2243 = vmatpush1.msra.mxu0 %v291
    %2244 = vmatprep.subr.mxu0 0.0
    %2245 = vmatpush1.msra.mxu0 %v292
    %2246 = vmatprep.subr.mxu0 0.0
    %2247 = vmatpush1.msra.mxu0 %v293
    %2248 = vmatprep.subr.mxu0 0.0
    %2249 = vmatpush1.msra.mxu0 %v294
    %2250 = vmatprep.subr.mxu0 0.0
    %2251 = vmatpush1.msra.mxu0 %v295
    %2252 = vmatprep.subr.mxu0 0.0
    %2253 = vmatpush1.msra.mxu0 %v296
    %2254 = vmatprep.subr.mxu0 0.0
    %2255 = vmatpush1.msra.mxu0 %v297
    %2256 = vmatprep.subr.mxu0 0.0
    %2257 = vmatpush1.msra.mxu0 %v298
    %2258 = vmatprep.subr.mxu0 0.0
    %2259 = vmatpush1.msra.mxu0 %v299
    %2260 = vmatprep.subr.mxu0 0.0
    %2261 = vmatpush1.msra.mxu0 %v300
    %2262 = vmatprep.subr.mxu0 0.0
    %2263 = vmatpush1.msra.mxu0 %v301
    %2264 = vmatprep.subr.mxu0 0.0
    %2265 = vmatpush1.msra.mxu0 %v302
    %2266 = vmatprep.mubr.f32.mxu0 %v1480
    %2267 = vmatmul.mubr.f32.gmra.mrb[0].mxu0 %v1479
    %v2268 = vpop.f32.mrb[0].mxu0
    %v2269 = vadd.f32 %v479, %v2268
    %v2270 = vpop.f32.mrb[0].mxu0
    %2271 = vdwg.mxu0
    %2272 = vmatprep.subr.mxu0 0.0
    %2273 = vmatpush1.msra.mxu0 %v303
    %2274 = vmatprep.subr.mxu0 0.0
    %2275 = vmatpush1.msra.mxu0 %v304
    %2276 = vmatprep.subr.mxu0 0.0
    %2277 = vmatpush1.msra.mxu0 %v305
    %2278 = vmatprep.subr.mxu0 0.0
    %2279 = vmatpush1.msra.mxu0 %v306
    %2280 = vmatprep.subr.mxu0 0.0
    %2281 = vmatpush1.msra.mxu0 %v307
    %2282 = vmatprep.subr.mxu0 0.0
    %2283 = vmatpush1.msra.mxu0 %v308
    %2284 = vmatprep.subr.mxu0 0.0
    %2285 = vmatpush1.msra.mxu0 %v309
    %2286 = vmatprep.subr.mxu0 0.0
    %2287 = vmatpush1.msra.mxu0 %v310
    %2288 = vmatprep.subr.mxu0 0.0
    %2289 = vmatpush1.msra.mxu0 %v311
    %2290 = vmatprep.subr.mxu0 0.0
    %2291 = vmatpush1.msra.mxu0 %v312
    %2292 = vmatprep.subr.mxu0 0.0
    %2293 = vmatpush1.msra.mxu0 %v313
    %2294 = vmatprep.subr.mxu0 0.0
    %2295 = vmatpush1.msra.mxu0 %v314
    %2296 = vmatprep.subr.mxu0 0.0
    %2297 = vmatpush1.msra.mxu0 %v315
    %2298 = vmatprep.subr.mxu0 0.0
    %2299 = vmatpush1.msra.mxu0 %v316
    %2300 = vmatprep.subr.mxu0 0.0
    %2301 = vmatpush1.msra.mxu0 %v317
    %2302 = vmatprep.subr.mxu0 0.0
    %2303 = vmatpush1.msra.mxu0 %v318
    %2304 = vmatprep.subr.mxu0 0.0
    %2305 = vmatpush1.msra.mxu0 %v319
    %2306 = vmatprep.subr.mxu0 0.0
    %2307 = vmatpush1.msra.mxu0 %v320
    %2308 = vmatprep.subr.mxu0 0.0
    %2309 = vmatpush1.msra.mxu0 %v321
    %2310 = vmatprep.subr.mxu0 0.0
    %2311 = vmatpush1.msra.mxu0 %v322
    %2312 = vmatprep.subr.mxu0 0.0
    %2313 = vmatpush1.msra.mxu0 %v323
    %2314 = vmatprep.subr.mxu0 0.0
    %2315 = vmatpush1.msra.mxu0 %v324
    %2316 = vmatprep.subr.mxu0 0.0
    %2317 = vmatpush1.msra.mxu0 %v325
    %2318 = vmatprep.subr.mxu0 0.0
    %2319 = vmatpush1.msra.mxu0 %v326
    %2320 = vmatprep.subr.mxu0 0.0
    %2321 = vmatpush1.msra.mxu0 %v327
    %2322 = vmatprep.subr.mxu0 0.0
    %2323 = vmatpush1.msra.mxu0 %v328
    %2324 = vmatprep.subr.mxu0 0.0
    %2325 = vmatpush1.msra.mxu0 %v329
    %2326 = vmatprep.subr.mxu0 0.0
    %2327 = vmatpush1.msra.mxu0 %v330
    %2328 = vmatprep.subr.mxu0 0.0
    %2329 = vmatpush1.msra.mxu0 %v331
    %2330 = vmatprep.subr.mxu0 0.0
    %2331 = vmatpush1.msra.mxu0 %v332
    %2332 = vmatprep.subr.mxu0 0.0
    %2333 = vmatpush1.msra.mxu0 %v333
    %2334 = vmatprep.subr.mxu0 0.0
    %2335 = vmatpush1.msra.mxu0 %v334
    %2336 = vmatprep.mubr.f32.mxu0 %v2199
    %2337 = vmatmul.mubr.f32.gmra.mrb[0].mxu0 %v2198
    %v2338 = vpop.f32.mrb[0].mxu0
    %v2339 = vadd.f32 %v2269, %v2338
    %v2340 = vpop.f32.mrb[0].mxu0
    %2341 = vdwg.mxu0
    %v2342 = vmax.f32 %v2339, 0.0
    %v2344 = vsel %vm462, %v2342, 0
    %2346 = vmatprep.subr.mxu0 0.0
    %2347 = vmatpush1.msra.mxu0 %v392
    %2348 = vmatprep.subr.mxu0 0.0
    %2349 = vmatpush1.msra.mxu0 %v393
    %2350 = vmatprep.subr.mxu0 0.0
    %2351 = vmatpush1.msra.mxu0 %v394
    %2352 = vmatprep.subr.mxu0 0.0
    %2353 = vmatpush1.msra.mxu0 %v395
    %2354 = vmatprep.subr.mxu0 0.0
    %2355 = vmatpush1.msra.mxu0 %v396
    %2356 = vmatprep.subr.mxu0 0.0
    %2357 = vmatpush1.msra.mxu0 %v397
    %2358 = vmatprep.subr.mxu0 0.0
    %2359 = vmatpush1.msra.mxu0 %v398
    %2360 = vmatprep.subr.mxu0 0.0
    %2361 = vmatpush1.msra.mxu0 %v399
    %2362 = vmatprep.subr.mxu0 0.0
    %2363 = vmatpush1.msra.mxu0 0.0
    %2364 = vmatprep.subr.mxu0 0.0
    %2365 = vmatpush1.msra.mxu0 0.0
    %2366 = vmatprep.subr.mxu0 0.0
    %2367 = vmatpush1.msra.mxu0 0.0
    %2368 = vmatprep.subr.mxu0 0.0
    %2369 = vmatpush1.msra.mxu0 0.0
    %2370 = vmatprep.subr.mxu0 0.0
    %2371 = vmatpush1.msra.mxu0 0.0
    %2372 = vmatprep.subr.mxu0 0.0
    %2373 = vmatpush1.msra.mxu0 0.0
    %2374 = vmatprep.subr.mxu0 0.0
    %2375 = vmatpush1.msra.mxu0 0.0
    %2376 = vmatprep.subr.mxu0 0.0
    %2377 = vmatpush1.msra.mxu0 0.0
    %2378 = vmatprep.subr.mxu0 0.0
    %2379 = vmatpush1.msra.mxu0 0.0
    %2380 = vmatprep.subr.mxu0 0.0
    %2381 = vmatpush1.msra.mxu0 0.0
    %2382 = vmatprep.subr.mxu0 0.0
    %2383 = vmatpush1.msra.mxu0 0.0
    %2384 = vmatprep.subr.mxu0 0.0
    %2385 = vmatpush1.msra.mxu0 0.0
    %2386 = vmatprep.subr.mxu0 0.0
    %2387 = vmatpush1.msra.mxu0 0.0
    %2388 = vmatprep.subr.mxu0 0.0
    %2389 = vmatpush1.msra.mxu0 0.0
    %2390 = vmatprep.subr.mxu0 0.0
    %2391 = vmatpush1.msra.mxu0 0.0
    %2392 = vmatprep.subr.mxu0 0.0
    %2393 = vmatpush1.msra.mxu0 0.0
    %2394 = vmatprep.subr.mxu0 0.0
    %2395 = vmatpush1.msra.mxu0 0.0
    %2396 = vmatprep.subr.mxu0 0.0
    %2397 = vmatpush1.msra.mxu0 0.0
    %2398 = vmatprep.subr.mxu0 0.0
    %2399 = vmatpush1.msra.mxu0 0.0
    %2400 = vmatprep.subr.mxu0 0.0
    %2401 = vmatpush1.msra.mxu0 0.0
    %2402 = vmatprep.subr.mxu0 0.0
    %2403 = vmatpush1.msra.mxu0 0.0
    %2404 = vmatprep.subr.mxu0 0.0
    %2405 = vmatpush1.msra.mxu0 0.0
    %2406 = vmatprep.subr.mxu0 0.0
    %2407 = vmatpush1.msra.mxu0 0.0
    %2408 = vmatprep.subr.mxu0 0.0
    %2409 = vmatpush1.msra.mxu0 0.0
    %2410 = vmatprep.mubr.f32.mxu0 0.0
    %2411 = vmatmul.mubr.f32.gmra.mrb[0].mxu0 %v2344
    %v2412 = vpop.f32.mrb[0].mxu0
    %v2413 = vadd.f32 0.0, %v2412
    %v2414 = vpop.f32.mrb[0].mxu0
    %2415 = vdwg.mxu0
    %v2416 = vadd.f32 %v2173, %v2413
    %v2417 = vrot.slane %v268, 2
    %2418 = vrot.lane.b32.xlu0 %v2417, 32
    %v2419 = vpop.permute.xlu0 %2418
    %v2421 = vrot.slane %v270, 2
    %2422 = vrot.lane.b32.xlu0 %v2421, 32
    %v2423 = vpop.permute.xlu0 %2422
    %v2425 = vsel %vm460, %v268, %v2419
    %v2426 = vsel %vm462, %v2425, %v2177
    %v2427 = vsel %vm464, %v2426, %v2181
    %v2428 = vsel %vm460, %v270, %v2423
    %v2429 = vsel %vm462, %v2428, %v2186
    %v2430 = vsel %vm464, %v2429, %v2190
    %2431 = vmatprep.subr.mxu0 0.0
    %2432 = vmatpush1.msra.mxu0 %v271
    %2433 = vmatprep.subr.mxu0 0.0
    %2434 = vmatpush1.msra.mxu0 %v272
    %2435 = vmatprep.subr.mxu0 0.0
    %2436 = vmatpush1.msra.mxu0 %v273
    %2437 = vmatprep.subr.mxu0 0.0
    %2438 = vmatpush1.msra.mxu0 %v274
    %2439 = vmatprep.subr.mxu0 0.0
    %2440 = vmatpush1.msra.mxu0 %v275
    %2441 = vmatprep.subr.mxu0 0.0
    %2442 = vmatpush1.msra.mxu0 %v276
    %2443 = vmatprep.subr.mxu0 0.0
    %2444 = vmatpush1.msra.mxu0 %v277
    %2445 = vmatprep.subr.mxu0 0.0
    %2446 = vmatpush1.msra.mxu0 %v278
    %2447 = vmatprep.subr.mxu0 0.0
    %2448 = vmatpush1.msra.mxu0 %v279
    %2449 = vmatprep.subr.mxu0 0.0
    %2450 = vmatpush1.msra.mxu0 %v280
    %2451 = vmatprep.subr.mxu0 0.0
    %2452 = vmatpush1.msra.mxu0 %v281
    %2453 = vmatprep.subr.mxu0 0.0
    %2454 = vmatpush1.msra.mxu0 %v282
    %2455 = vmatprep.subr.mxu0 0.0
    %2456 = vmatpush1.msra.mxu0 %v283
    %2457 = vmatprep.subr.mxu0 0.0
    %2458 = vmatpush1.msra.mxu0 %v284
    %2459 = vmatprep.subr.mxu0 0.0
    %2460 = vmatpush1.msra.mxu0 %v285
    %2461 = vmatprep.subr.mxu0 0.0
    %2462 = vmatpush1.msra.mxu0 %v286
    %2463 = vmatprep.subr.mxu0 0.0
    %2464 = vmatpush1.msra.mxu0 %v287
    %2465 = vmatprep.subr.mxu0 0.0
    %2466 = vmatpush1.msra.mxu0 %v288
    %2467 = vmatprep.subr.mxu0 0.0
    %2468 = vmatpush1.msra.mxu0 %v289
    %2469 = vmatprep.subr.mxu0 0.0
    %2470 = vmatpush1.msra.mxu0 %v290
    %2471 = vmatprep.subr.mxu0 0.0
    %2472 = vmatpush1.msra.mxu0 %v291
    %2473 = vmatprep.subr.mxu0 0.0
    %2474 = vmatpush1.msra.mxu0 %v292
    %2475 = vmatprep.subr.mxu0 0.0
    %2476 = vmatpush1.msra.mxu0 %v293
    %2477 = vmatprep.subr.mxu0 0.0
    %2478 = vmatpush1.msra.mxu0 %v294
    %2479 = vmatprep.subr.mxu0 0.0
    %2480 = vmatpush1.msra.mxu0 %v295
    %2481 = vmatprep.subr.mxu0 0.0
    %2482 = vmatpush1.msra.mxu0 %v296
    %2483 = vmatprep.subr.mxu0 0.0
    %2484 = vmatpush1.msra.mxu0 %v297
    %2485 = vmatprep.subr.mxu0 0.0
    %2486 = vmatpush1.msra.mxu0 %v298
    %2487 = vmatprep.subr.mxu0 0.0
    %2488 = vmatpush1.msra.mxu0 %v299
    %2489 = vmatprep.subr.mxu0 0.0
    %2490 = vmatpush1.msra.mxu0 %v300
    %2491 = vmatprep.subr.mxu0 0.0
    %2492 = vmatpush1.msra.mxu0 %v301
    %2493 = vmatprep.subr.mxu0 0.0
    %2494 = vmatpush1.msra.mxu0 %v302
    %2495 = vmatprep.mubr.f32.mxu0 %v1711
    %2496 = vmatmul.mubr.f32.gmra.mrb[0].mxu0 %v1708
    %v2497 = vpop.f32.mrb[0].mxu0
    %v2498 = vadd.f32 %v479, %v2497
    %v2499 = vpop.f32.mrb[0].mxu0
    %2500 = vdwg.mxu0
    %2501 = vmatprep.subr.mxu0 0.0
    %2502 = vmatpush1.msra.mxu0 %v303
    %2503 = vmatprep.subr.mxu0 0.0
    %2504 = vmatpush1.msra.mxu0 %v304
    %2505 = vmatprep.subr.mxu0 0.0
    %2506 = vmatpush1.msra.mxu0 %v305
    %2507 = vmatprep.subr.mxu0 0.0
    %2508 = vmatpush1.msra.mxu0 %v306
    %2509 = vmatprep.subr.mxu0 0.0
    %2510 = vmatpush1.msra.mxu0 %v307
    %2511 = vmatprep.subr.mxu0 0.0
    %2512 = vmatpush1.msra.mxu0 %v308
    %2513 = vmatprep.subr.mxu0 0.0
    %2514 = vmatpush1.msra.mxu0 %v309
    %2515 = vmatprep.subr.mxu0 0.0
    %2516 = vmatpush1.msra.mxu0 %v310
    %2517 = vmatprep.subr.mxu0 0.0
    %2518 = vmatpush1.msra.mxu0 %v311
    %2519 = vmatprep.subr.mxu0 0.0
    %2520 = vmatpush1.msra.mxu0 %v312
    %2521 = vmatprep.subr.mxu0 0.0
    %2522 = vmatpush1.msra.mxu0 %v313
    %2523 = vmatprep.subr.mxu0 0.0
    %2524 = vmatpush1.msra.mxu0 %v314
    %2525 = vmatprep.subr.mxu0 0.0
    %2526 = vmatpush1.msra.mxu0 %v315
    %2527 = vmatprep.subr.mxu0 0.0
    %2528 = vmatpush1.msra.mxu0 %v316
    %2529 = vmatprep.subr.mxu0 0.0
    %2530 = vmatpush1.msra.mxu0 %v317
    %2531 = vmatprep.subr.mxu0 0.0
    %2532 = vmatpush1.msra.mxu0 %v318
    %2533 = vmatprep.subr.mxu0 0.0
    %2534 = vmatpush1.msra.mxu0 %v319
    %2535 = vmatprep.subr.mxu0 0.0
    %2536 = vmatpush1.msra.mxu0 %v320
    %2537 = vmatprep.subr.mxu0 0.0
    %2538 = vmatpush1.msra.mxu0 %v321
    %2539 = vmatprep.subr.mxu0 0.0
    %2540 = vmatpush1.msra.mxu0 %v322
    %2541 = vmatprep.subr.mxu0 0.0
    %2542 = vmatpush1.msra.mxu0 %v323
    %2543 = vmatprep.subr.mxu0 0.0
    %2544 = vmatpush1.msra.mxu0 %v324
    %2545 = vmatprep.subr.mxu0 0.0
    %2546 = vmatpush1.msra.mxu0 %v325
    %2547 = vmatprep.subr.mxu0 0.0
    %2548 = vmatpush1.msra.mxu0 %v326
    %2549 = vmatprep.subr.mxu0 0.0
    %2550 = vmatpush1.msra.mxu0 %v327
    %2551 = vmatprep.subr.mxu0 0.0
    %2552 = vmatpush1.msra.mxu0 %v328
    %2553 = vmatprep.subr.mxu0 0.0
    %2554 = vmatpush1.msra.mxu0 %v329
    %2555 = vmatprep.subr.mxu0 0.0
    %2556 = vmatpush1.msra.mxu0 %v330
    %2557 = vmatprep.subr.mxu0 0.0
    %2558 = vmatpush1.msra.mxu0 %v331
    %2559 = vmatprep.subr.mxu0 0.0
    %2560 = vmatpush1.msra.mxu0 %v332
    %2561 = vmatprep.subr.mxu0 0.0
    %2562 = vmatpush1.msra.mxu0 %v333
    %2563 = vmatprep.subr.mxu0 0.0
    %2564 = vmatpush1.msra.mxu0 %v334
    %2565 = vmatprep.mubr.f32.mxu0 %v2430
    %2566 = vmatmul.mubr.f32.gmra.mrb[0].mxu0 %v2427
    %v2567 = vpop.f32.mrb[0].mxu0
    %v2568 = vadd.f32 %v2498, %v2567
    %v2569 = vpop.f32.mrb[0].mxu0
    %2570 = vdwg.mxu0
    %v2571 = vmax.f32 %v2568, 0.0
    %v2573 = vsel %vm462, %v2571, 0
    %2575 = vmatprep.subr.mxu0 0.0
    %2576 = vmatpush1.msra.mxu0 %v400
    %2577 = vmatprep.subr.mxu0 0.0
    %2578 = vmatpush1.msra.mxu0 %v401
    %2579 = vmatprep.subr.mxu0 0.0
    %2580 = vmatpush1.msra.mxu0 %v402
    %2581 = vmatprep.subr.mxu0 0.0
    %2582 = vmatpush1.msra.mxu0 %v403
    %2583 = vmatprep.subr.mxu0 0.0
    %2584 = vmatpush1.msra.mxu0 %v404
    %2585 = vmatprep.subr.mxu0 0.0
    %2586 = vmatpush1.msra.mxu0 %v405
    %2587 = vmatprep.subr.mxu0 0.0
    %2588 = vmatpush1.msra.mxu0 %v406
    %2589 = vmatprep.subr.mxu0 0.0
    %2590 = vmatpush1.msra.mxu0 %v407
    %2591 = vmatprep.subr.mxu0 0.0
    %2592 = vmatpush1.msra.mxu0 0.0
    %2593 = vmatprep.subr.mxu0 0.0
    %2594 = vmatpush1.msra.mxu0 0.0
    %2595 = vmatprep.subr.mxu0 0.0
    %2596 = vmatpush1.msra.mxu0 0.0
    %2597 = vmatprep.subr.mxu0 0.0
    %2598 = vmatpush1.msra.mxu0 0.0
    %2599 = vmatprep.subr.mxu0 0.0
    %2600 = vmatpush1.msra.mxu0 0.0
    %2601 = vmatprep.subr.mxu0 0.0
    %2602 = vmatpush1.msra.mxu0 0.0
    %2603 = vmatprep.subr.mxu0 0.0
    %2604 = vmatpush1.msra.mxu0 0.0
    %2605 = vmatprep.subr.mxu0 0.0
    %2606 = vmatpush1.msra.mxu0 0.0
    %2607 = vmatprep.subr.mxu0 0.0
    %2608 = vmatpush1.msra.mxu0 0.0
    %2609 = vmatprep.subr.mxu0 0.0
    %2610 = vmatpush1.msra.mxu0 0.0
    %2611 = vmatprep.subr.mxu0 0.0
    %2612 = vmatpush1.msra.mxu0 0.0
    %2613 = vmatprep.subr.mxu0 0.0
    %2614 = vmatpush1.msra.mxu0 0.0
    %2615 = vmatprep.subr.mxu0 0.0
    %2616 = vmatpush1.msra.mxu0 0.0
    %2617 = vmatprep.subr.mxu0 0.0
    %2618 = vmatpush1.msra.mxu0 0.0
    %2619 = vmatprep.subr.mxu0 0.0
    %2620 = vmatpush1.msra.mxu0 0.0
    %2621 = vmatprep.subr.mxu0 0.0
    %2622 = vmatpush1.msra.mxu0 0.0
    %2623 = vmatprep.subr.mxu0 0.0
    %2624 = vmatpush1.msra.mxu0 0.0
    %2625 = vmatprep.subr.mxu0 0.0
    %2626 = vmatpush1.msra.mxu0 0.0
    %2627 = vmatprep.subr.mxu0 0.0
    %2628 = vmatpush1.msra.mxu0 0.0
    %2629 = vmatprep.subr.mxu0 0.0
    %2630 = vmatpush1.msra.mxu0 0.0
    %2631 = vmatprep.subr.mxu0 0.0
    %2632 = vmatpush1.msra.mxu0 0.0
    %2633 = vmatprep.subr.mxu0 0.0
    %2634 = vmatpush1.msra.mxu0 0.0
    %2635 = vmatprep.subr.mxu0 0.0
    %2636 = vmatpush1.msra.mxu0 0.0
    %2637 = vmatprep.subr.mxu0 0.0
    %2638 = vmatpush1.msra.mxu0 0.0
    %2639 = vmatprep.mubr.f32.mxu0 0.0
    %2640 = vmatmul.mubr.f32.gmra.mrb[0].mxu0 %v2573
    %v2641 = vpop.f32.mrb[0].mxu0
    %v2642 = vadd.f32 0.0, %v2641
    %v2643 = vpop.f32.mrb[0].mxu0
    %2644 = vdwg.mxu0
    %v2645 = vadd.f32 %v2416, %v2642
    %v2646 = vld [vmem:[%s6] sm:$0x1]
    %v2648 = vlaneseq
    %v2649 = vshrl.u32 %v2648, 7
    %v2650 = vsub.s32 0, %v2649
    %v2651 = vrot.slane %v2646, %v2650
    %v2653 = vadd.f32 %v2645, %v2651
    %v2654 = vmax.f32 %v2653, 0.0
    %v2655 = vld [vmem:[%s7] sm:$0xff]
    %v2656 = vld [vmem:[%s7 + $0x8] sm:$0xff]
    %v2657 = vld [vmem:[%s7 + $0x10] sm:$0xff]
    %v2658 = vld [vmem:[%s7 + $0x18] sm:$0xff]
    %v2659 = vld [vmem:[%s7 + $0x20] sm:$0xff]
    %v2660 = vld [vmem:[%s7 + $0x28] sm:$0xff]
    %v2661 = vld [vmem:[%s7 + $0x30] sm:$0xff]
    %v2662 = vld [vmem:[%s7 + $0x38] sm:$0xff]
    %v2663 = vld [vmem:[%s7 + $0x40] sm:$0xff]
    %v2664 = vld [vmem:[%s7 + $0x48] sm:$0xff]
    %v2665 = vld [vmem:[%s7 + $0x50] sm:$0xff]
    %v2666 = vld [vmem:[%s7 + $0x58] sm:$0xff]
    %v2667 = vld [vmem:[%s7 + $0x60] sm:$0xff]
    %v2668 = vld [vmem:[%s7 + $0x68] sm:$0xff]
    %v2669 = vld [vmem:[%s7 + $0x70] sm:$0xff]
    %v2670 = vld [vmem:[%s7 + $0x78] sm:$0xff]
    %v2671 = vld [vmem:[%s7 + $0x80] sm:$0xff]
    %v2672 = vld [vmem:[%s7 + $0x88] sm:$0xff]
    %v2673 = vld [vmem:[%s7 + $0x90] sm:$0xff]
    %v2674 = vld [vmem:[%s7 + $0x98] sm:$0xff]
    %v2675 = vld [vmem:[%s7 + $0xa0] sm:$0xff]
    %v2676 = vld [vmem:[%s7 + $0xa8] sm:$0xff]
    %v2677 = vld [vmem:[%s7 + $0xb0] sm:$0xff]
    %v2678 = vld [vmem:[%s7 + $0xb8] sm:$0xff]
    %v2679 = vld [vmem:[%s7 + $0xc0] sm:$0xff]
    %v2680 = vld [vmem:[%s7 + $0xc8] sm:$0xff]
    %v2681 = vld [vmem:[%s7 + $0xd0] sm:$0xff]
    %v2682 = vld [vmem:[%s7 + $0xd8] sm:$0xff]
    %v2683 = vld [vmem:[%s7 + $0xe0] sm:$0xff]
    %v2684 = vld [vmem:[%s7 + $0xe8] sm:$0xff]
    %v2685 = vld [vmem:[%s7 + $0xf0] sm:$0xff]
    %v2686 = vld [vmem:[%s7 + $0xf8] sm:$0xff]
    %v2687 = vld [vmem:[%s7 + $0x100] sm:$0xff]
    %v2688 = vld [vmem:[%s7 + $0x108] sm:$0xff]
    %v2689 = vld [vmem:[%s7 + $0x110] sm:$0xff]
    %v2690 = vld [vmem:[%s7 + $0x118] sm:$0xff]
    %v2691 = vld [vmem:[%s7 + $0x120] sm:$0xff]
    %v2692 = vld [vmem:[%s7 + $0x128] sm:$0xff]
    %v2693 = vld [vmem:[%s7 + $0x130] sm:$0xff]
    %v2694 = vld [vmem:[%s7 + $0x138] sm:$0xff]
    %v2695 = vld [vmem:[%s7 + $0x140] sm:$0xff]
    %v2696 = vld [vmem:[%s7 + $0x148] sm:$0xff]
    %v2697 = vld [vmem:[%s7 + $0x150] sm:$0xff]
    %v2698 = vld [vmem:[%s7 + $0x158] sm:$0xff]
    %v2699 = vld [vmem:[%s7 + $0x160] sm:$0xff]
    %v2700 = vld [vmem:[%s7 + $0x168] sm:$0xff]
    %v2701 = vld [vmem:[%s7 + $0x170] sm:$0xff]
    %v2702 = vld [vmem:[%s7 + $0x178] sm:$0xff]
    %v2703 = vld [vmem:[%s7 + $0x180] sm:$0xff]
    %v2704 = vld [vmem:[%s7 + $0x188] sm:$0xff]
    %v2705 = vld [vmem:[%s7 + $0x190] sm:$0xff]
    %v2706 = vld [vmem:[%s7 + $0x198] sm:$0xff]
    %v2707 = vld [vmem:[%s7 + $0x1a0] sm:$0xff]
    %v2708 = vld [vmem:[%s7 + $0x1a8] sm:$0xff]
    %v2709 = vld [vmem:[%s7 + $0x1b0] sm:$0xff]
    %v2710 = vld [vmem:[%s7 + $0x1b8] sm:$0xff]
    %v2711 = vld [vmem:[%s7 + $0x1c0] sm:$0xff]
    %v2712 = vld [vmem:[%s7 + $0x1c8] sm:$0xff]
    %v2713 = vld [vmem:[%s7 + $0x1d0] sm:$0xff]
    %v2714 = vld [vmem:[%s7 + $0x1d8] sm:$0xff]
    %v2715 = vld [vmem:[%s7 + $0x1e0] sm:$0xff]
    %v2716 = vld [vmem:[%s7 + $0x1e8] sm:$0xff]
    %v2717 = vld [vmem:[%s7 + $0x1f0] sm:$0xff]
    %v2718 = vld [vmem:[%s7 + $0x1f8] sm:$0xff]
    %v2719 = vld [vmem:[%s8] sm:$0xff]
    %v2721 = vlaneseq
    %v2722 = vshrl.u32 %v2721, 7
    %v2723 = vsub.s32 0, %v2722
    %v2724 = vrot.slane %v2719, %v2723
    %v2725 = vlaneseq
    %v2726 = vshrl.u32 %v2725, 7
    %v2727 = vsub.s32 1, %v2726
    %v2728 = vrot.slane %v2719, %v2727
    %v2729 = vlaneseq
    %v2730 = vshrl.u32 %v2729, 7
    %v2731 = vsub.s32 2, %v2730
    %v2732 = vrot.slane %v2719, %v2731
    %v2733 = vlaneseq
    %v2734 = vshrl.u32 %v2733, 7
    %v2735 = vsub.s32 3, %v2734
    %v2736 = vrot.slane %v2719, %v2735
    %v2737 = vlaneseq
    %v2738 = vshrl.u32 %v2737, 7
    %v2739 = vsub.s32 4, %v2738
    %v2740 = vrot.slane %v2719, %v2739
    %v2741 = vlaneseq
    %v2742 = vshrl.u32 %v2741, 7
    %v2743 = vsub.s32 5, %v2742
    %v2744 = vrot.slane %v2719, %v2743
    %v2745 = vlaneseq
    %v2746 = vshrl.u32 %v2745, 7
    %v2747 = vsub.s32 6, %v2746
    %v2748 = vrot.slane %v2719, %v2747
    %v2749 = vlaneseq
    %v2750 = vshrl.u32 %v2749, 7
    %v2751 = vsub.s32 7, %v2750
    %v2752 = vrot.slane %v2719, %v2751
    %v2762 = vsel %vm462, %v2654, 0
    %2764 = vmatprep.subr.mxu0 %v2656
    %2765 = vmatpush1.msra.mxu0 %v2655
    %2766 = vmatprep.subr.mxu0 %v2664
    %2767 = vmatpush1.msra.mxu0 %v2663
    %2768 = vmatprep.subr.mxu0 %v2672
    %2769 = vmatpush1.msra.mxu0 %v2671
    %2770 = vmatprep.subr.mxu0 %v2680
    %2771 = vmatpush1.msra.mxu0 %v2679
    %2772 = vmatprep.subr.mxu0 %v2688
    %2773 = vmatpush1.msra.mxu0 %v2687
    %2774 = vmatprep.subr.mxu0 %v2696
    %2775 = vmatpush1.msra.mxu0 %v2695
    %2776 = vmatprep.subr.mxu0 %v2704
    %2777 = vmatpush1.msra.mxu0 %v2703
    %2778 = vmatprep.subr.mxu0 %v2712
    %2779 = vmatpush1.msra.mxu0 %v2711
    %2780 = vmatprep.subr.mxu0 0.0
    %2781 = vmatpush1.msra.mxu0 0.0
    %2782 = vmatprep.subr.mxu0 0.0
    %2783 = vmatpush1.msra.mxu0 0.0
    %2784 = vmatprep.subr.mxu0 0.0
    %2785 = vmatpush1.msra.mxu0 0.0
    %2786 = vmatprep.subr.mxu0 0.0
    %2787 = vmatpush1.msra.mxu0 0.0
    %2788 = vmatprep.subr.mxu0 0.0
    %2789 = vmatpush1.msra.mxu0 0.0
    %2790 = vmatprep.subr.mxu0 0.0
    %2791 = vmatpush1.msra.mxu0 0.0
    %2792 = vmatprep.subr.mxu0 0.0
    %2793 = vmatpush1.msra.mxu0 0.0
    %2794 = vmatprep.subr.mxu0 0.0
    %2795 = vmatpush1.msra.mxu0 0.0
    %2796 = vmatprep.subr.mxu0 0.0
    %2797 = vmatpush1.msra.mxu0 0.0
    %2798 = vmatprep.subr.mxu0 0.0
    %2799 = vmatpush1.msra.mxu0 0.0
    %2800 = vmatprep.subr.mxu0 0.0
    %2801 = vmatpush1.msra.mxu0 0.0
    %2802 = vmatprep.subr.mxu0 0.0
    %2803 = vmatpush1.msra.mxu0 0.0
    %2804 = vmatprep.subr.mxu0 0.0
    %2805 = vmatpush1.msra.mxu0 0.0
    %2806 = vmatprep.subr.mxu0 0.0
    %2807 = vmatpush1.msra.mxu0 0.0
    %2808 = vmatprep.subr.mxu0 0.0
    %2809 = vmatpush1.msra.mxu0 0.0
    %2810 = vmatprep.subr.mxu0 0.0
    %2811 = vmatpush1.msra.mxu0 0.0
    %2812 = vmatprep.subr.mxu0 0.0
    %2813 = vmatpush1.msra.mxu0 0.0
    %2814 = vmatprep.subr.mxu0 0.0
    %2815 = vmatpush1.msra.mxu0 0.0
    %2816 = vmatprep.subr.mxu0 0.0
    %2817 = vmatpush1.msra.mxu0 0.0
    %2818 = vmatprep.subr.mxu0 0.0
    %2819 = vmatpush1.msra.mxu0 0.0
    %2820 = vmatprep.subr.mxu0 0.0
    %2821 = vmatpush1.msra.mxu0 0.0
    %2822 = vmatprep.subr.mxu0 0.0
    %2823 = vmatpush1.msra.mxu0 0.0
    %2824 = vmatprep.subr.mxu0 0.0
    %2825 = vmatpush1.msra.mxu0 0.0
    %2826 = vmatprep.subr.mxu0 0.0
    %2827 = vmatpush1.msra.mxu0 0.0
    %2828 = vmatprep.mubr.f32.mxu0 0.0
    %2829 = vmatmul.mubr.f32.gmra.mrb[0].mxu0 %v2762
    %v2830 = vpop.f32.mrb[0].mxu0
    %v2831 = vadd.f32 %v2724, %v2830
    %v2832 = vpop.f32.mrb[0].mxu0
    %v2833 = vadd.f32 %v2728, %v2832
    %2834 = vdwg.mxu0
    %2835 = vmatprep.subr.mxu0 %v2658
    %2836 = vmatpush1.msra.mxu0 %v2657
    %2837 = vmatprep.subr.mxu0 %v2666
    %2838 = vmatpush1.msra.mxu0 %v2665
    %2839 = vmatprep.subr.mxu0 %v2674
    %2840 = vmatpush1.msra.mxu0 %v2673
    %2841 = vmatprep.subr.mxu0 %v2682
    %2842 = vmatpush1.msra.mxu0 %v2681
    %2843 = vmatprep.subr.mxu0 %v2690
    %2844 = vmatpush1.msra.mxu0 %v2689
    %2845 = vmatprep.subr.mxu0 %v2698
    %2846 = vmatpush1.msra.mxu0 %v2697
    %2847 = vmatprep.subr.mxu0 %v2706
    %2848 = vmatpush1.msra.mxu0 %v2705
    %2849 = vmatprep.subr.mxu0 %v2714
    %2850 = vmatpush1.msra.mxu0 %v2713
    %2851 = vmatprep.subr.mxu0 0.0
    %2852 = vmatpush1.msra.mxu0 0.0
    %2853 = vmatprep.subr.mxu0 0.0
    %2854 = vmatpush1.msra.mxu0 0.0
    %2855 = vmatprep.subr.mxu0 0.0
    %2856 = vmatpush1.msra.mxu0 0.0
    %2857 = vmatprep.subr.mxu0 0.0
    %2858 = vmatpush1.msra.mxu0 0.0
    %2859 = vmatprep.subr.mxu0 0.0
    %2860 = vmatpush1.msra.mxu0 0.0
    %2861 = vmatprep.subr.mxu0 0.0
    %2862 = vmatpush1.msra.mxu0 0.0
    %2863 = vmatprep.subr.mxu0 0.0
    %2864 = vmatpush1.msra.mxu0 0.0
    %2865 = vmatprep.subr.mxu0 0.0
    %2866 = vmatpush1.msra.mxu0 0.0
    %2867 = vmatprep.subr.mxu0 0.0
    %2868 = vmatpush1.msra.mxu0 0.0
    %2869 = vmatprep.subr.mxu0 0.0
    %2870 = vmatpush1.msra.mxu0 0.0
    %2871 = vmatprep.subr.mxu0 0.0
    %2872 = vmatpush1.msra.mxu0 0.0
    %2873 = vmatprep.subr.mxu0 0.0
    %2874 = vmatpush1.msra.mxu0 0.0
    %2875 = vmatprep.subr.mxu0 0.0
    %2876 = vmatpush1.msra.mxu0 0.0
    %2877 = vmatprep.subr.mxu0 0.0
    %2878 = vmatpush1.msra.mxu0 0.0
    %2879 = vmatprep.subr.mxu0 0.0
    %2880 = vmatpush1.msra.mxu0 0.0
    %2881 = vmatprep.subr.mxu0 0.0
    %2882 = vmatpush1.msra.mxu0 0.0
    %2883 = vmatprep.subr.mxu0 0.0
    %2884 = vmatpush1.msra.mxu0 0.0
    %2885 = vmatprep.subr.mxu0 0.0
    %2886 = vmatpush1.msra.mxu0 0.0
    %2887 = vmatprep.subr.mxu0 0.0
    %2888 = vmatpush1.msra.mxu0 0.0
    %2889 = vmatprep.subr.mxu0 0.0
    %2890 = vmatpush1.msra.mxu0 0.0
    %2891 = vmatprep.subr.mxu0 0.0
    %2892 = vmatpush1.msra.mxu0 0.0
    %2893 = vmatprep.subr.mxu0 0.0
    %2894 = vmatpush1.msra.mxu0 0.0
    %2895 = vmatprep.subr.mxu0 0.0
    %2896 = vmatpush1.msra.mxu0 0.0
    %2897 = vmatprep.subr.mxu0 0.0
    %2898 = vmatpush1.msra.mxu0 0.0
    %2899 = vmatprep.mubr.f32.mxu0 0.0
    %2900 = vmatmul.mubr.f32.gmra.mrb[0].mxu0 %v2762
    %v2901 = vpop.f32.mrb[0].mxu0
    %v2902 = vadd.f32 %v2732, %v2901
    %v2903 = vpop.f32.mrb[0].mxu0
    %v2904 = vadd.f32 %v2736, %v2903
    %2905 = vdwg.mxu0
    %2906 = vmatprep.subr.mxu0 %v2660
    %2907 = vmatpush1.msra.mxu0 %v2659
    %2908 = vmatprep.subr.mxu0 %v2668
    %2909 = vmatpush1.msra.mxu0 %v2667
    %2910 = vmatprep.subr.mxu0 %v2676
    %2911 = vmatpush1.msra.mxu0 %v2675
    %2912 = vmatprep.subr.mxu0 %v2684
    %2913 = vmatpush1.msra.mxu0 %v2683
    %2914 = vmatprep.subr.mxu0 %v2692
    %2915 = vmatpush1.msra.mxu0 %v2691
    %2916 = vmatprep.subr.mxu0 %v2700
    %2917 = vmatpush1.msra.mxu0 %v2699
    %2918 = vmatprep.subr.mxu0 %v2708
    %2919 = vmatpush1.msra.mxu0 %v2707
    %2920 = vmatprep.subr.mxu0 %v2716
    %2921 = vmatpush1.msra.mxu0 %v2715
    %2922 = vmatprep.subr.mxu0 0.0
    %2923 = vmatpush1.msra.mxu0 0.0
    %2924 = vmatprep.subr.mxu0 0.0
    %2925 = vmatpush1.msra.mxu0 0.0
    %2926 = vmatprep.subr.mxu0 0.0
    %2927 = vmatpush1.msra.mxu0 0.0
    %2928 = vmatprep.subr.mxu0 0.0
    %2929 = vmatpush1.msra.mxu0 0.0
    %2930 = vmatprep.subr.mxu0 0.0
    %2931 = vmatpush1.msra.mxu0 0.0
    %2932 = vmatprep.subr.mxu0 0.0
    %2933 = vmatpush1.msra.mxu0 0.0
    %2934 = vmatprep.subr.mxu0 0.0
    %2935 = vmatpush1.msra.mxu0 0.0
    %2936 = vmatprep.subr.mxu0 0.0
    %2937 = vmatpush1.msra.mxu0 0.0
    %2938 = vmatprep.subr.mxu0 0.0
    %2939 = vmatpush1.msra.mxu0 0.0
    %2940 = vmatprep.subr.mxu0 0.0
    %2941 = vmatpush1.msra.mxu0 0.0
    %2942 = vmatprep.subr.mxu0 0.0
    %2943 = vmatpush1.msra.mxu0 0.0
    %2944 = vmatprep.subr.mxu0 0.0
    %2945 = vmatpush1.msra.mxu0 0.0
    %2946 = vmatprep.subr.mxu0 0.0
    %2947 = vmatpush1.msra.mxu0 0.0
    %2948 = vmatprep.subr.mxu0 0.0
    %2949 = vmatpush1.msra.mxu0 0.0
    %2950 = vmatprep.subr.mxu0 0.0
    %2951 = vmatpush1.msra.mxu0 0.0
    %2952 = vmatprep.subr.mxu0 0.0
    %2953 = vmatpush1.msra.mxu0 0.0
    %2954 = vmatprep.subr.mxu0 0.0
    %2955 = vmatpush1.msra.mxu0 0.0
    %2956 = vmatprep.subr.mxu0 0.0
    %2957 = vmatpush1.msra.mxu0 0.0
    %2958 = vmatprep.subr.mxu0 0.0
    %2959 = vmatpush1.msra.mxu0 0.0
    %2960 = vmatprep.subr.mxu0 0.0
    %2961 = vmatpush1.msra.mxu0 0.0
    %2962 = vmatprep.subr.mxu0 0.0
    %2963 = vmatpush1.msra.mxu0 0.0
    %2964 = vmatprep.subr.mxu0 0.0
    %2965 = vmatpush1.msra.mxu0 0.0
    %2966 = vmatprep.subr.mxu0 0.0
    %2967 = vmatpush1.msra.mxu0 0.0
    %2968 = vmatprep.subr.mxu0 0.0
    %2969 = vmatpush1.msra.mxu0 0.0
    %2970 = vmatprep.mubr.f32.mxu0 0.0
    %2971 = vmatmul.mubr.f32.gmra.mrb[0].mxu0 %v2762
    %v2972 = vpop.f32.mrb[0].mxu0
    %v2973 = vadd.f32 %v2740, %v2972
    %v2974 = vpop.f32.mrb[0].mxu0
    %v2975 = vadd.f32 %v2744, %v2974
    %2976 = vdwg.mxu0
    %2977 = vmatprep.subr.mxu0 %v2662
    %2978 = vmatpush1.msra.mxu0 %v2661
    %2979 = vmatprep.subr.mxu0 %v2670
    %2980 = vmatpush1.msra.mxu0 %v2669
    %2981 = vmatprep.subr.mxu0 %v2678
    %2982 = vmatpush1.msra.mxu0 %v2677
    %2983 = vmatprep.subr.mxu0 %v2686
    %2984 = vmatpush1.msra.mxu0 %v2685
    %2985 = vmatprep.subr.mxu0 %v2694
    %2986 = vmatpush1.msra.mxu0 %v2693
    %2987 = vmatprep.subr.mxu0 %v2702
    %2988 = vmatpush1.msra.mxu0 %v2701
    %2989 = vmatprep.subr.mxu0 %v2710
    %2990 = vmatpush1.msra.mxu0 %v2709
    %2991 = vmatprep.subr.mxu0 %v2718
    %2992 = vmatpush1.msra.mxu0 %v2717
    %2993 = vmatprep.subr.mxu0 0.0
    %2994 = vmatpush1.msra.mxu0 0.0
    %2995 = vmatprep.subr.mxu0 0.0
    %2996 = vmatpush1.msra.mxu0 0.0
    %2997 = vmatprep.subr.mxu0 0.0
    %2998 = vmatpush1.msra.mxu0 0.0
    %2999 = vmatprep.subr.mxu0 0.0
    %3000 = vmatpush1.msra.mxu0 0.0
    %3001 = vmatprep.subr.mxu0 0.0
    %3002 = vmatpush1.msra.mxu0 0.0
    %3003 = vmatprep.subr.mxu0 0.0
    %3004 = vmatpush1.msra.mxu0 0.0
    %3005 = vmatprep.subr.mxu0 0.0
    %3006 = vmatpush1.msra.mxu0 0.0
    %3007 = vmatprep.subr.mxu0 0.0
    %3008 = vmatpush1.msra.mxu0 0.0
    %3009 = vmatprep.subr.mxu0 0.0
    %3010 = vmatpush1.msra.mxu0 0.0
    %3011 = vmatprep.subr.mxu0 0.0
    %3012 = vmatpush1.msra.mxu0 0.0
    %3013 = vmatprep.subr.mxu0 0.0
    %3014 = vmatpush1.msra.mxu0 0.0
    %3015 = vmatprep.subr.mxu0 0.0
    %3016 = vmatpush1.msra.mxu0 0.0
    %3017 = vmatprep.subr.mxu0 0.0
    %3018 = vmatpush1.msra.mxu0 0.0
    %3019 = vmatprep.subr.mxu0 0.0
    %3020 = vmatpush1.msra.mxu0 0.0
    %3021 = vmatprep.subr.mxu0 0.0
    %3022 = vmatpush1.msra.mxu0 0.0
    %3023 = vmatprep.subr.mxu0 0.0
    %3024 = vmatpush1.msra.mxu0 0.0
    %3025 = vmatprep.subr.mxu0 0.0
    %3026 = vmatpush1.msra.mxu0 0.0
    %3027 = vmatprep.subr.mxu0 0.0
    %3028 = vmatpush1.msra.mxu0 0.0
    %3029 = vmatprep.subr.mxu0 0.0
    %3030 = vmatpush1.msra.mxu0 0.0
    %3031 = vmatprep.subr.mxu0 0.0
    %3032 = vmatpush1.msra.mxu0 0.0
    %3033 = vmatprep.subr.mxu0 0.0
    %3034 = vmatpush1.msra.mxu0 0.0
    %3035 = vmatprep.subr.mxu0 0.0
    %3036 = vmatpush1.msra.mxu0 0.0
    %3037 = vmatprep.subr.mxu0 0.0
    %3038 = vmatpush1.msra.mxu0 0.0
    %3039 = vmatprep.subr.mxu0 0.0
    %3040 = vmatpush1.msra.mxu0 0.0
    %3041 = vmatprep.mubr.f32.mxu0 0.0
    %3042 = vmatmul.mubr.f32.gmra.mrb[0].mxu0 %v2762
    %v3043 = vpop.f32.mrb[0].mxu0
    %v3044 = vadd.f32 %v2748, %v3043
    %v3045 = vpop.f32.mrb[0].mxu0
    %v3046 = vadd.f32 %v2752, %v3045
    %3047 = vdwg.mxu0
    %v3048 = vmax.f32 %v2831, 0.0
    %v3049 = vmax.f32 %v2833, 0.0
    %v3050 = vmax.f32 %v2902, 0.0
    %v3051 = vmax.f32 %v2904, 0.0
    %v3052 = vmax.f32 %v2973, 0.0
    %v3053 = vmax.f32 %v2975, 0.0
    %v3054 = vmax.f32 %v3044, 0.0
    %v3055 = vmax.f32 %v3046, 0.0
    %v3056 = vld [vmem:[%s9] sm:$0xff]
    %v3057 = vld [vmem:[%s9 + $0x8] sm:$0xff]
    %v3058 = vld [vmem:[%s9 + $0x10] sm:$0xff]
    %v3059 = vld [vmem:[%s9 + $0x18] sm:$0xff]
    %v3060 = vld [vmem:[%s9 + $0x20] sm:$0xff]
    %v3061 = vld [vmem:[%s9 + $0x28] sm:$0xff]
    %v3062 = vld [vmem:[%s9 + $0x30] sm:$0xff]
    %v3063 = vld [vmem:[%s9 + $0x38] sm:$0xff]
    %v3064 = vld [vmem:[%s9 + $0x40] sm:$0xff]
    %v3065 = vld [vmem:[%s9 + $0x48] sm:$0xff]
    %v3066 = vld [vmem:[%s9 + $0x50] sm:$0xff]
    %v3067 = vld [vmem:[%s9 + $0x58] sm:$0xff]
    %v3068 = vld [vmem:[%s9 + $0x60] sm:$0xff]
    %v3069 = vld [vmem:[%s9 + $0x68] sm:$0xff]
    %v3070 = vld [vmem:[%s9 + $0x70] sm:$0xff]
    %v3071 = vld [vmem:[%s9 + $0x78] sm:$0xff]
    %v3072 = vld [vmem:[%s9 + $0x80] sm:$0xff]
    %v3073 = vld [vmem:[%s9 + $0x88] sm:$0xff]
    %v3074 = vld [vmem:[%s9 + $0x90] sm:$0xff]
    %v3075 = vld [vmem:[%s9 + $0x98] sm:$0xff]
    %v3076 = vld [vmem:[%s9 + $0xa0] sm:$0xff]
    %v3077 = vld [vmem:[%s9 + $0xa8] sm:$0xff]
    %v3078 = vld [vmem:[%s9 + $0xb0] sm:$0xff]
    %v3079 = vld [vmem:[%s9 + $0xb8] sm:$0xff]
    %v3080 = vld [vmem:[%s9 + $0xc0] sm:$0xff]
    %v3081 = vld [vmem:[%s9 + $0xc8] sm:$0xff]
    %v3082 = vld [vmem:[%s9 + $0xd0] sm:$0xff]
    %v3083 = vld [vmem:[%s9 + $0xd8] sm:$0xff]
    %v3084 = vld [vmem:[%s9 + $0xe0] sm:$0xff]
    %v3085 = vld [vmem:[%s9 + $0xe8] sm:$0xff]
    %v3086 = vld [vmem:[%s9 + $0xf0] sm:$0xff]
    %v3087 = vld [vmem:[%s9 + $0xf8] sm:$0xff]
    %v3088 = vld [vmem:[%s9 + $0x100] sm:$0xff]
    %v3089 = vld [vmem:[%s9 + $0x108] sm:$0xff]
    %v3090 = vld [vmem:[%s9 + $0x110] sm:$0xff]
    %v3091 = vld [vmem:[%s9 + $0x118] sm:$0xff]
    %v3092 = vld [vmem:[%s9 + $0x120] sm:$0xff]
    %v3093 = vld [vmem:[%s9 + $0x128] sm:$0xff]
    %v3094 = vld [vmem:[%s9 + $0x130] sm:$0xff]
    %v3095 = vld [vmem:[%s9 + $0x138] sm:$0xff]
    %v3096 = vld [vmem:[%s9 + $0x140] sm:$0xff]
    %v3097 = vld [vmem:[%s9 + $0x148] sm:$0xff]
    %v3098 = vld [vmem:[%s9 + $0x150] sm:$0xff]
    %v3099 = vld [vmem:[%s9 + $0x158] sm:$0xff]
    %v3100 = vld [vmem:[%s9 + $0x160] sm:$0xff]
    %v3101 = vld [vmem:[%s9 + $0x168] sm:$0xff]
    %v3102 = vld [vmem:[%s9 + $0x170] sm:$0xff]
    %v3103 = vld [vmem:[%s9 + $0x178] sm:$0xff]
    %v3104 = vld [vmem:[%s9 + $0x180] sm:$0xff]
    %v3105 = vld [vmem:[%s9 + $0x188] sm:$0xff]
    %v3106 = vld [vmem:[%s9 + $0x190] sm:$0xff]
    %v3107 = vld [vmem:[%s9 + $0x198] sm:$0xff]
    %v3108 = vld [vmem:[%s9 + $0x1a0] sm:$0xff]
    %v3109 = vld [vmem:[%s9 + $0x1a8] sm:$0xff]
    %v3110 = vld [vmem:[%s9 + $0x1b0] sm:$0xff]
    %v3111 = vld [vmem:[%s9 + $0x1b8] sm:$0xff]
    %v3112 = vld [vmem:[%s9 + $0x1c0] sm:$0xff]
    %v3113 = vld [vmem:[%s9 + $0x1c8] sm:$0xff]
    %v3114 = vld [vmem:[%s9 + $0x1d0] sm:$0xff]
    %v3115 = vld [vmem:[%s9 + $0x1d8] sm:$0xff]
    %v3116 = vld [vmem:[%s9 + $0x1e0] sm:$0xff]
    %v3117 = vld [vmem:[%s9 + $0x1e8] sm:$0xff]
    %v3118 = vld [vmem:[%s9 + $0x1f0] sm:$0xff]
    %v3119 = vld [vmem:[%s9 + $0x1f8] sm:$0xff]
    %v3120 = vld [vmem:[%s9 + $0x200] sm:$0xff]
    %v3121 = vld [vmem:[%s9 + $0x208] sm:$0xff]
    %v3122 = vld [vmem:[%s9 + $0x210] sm:$0xff]
    %v3123 = vld [vmem:[%s9 + $0x218] sm:$0xff]
    %v3124 = vld [vmem:[%s9 + $0x220] sm:$0xff]
    %v3125 = vld [vmem:[%s9 + $0x228] sm:$0xff]
    %v3126 = vld [vmem:[%s9 + $0x230] sm:$0xff]
    %v3127 = vld [vmem:[%s9 + $0x238] sm:$0xff]
    %v3128 = vld [vmem:[%s9 + $0x240] sm:$0xff]
    %v3129 = vld [vmem:[%s9 + $0x248] sm:$0xff]
    %v3130 = vld [vmem:[%s9 + $0x250] sm:$0xff]
    %v3131 = vld [vmem:[%s9 + $0x258] sm:$0xff]
    %v3132 = vld [vmem:[%s9 + $0x260] sm:$0xff]
    %v3133 = vld [vmem:[%s9 + $0x268] sm:$0xff]
    %v3134 = vld [vmem:[%s9 + $0x270] sm:$0xff]
    %v3135 = vld [vmem:[%s9 + $0x278] sm:$0xff]
    %v3136 = vld [vmem:[%s9 + $0x280] sm:$0xff]
    %v3137 = vld [vmem:[%s9 + $0x288] sm:$0xff]
    %v3138 = vld [vmem:[%s9 + $0x290] sm:$0xff]
    %v3139 = vld [vmem:[%s9 + $0x298] sm:$0xff]
    %v3140 = vld [vmem:[%s9 + $0x2a0] sm:$0xff]
    %v3141 = vld [vmem:[%s9 + $0x2a8] sm:$0xff]
    %v3142 = vld [vmem:[%s9 + $0x2b0] sm:$0xff]
    %v3143 = vld [vmem:[%s9 + $0x2b8] sm:$0xff]
    %v3144 = vld [vmem:[%s9 + $0x2c0] sm:$0xff]
    %v3145 = vld [vmem:[%s9 + $0x2c8] sm:$0xff]
    %v3146 = vld [vmem:[%s9 + $0x2d0] sm:$0xff]
    %v3147 = vld [vmem:[%s9 + $0x2d8] sm:$0xff]
    %v3148 = vld [vmem:[%s9 + $0x2e0] sm:$0xff]
    %v3149 = vld [vmem:[%s9 + $0x2e8] sm:$0xff]
    %v3150 = vld [vmem:[%s9 + $0x2f0] sm:$0xff]
    %v3151 = vld [vmem:[%s9 + $0x2f8] sm:$0xff]
    %v3152 = vld [vmem:[%s9 + $0x300] sm:$0xff]
    %v3153 = vld [vmem:[%s9 + $0x308] sm:$0xff]
    %v3154 = vld [vmem:[%s9 + $0x310] sm:$0xff]
    %v3155 = vld [vmem:[%s9 + $0x318] sm:$0xff]
    %v3156 = vld [vmem:[%s9 + $0x320] sm:$0xff]
    %v3157 = vld [vmem:[%s9 + $0x328] sm:$0xff]
    %v3158 = vld [vmem:[%s9 + $0x330] sm:$0xff]
    %v3159 = vld [vmem:[%s9 + $0x338] sm:$0xff]
    %v3160 = vld [vmem:[%s9 + $0x340] sm:$0xff]
    %v3161 = vld [vmem:[%s9 + $0x348] sm:$0xff]
    %v3162 = vld [vmem:[%s9 + $0x350] sm:$0xff]
    %v3163 = vld [vmem:[%s9 + $0x358] sm:$0xff]
    %v3164 = vld [vmem:[%s9 + $0x360] sm:$0xff]
    %v3165 = vld [vmem:[%s9 + $0x368] sm:$0xff]
    %v3166 = vld [vmem:[%s9 + $0x370] sm:$0xff]
    %v3167 = vld [vmem:[%s9 + $0x378] sm:$0xff]
    %v3168 = vld [vmem:[%s9 + $0x380] sm:$0xff]
    %v3169 = vld [vmem:[%s9 + $0x388] sm:$0xff]
    %v3170 = vld [vmem:[%s9 + $0x390] sm:$0xff]
    %v3171 = vld [vmem:[%s9 + $0x398] sm:$0xff]
    %v3172 = vld [vmem:[%s9 + $0x3a0] sm:$0xff]
    %v3173 = vld [vmem:[%s9 + $0x3a8] sm:$0xff]
    %v3174 = vld [vmem:[%s9 + $0x3b0] sm:$0xff]
    %v3175 = vld [vmem:[%s9 + $0x3b8] sm:$0xff]
    %v3176 = vld [vmem:[%s9 + $0x3c0] sm:$0xff]
    %v3177 = vld [vmem:[%s9 + $0x3c8] sm:$0xff]
    %v3178 = vld [vmem:[%s9 + $0x3d0] sm:$0xff]
    %v3179 = vld [vmem:[%s9 + $0x3d8] sm:$0xff]
    %v3180 = vld [vmem:[%s9 + $0x3e0] sm:$0xff]
    %v3181 = vld [vmem:[%s9 + $0x3e8] sm:$0xff]
    %v3182 = vld [vmem:[%s9 + $0x3f0] sm:$0xff]
    %v3183 = vld [vmem:[%s9 + $0x3f8] sm:$0xff]
    %v3184 = vld [vmem:[%s10] sm:$0x1]
    %v3186 = vlaneseq
    %v3187 = vshrl.u32 %v3186, 7
    %v3188 = vsub.s32 0, %v3187
    %v3189 = vrot.slane %v3184, %v3188
    %3191 = vmatprep.subr.mxu0 0.0
    %3192 = vmatpush1.msra.mxu0 %v3056
    %3193 = vmatprep.subr.mxu0 0.0
    %3194 = vmatpush1.msra.mxu0 %v3057
    %3195 = vmatprep.subr.mxu0 0.0
    %3196 = vmatpush1.msra.mxu0 %v3058
    %3197 = vmatprep.subr.mxu0 0.0
    %3198 = vmatpush1.msra.mxu0 %v3059
    %3199 = vmatprep.subr.mxu0 0.0
    %3200 = vmatpush1.msra.mxu0 %v3060
    %3201 = vmatprep.subr.mxu0 0.0
    %3202 = vmatpush1.msra.mxu0 %v3061
    %3203 = vmatprep.subr.mxu0 0.0
    %3204 = vmatpush1.msra.mxu0 %v3062
    %3205 = vmatprep.subr.mxu0 0.0
    %3206 = vmatpush1.msra.mxu0 %v3063
    %3207 = vmatprep.subr.mxu0 0.0
    %3208 = vmatpush1.msra.mxu0 %v3064
    %3209 = vmatprep.subr.mxu0 0.0
    %3210 = vmatpush1.msra.mxu0 %v3065
    %3211 = vmatprep.subr.mxu0 0.0
    %3212 = vmatpush1.msra.mxu0 %v3066
    %3213 = vmatprep.subr.mxu0 0.0
    %3214 = vmatpush1.msra.mxu0 %v3067
    %3215 = vmatprep.subr.mxu0 0.0
    %3216 = vmatpush1.msra.mxu0 %v3068
    %3217 = vmatprep.subr.mxu0 0.0
    %3218 = vmatpush1.msra.mxu0 %v3069
    %3219 = vmatprep.subr.mxu0 0.0
    %3220 = vmatpush1.msra.mxu0 %v3070
    %3221 = vmatprep.subr.mxu0 0.0
    %3222 = vmatpush1.msra.mxu0 %v3071
    %3223 = vmatprep.subr.mxu0 0.0
    %3224 = vmatpush1.msra.mxu0 %v3072
    %3225 = vmatprep.subr.mxu0 0.0
    %3226 = vmatpush1.msra.mxu0 %v3073
    %3227 = vmatprep.subr.mxu0 0.0
    %3228 = vmatpush1.msra.mxu0 %v3074
    %3229 = vmatprep.subr.mxu0 0.0
    %3230 = vmatpush1.msra.mxu0 %v3075
    %3231 = vmatprep.subr.mxu0 0.0
    %3232 = vmatpush1.msra.mxu0 %v3076
    %3233 = vmatprep.subr.mxu0 0.0
    %3234 = vmatpush1.msra.mxu0 %v3077
    %3235 = vmatprep.subr.mxu0 0.0
    %3236 = vmatpush1.msra.mxu0 %v3078
    %3237 = vmatprep.subr.mxu0 0.0
    %3238 = vmatpush1.msra.mxu0 %v3079
    %3239 = vmatprep.subr.mxu0 0.0
    %3240 = vmatpush1.msra.mxu0 %v3080
    %3241 = vmatprep.subr.mxu0 0.0
    %3242 = vmatpush1.msra.mxu0 %v3081
    %3243 = vmatprep.subr.mxu0 0.0
    %3244 = vmatpush1.msra.mxu0 %v3082
    %3245 = vmatprep.subr.mxu0 0.0
    %3246 = vmatpush1.msra.mxu0 %v3083
    %3247 = vmatprep.subr.mxu0 0.0
    %3248 = vmatpush1.msra.mxu0 %v3084
    %3249 = vmatprep.subr.mxu0 0.0
    %3250 = vmatpush1.msra.mxu0 %v3085
    %3251 = vmatprep.subr.mxu0 0.0
    %3252 = vmatpush1.msra.mxu0 %v3086
    %3253 = vmatprep.subr.mxu0 0.0
    %3254 = vmatpush1.msra.mxu0 %v3087
    %3255 = vmatprep.mubr.f32.mxu0 %v3049
    %3256 = vmatmul.mubr.f32.gmra.mrb[0].mxu0 %v3048
    %v3257 = vpop.f32.mrb[0].mxu0
    %v3258 = vadd.f32 %v3189, %v3257
    %v3259 = vpop.f32.mrb[0].mxu0
    %3260 = vdwg.mxu0
    %3261 = vmatprep.subr.mxu0 0.0
    %3262 = vmatpush1.msra.mxu0 %v3088
    %3263 = vmatprep.subr.mxu0 0.0
    %3264 = vmatpush1.msra.mxu0 %v3089
    %3265 = vmatprep.subr.mxu0 0.0
    %3266 = vmatpush1.msra.mxu0 %v3090
    %3267 = vmatprep.subr.mxu0 0.0
    %3268 = vmatpush1.msra.mxu0 %v3091
    %3269 = vmatprep.subr.mxu0 0.0
    %3270 = vmatpush1.msra.mxu0 %v3092
    %3271 = vmatprep.subr.mxu0 0.0
    %3272 = vmatpush1.msra.mxu0 %v3093
    %3273 = vmatprep.subr.mxu0 0.0
    %3274 = vmatpush1.msra.mxu0 %v3094
    %3275 = vmatprep.subr.mxu0 0.0
    %3276 = vmatpush1.msra.mxu0 %v3095
    %3277 = vmatprep.subr.mxu0 0.0
    %3278 = vmatpush1.msra.mxu0 %v3096
    %3279 = vmatprep.subr.mxu0 0.0
    %3280 = vmatpush1.msra.mxu0 %v3097
    %3281 = vmatprep.subr.mxu0 0.0
    %3282 = vmatpush1.msra.mxu0 %v3098
    %3283 = vmatprep.subr.mxu0 0.0
    %3284 = vmatpush1.msra.mxu0 %v3099
    %3285 = vmatprep.subr.mxu0 0.0
    %3286 = vmatpush1.msra.mxu0 %v3100
    %3287 = vmatprep.subr.mxu0 0.0
    %3288 = vmatpush1.msra.mxu0 %v3101
    %3289 = vmatprep.subr.mxu0 0.0
    %3290 = vmatpush1.msra.mxu0 %v3102
    %3291 = vmatprep.subr.mxu0 0.0
    %3292 = vmatpush1.msra.mxu0 %v3103
    %3293 = vmatprep.subr.mxu0 0.0
    %3294 = vmatpush1.msra.mxu0 %v3104
    %3295 = vmatprep.subr.mxu0 0.0
    %3296 = vmatpush1.msra.mxu0 %v3105
    %3297 = vmatprep.subr.mxu0 0.0
    %3298 = vmatpush1.msra.mxu0 %v3106
    %3299 = vmatprep.subr.mxu0 0.0
    %3300 = vmatpush1.msra.mxu0 %v3107
    %3301 = vmatprep.subr.mxu0 0.0
    %3302 = vmatpush1.msra.mxu0 %v3108
    %3303 = vmatprep.subr.mxu0 0.0
    %3304 = vmatpush1.msra.mxu0 %v3109
    %3305 = vmatprep.subr.mxu0 0.0
    %3306 = vmatpush1.msra.mxu0 %v3110
    %3307 = vmatprep.subr.mxu0 0.0
    %3308 = vmatpush1.msra.mxu0 %v3111
    %3309 = vmatprep.subr.mxu0 0.0
    %3310 = vmatpush1.msra.mxu0 %v3112
    %3311 = vmatprep.subr.mxu0 0.0
    %3312 = vmatpush1.msra.mxu0 %v3113
    %3313 = vmatprep.subr.mxu0 0.0
    %3314 = vmatpush1.msra.mxu0 %v3114
    %3315 = vmatprep.subr.mxu0 0.0
    %3316 = vmatpush1.msra.mxu0 %v3115
    %3317 = vmatprep.subr.mxu0 0.0
    %3318 = vmatpush1.msra.mxu0 %v3116
    %3319 = vmatprep.subr.mxu0 0.0
    %3320 = vmatpush1.msra.mxu0 %v3117
    %3321 = vmatprep.subr.mxu0 0.0
    %3322 = vmatpush1.msra.mxu0 %v3118
    %3323 = vmatprep.subr.mxu0 0.0
    %3324 = vmatpush1.msra.mxu0 %v3119
    %3325 = vmatprep.mubr.f32.mxu0 %v3051
    %3326 = vmatmul.mubr.f32.gmra.mrb[0].mxu0 %v3050
    %v3327 = vpop.f32.mrb[0].mxu0
    %v3328 = vadd.f32 %v3258, %v3327
    %v3329 = vpop.f32.mrb[0].mxu0
    %3330 = vdwg.mxu0
    %3331 = vmatprep.subr.mxu0 0.0
    %3332 = vmatpush1.msra.mxu0 %v3120
    %3333 = vmatprep.subr.mxu0 0.0
    %3334 = vmatpush1.msra.mxu0 %v3121
    %3335 = vmatprep.subr.mxu0 0.0
    %3336 = vmatpush1.msra.mxu0 %v3122
    %3337 = vmatprep.subr.mxu0 0.0
    %3338 = vmatpush1.msra.mxu0 %v3123
    %3339 = vmatprep.subr.mxu0 0.0
    %3340 = vmatpush1.msra.mxu0 %v3124
    %3341 = vmatprep.subr.mxu0 0.0
    %3342 = vmatpush1.msra.mxu0 %v3125
    %3343 = vmatprep.subr.mxu0 0.0
    %3344 = vmatpush1.msra.mxu0 %v3126
    %3345 = vmatprep.subr.mxu0 0.0
    %3346 = vmatpush1.msra.mxu0 %v3127
    %3347 = vmatprep.subr.mxu0 0.0
    %3348 = vmatpush1.msra.mxu0 %v3128
    %3349 = vmatprep.subr.mxu0 0.0
    %3350 = vmatpush1.msra.mxu0 %v3129
    %3351 = vmatprep.subr.mxu0 0.0
    %3352 = vmatpush1.msra.mxu0 %v3130
    %3353 = vmatprep.subr.mxu0 0.0
    %3354 = vmatpush1.msra.mxu0 %v3131
    %3355 = vmatprep.subr.mxu0 0.0
    %3356 = vmatpush1.msra.mxu0 %v3132
    %3357 = vmatprep.subr.mxu0 0.0
    %3358 = vmatpush1.msra.mxu0 %v3133
    %3359 = vmatprep.subr.mxu0 0.0
    %3360 = vmatpush1.msra.mxu0 %v3134
    %3361 = vmatprep.subr.mxu0 0.0
    %3362 = vmatpush1.msra.mxu0 %v3135
    %3363 = vmatprep.subr.mxu0 0.0
    %3364 = vmatpush1.msra.mxu0 %v3136
    %3365 = vmatprep.subr.mxu0 0.0
    %3366 = vmatpush1.msra.mxu0 %v3137
    %3367 = vmatprep.subr.mxu0 0.0
    %3368 = vmatpush1.msra.mxu0 %v3138
    %3369 = vmatprep.subr.mxu0 0.0
    %3370 = vmatpush1.msra.mxu0 %v3139
    %3371 = vmatprep.subr.mxu0 0.0
    %3372 = vmatpush1.msra.mxu0 %v3140
    %3373 = vmatprep.subr.mxu0 0.0
    %3374 = vmatpush1.msra.mxu0 %v3141
    %3375 = vmatprep.subr.mxu0 0.0
    %3376 = vmatpush1.msra.mxu0 %v3142
    %3377 = vmatprep.subr.mxu0 0.0
    %3378 = vmatpush1.msra.mxu0 %v3143
    %3379 = vmatprep.subr.mxu0 0.0
    %3380 = vmatpush1.msra.mxu0 %v3144
    %3381 = vmatprep.subr.mxu0 0.0
    %3382 = vmatpush1.msra.mxu0 %v3145
    %3383 = vmatprep.subr.mxu0 0.0
    %3384 = vmatpush1.msra.mxu0 %v3146
    %3385 = vmatprep.subr.mxu0 0.0
    %3386 = vmatpush1.msra.mxu0 %v3147
    %3387 = vmatprep.subr.mxu0 0.0
    %3388 = vmatpush1.msra.mxu0 %v3148
    %3389 = vmatprep.subr.mxu0 0.0
    %3390 = vmatpush1.msra.mxu0 %v3149
    %3391 = vmatprep.subr.mxu0 0.0
    %3392 = vmatpush1.msra.mxu0 %v3150
    %3393 = vmatprep.subr.mxu0 0.0
    %3394 = vmatpush1.msra.mxu0 %v3151
    %3395 = vmatprep.mubr.f32.mxu0 %v3053
    %3396 = vmatmul.mubr.f32.gmra.mrb[0].mxu0 %v3052
    %v3397 = vpop.f32.mrb[0].mxu0
    %v3398 = vadd.f32 %v3328, %v3397
    %v3399 = vpop.f32.mrb[0].mxu0
    %3400 = vdwg.mxu0
    %3401 = vmatprep.subr.mxu0 0.0
    %3402 = vmatpush1.msra.mxu0 %v3152
    %3403 = vmatprep.subr.mxu0 0.0
    %3404 = vmatpush1.msra.mxu0 %v3153
    %3405 = vmatprep.subr.mxu0 0.0
    %3406 = vmatpush1.msra.mxu0 %v3154
    %3407 = vmatprep.subr.mxu0 0.0
    %3408 = vmatpush1.msra.mxu0 %v3155
    %3409 = vmatprep.subr.mxu0 0.0
    %3410 = vmatpush1.msra.mxu0 %v3156
    %3411 = vmatprep.subr.mxu0 0.0
    %3412 = vmatpush1.msra.mxu0 %v3157
    %3413 = vmatprep.subr.mxu0 0.0
    %3414 = vmatpush1.msra.mxu0 %v3158
    %3415 = vmatprep.subr.mxu0 0.0
    %3416 = vmatpush1.msra.mxu0 %v3159
    %3417 = vmatprep.subr.mxu0 0.0
    %3418 = vmatpush1.msra.mxu0 %v3160
    %3419 = vmatprep.subr.mxu0 0.0
    %3420 = vmatpush1.msra.mxu0 %v3161
    %3421 = vmatprep.subr.mxu0 0.0
    %3422 = vmatpush1.msra.mxu0 %v3162
    %3423 = vmatprep.subr.mxu0 0.0
    %3424 = vmatpush1.msra.mxu0 %v3163
    %3425 = vmatprep.subr.mxu0 0.0
    %3426 = vmatpush1.msra.mxu0 %v3164
    %3427 = vmatprep.subr.mxu0 0.0
    %3428 = vmatpush1.msra.mxu0 %v3165
    %3429 = vmatprep.subr.mxu0 0.0
    %3430 = vmatpush1.msra.mxu0 %v3166
    %3431 = vmatprep.subr.mxu0 0.0
    %3432 = vmatpush1.msra.mxu0 %v3167
    %3433 = vmatprep.subr.mxu0 0.0
    %3434 = vmatpush1.msra.mxu0 %v3168
    %3435 = vmatprep.subr.mxu0 0.0
    %3436 = vmatpush1.msra.mxu0 %v3169
    %3437 = vmatprep.subr.mxu0 0.0
    %3438 = vmatpush1.msra.mxu0 %v3170
    %3439 = vmatprep.subr.mxu0 0.0
    %3440 = vmatpush1.msra.mxu0 %v3171
    %3441 = vmatprep.subr.mxu0 0.0
    %3442 = vmatpush1.msra.mxu0 %v3172
    %3443 = vmatprep.subr.mxu0 0.0
    %3444 = vmatpush1.msra.mxu0 %v3173
    %3445 = vmatprep.subr.mxu0 0.0
    %3446 = vmatpush1.msra.mxu0 %v3174
    %3447 = vmatprep.subr.mxu0 0.0
    %3448 = vmatpush1.msra.mxu0 %v3175
    %3449 = vmatprep.subr.mxu0 0.0
    %3450 = vmatpush1.msra.mxu0 %v3176
    %3451 = vmatprep.subr.mxu0 0.0
    %3452 = vmatpush1.msra.mxu0 %v3177
    %3453 = vmatprep.subr.mxu0 0.0
    %3454 = vmatpush1.msra.mxu0 %v3178
    %3455 = vmatprep.subr.mxu0 0.0
    %3456 = vmatpush1.msra.mxu0 %v3179
    %3457 = vmatprep.subr.mxu0 0.0
    %3458 = vmatpush1.msra.mxu0 %v3180
    %3459 = vmatprep.subr.mxu0 0.0
    %3460 = vmatpush1.msra.mxu0 %v3181
    %3461 = vmatprep.subr.mxu0 0.0
    %3462 = vmatpush1.msra.mxu0 %v3182
    %3463 = vmatprep.subr.mxu0 0.0
    %3464 = vmatpush1.msra.mxu0 %v3183
    %3465 = vmatprep.mubr.f32.mxu0 %v3055
    %3466 = vmatmul.mubr.f32.gmra.mrb[0].mxu0 %v3054
    %v3467 = vpop.f32.mrb[0].mxu0
    %v3468 = vadd.f32 %v3398, %v3467
    %v3469 = vpop.f32.mrb[0].mxu0
    %3470 = vdwg.mxu0
    %3472 = vset.pattern.permute.xlu0 0
    %3473 = vperm.xlu0 %3472, %v3468
    %v3474 = vpop.permute.xlu0 %3473
    %v3476 = vadd.f32 %v3474, %v3468
    %3477 = vrot.lane.b32.xlu0 %v3468, 127
    %v3478 = vpop.permute.xlu0 %3477
    %vm3480 = vcmask 41984
    %v3481 = vsel %vm3480, %v3478, 0.0
    %3482 = vadd.xlane.f32.xlu0 %v3481
    %v3483 = vpop.xlane.xlu0 %3482
    %v3484 = vrcp.pop 6.0
    %v3485 = vmul.f32 %v3483, %v3484
    %v3486 = vsub.f32 %v3476, %v3485
    %3488 = vrot.lane.b32.xlu0 %v3486, 127
    %v3489 = vpop.permute.xlu0 %3488
    %3491 = vst.msk [vmem:[#allocation2] sm:$0x3] %vm3480, %v3489
    // Predicated region
    $region46: #{dqn_forward.1} parent=1 // pred_check
      _
    $region47: #{dqn_forward.1} parent=1 // pred_check_branch
      %3493 = sbr.rel (0) target = $region49
    $region48: #{dqn_forward.1} parent=1 // pred_region
      %s3495 = ssub.s32 32, 32
      %3496 = vsyncadd [#allocation3], %s3495
      %s3498 = sshll.u32 [#allocation2], 4
      %s3499 = int_to_ptr.vmem [resolvable:$true] %s3498
      %3501 = dma.vmem_to_hbm [thread:$0]  %s3499, 32, %s11, [#allocation3]
    $region49: #{dqn_forward.1} parent=1 // pred_fallthru
      _
    // Predicated region
    $region50: #{dqn_forward.1} parent=1 // pred_check
      _
    $region51: #{dqn_forward.1} parent=1 // pred_check_branch
      %3503 = sbr.rel (0) target = $region53
    $region52: #{dqn_forward.1} parent=1 // pred_region
      %3504 = dma.done [#allocation3], 32
    $region53: #{dqn_forward.1} parent=1 // pred_fallthru
      _
    %3505 = vsyncpa [#allocation3], 1

</llo_original>
